<compile_context>
chip_gen: v5e
topology: v5e:2x2
jax: 0.10.0
libtpu: 0.0.40
codegen_flags: <defaults>
</compile_context>

<pallas_src>
import functools

import jax
import jax.numpy as jnp
from jax.experimental import pallas as pl
from jax.experimental.pallas import tpu as pltpu

LATENT = 16
IN_FEATURES = 1034
HIDDEN = 512

LANE = 128
LATENT_PAD = 128                                        # mu|log_var packed into one lane tile
IN_PAD = ((IN_FEATURES + LANE - 1) // LANE) * LANE      # 1034 -> 1152


def _round_up(x, m):
    return (x + m - 1) // m * m


def _vae_forward_kernel(
    x_ref, eps_ref,
    w1_ref, b1_ref,    # enc1: (IN_PAD, 512) bf16, (1, 512) f32
    w2_ref, b2_ref,    # enc2: (512, 128) bf16,   (1, 128) f32   (mu lanes [0,16), log_var [16,32))
    w3_ref, b3_ref,    # dec1: (128, 512) bf16,   (1, 512) f32   (rows [0,16) and [16,32) both = W_dec1)
    w4_ref, b4_ref,    # dec2: (512, IN_PAD) bf16,(1, IN_PAD) f32
    recon_ref, enc_ref,
):
    x = x_ref[...]                                                       # (tm, IN_PAD) bf16

    # ---- encoder ----
    h1 = jnp.dot(x, w1_ref[...], preferred_element_type=jnp.float32) + b1_ref[...]
    h1 = jnp.maximum(h1, 0.0).astype(jnp.bfloat16)                       # relu, (tm, 512)

    enc = jnp.dot(h1, w2_ref[...], preferred_element_type=jnp.float32) + b2_ref[...]
    enc_ref[...] = enc                                                   # (tm, 128) f32, lane-dense

    # ---- reparameterize: z = mu + eps * exp(0.5 * log_var) ----
    # mu lives in lanes [0,16), log_var in lanes [16,32), everything else is exactly zero.
    # eps was packed into lanes [16,32) so eps * exp(0.5 * enc) lands on the log_var lanes.
    lane = jax.lax.broadcasted_iota(jnp.int32, enc.shape, 1)
    mu_part = jnp.where(lane < LATENT, enc, 0.0)                         # keep mu, drop log_var
    std_term = eps_ref[...].astype(jnp.float32) * jnp.exp(0.5 * enc)     # eps*std in lanes [16,32)
    z = (mu_part + std_term).astype(jnp.bfloat16)                        # (tm, 128) bf16

    # ---- decoder ----
    # w3 rows [0,16) and [16,32) both hold W_dec1, so z @ w3 == (mu + eps*std) @ W_dec1.
    h2 = jnp.dot(z, w3_ref[...], preferred_element_type=jnp.float32) + b3_ref[...]
    h2 = jnp.maximum(h2, 0.0).astype(jnp.bfloat16)                       # relu, (tm, 512)

    logits = jnp.dot(h2, w4_ref[...], preferred_element_type=jnp.float32) + b4_ref[...]
    # sigmoid = 1 / (1 + exp(-x)); approx reciprocal rides the otherwise-idle EUP slot.
    sig = pl.reciprocal(1.0 + jnp.exp(-logits), approx=True)
    # Clamp (approx recip can overshoot 1 by ~2^-12) and store narrow: recon is bf16.
    recon_ref[...] = jnp.minimum(sig, 1.0).astype(jnp.bfloat16)          # (tm, IN_PAD) bf16


@functools.partial(jax.jit, static_argnames=("block_batch",))
def linear_vae_forward(x, eps, params, *, block_batch=None):
    """x: (B, 1034) f32, eps: (B, 16) f32 standard-normal noise, params: packed (bf16/f32)."""
    B = x.shape[0]
    w1, b1, w2, b2, w3, b3, w4, b4 = params

    if block_batch is None:
        # >=2 grid steps when possible (v7x 2-TC sharding), 16-row bf16 sublane multiples,
        # tiles up to 512 rows to amortize the per-step pipeline overhead at large B.
        tm = min(512, max(16, _round_up(-(-B // 2), 16)))
    else:
        tm = block_batch
    b_pad = _round_up(max(B, tm), tm)
    grid = (b_pad // tm,)

    # Pad batch + features once in the wrapper (XLA), slice back after the kernel.
    x_p = jnp.zeros((b_pad, IN_PAD), jnp.bfloat16).at[:B, :IN_FEATURES].set(x.astype(jnp.bfloat16))
    # eps goes into lanes [16,32) so it lines up with log_var inside the enc tile.
    eps_p = jnp.zeros((b_pad, LATENT_PAD), jnp.bfloat16).at[:B, LATENT:2 * LATENT].set(
        eps.astype(jnp.bfloat16))

    def batch_spec(shape):
        return pl.BlockSpec(shape, lambda i: (i, 0))

    def const_spec(arr):                     # whole array, loaded once, VMEM-resident across blocks
        return pl.BlockSpec(arr.shape, lambda i: (0, 0))

    flops = 2 * b_pad * (IN_PAD * HIDDEN + HIDDEN * LATENT_PAD
                         + LATENT_PAD * HIDDEN + HIDDEN * IN_PAD)
    transcendentals = b_pad * (2 * IN_PAD + LATENT_PAD)
    bytes_accessed = (
        x_p.size * 2 + eps_p.size * 2
        + sum(w.size * 2 for w in (w1, w2, w3, w4))
        + sum(b.size * 4 for b in (b1, b2, b3, b4))
        + b_pad * IN_PAD * 2            # recon writeback (bf16)
        + b_pad * LATENT_PAD * 4)       # enc writeback (f32)

    recon_p, enc_p = pl.pallas_call(
        _vae_forward_kernel,
        grid=grid,
        out_shape=(
            jax.ShapeDtypeStruct((b_pad, IN_PAD), jnp.bfloat16),
            jax.ShapeDtypeStruct((b_pad, LATENT_PAD), jnp.float32),
        ),
        in_specs=[
            batch_spec((tm, IN_PAD)),          # x
            batch_spec((tm, LATENT_PAD)),      # eps (bf16, lanes [16,32))
            const_spec(w1), const_spec(b1),
            const_spec(w2), const_spec(b2),
            const_spec(w3), const_spec(b3),
            const_spec(w4), const_spec(b4),
        ],
        out_specs=(
            batch_spec((tm, IN_PAD)),          # recon (lane-dense 1152, bf16)
            batch_spec((tm, LATENT_PAD)),      # enc (mu | log_var in one lane tile)
        ),
        compiler_params=pltpu.CompilerParams(
            dimension_semantics=("parallel",),     # v7x: shard batch blocks over both TCs
            vmem_limit_bytes=40 << 20,             # <= v7x's 64 MiB VMEM; ~15-20 MiB used at tm=512
        ),
        cost_estimate=pl.CostEstimate(
            flops=flops, transcendentals=transcendentals, bytes_accessed=bytes_accessed),
    )(x_p, eps_p, w1, b1, w2, b2, w3, b3, w4, b4)

    # recon stays bf16 so the unavoidable slice copy is half-width; cast up downstream if needed.
    recon = recon_p[:B, :IN_FEATURES]
    mu = enc_p[:B, :LATENT]
    log_var = enc_p[:B, LATENT:2 * LATENT]
    return recon, mu, log_var


def init_params(key):
    """Unpadded f32 params, (in, out) layout, PyTorch-default uniform(-1/sqrt(fan_in), ...)."""
    def linear(k, fan_in, fan_out):
        kw, kb = jax.random.split(k)
        bound = 1.0 / jnp.sqrt(jnp.float32(fan_in))
        w = jax.random.uniform(kw, (fan_in, fan_out), jnp.float32, -bound, bound)
        b = jax.random.uniform(kb, (1, fan_out), jnp.float32, -bound, bound)
        return w, b

    k1, k2, k3, k4 = jax.random.split(key, 4)
    w1, b1 = linear(k1, IN_FEATURES, HIDDEN)        # enc1
    w2, b2 = linear(k2, HIDDEN, 2 * LATENT)         # enc2 (cols [0,16)=mu, [16,32)=log_var)
    w3, b3 = linear(k3, LATENT, HIDDEN)             # dec1
    w4, b4 = linear(k4, HIDDEN, IN_FEATURES)        # dec2
    return (w1, b1, w2, b2, w3, b3, w4, b4)


def pack_params(raw):
    """Pad to lane-aligned shapes; weights -> bf16, biases stay f32."""
    w1, b1, w2, b2, w3, b3, w4, b4 = raw
    bf = lambda a: a.astype(jnp.bfloat16)

    w1p = jnp.zeros((IN_PAD, HIDDEN), jnp.bfloat16).at[:IN_FEATURES, :].set(bf(w1))
    b1p = b1

    # enc2: mu weights -> out-lanes [0,16), log_var weights -> [16,32); single 128-lane tile.
    w2p = jnp.zeros((HIDDEN, LATENT_PAD), jnp.bfloat16).at[:, :2 * LATENT].set(bf(w2))
    b2p = jnp.zeros((1, LATENT_PAD), jnp.float32).at[:, :2 * LATENT].set(b2)

    # dec1: duplicate the 16 real rows into rows [0,16) (mu lanes) and [16,32) (eps*std lanes).
    w3p = jnp.zeros((LATENT_PAD, HIDDEN), jnp.bfloat16)
    w3p = w3p.at[:LATENT, :].set(bf(w3))
    w3p = w3p.at[LATENT:2 * LATENT, :].set(bf(w3))
    b3p = b3

    w4p = jnp.zeros((HIDDEN, IN_PAD), jnp.bfloat16).at[:, :IN_FEATURES].set(bf(w4))
    b4p = jnp.zeros((1, IN_PAD), jnp.float32).at[:, :IN_FEATURES].set(b4)

    return (w1p, b1p, w2p, b2p, w3p, b3p, w4p, b4p)


def reference_forward(x, eps, packed):
    """Pure-JAX reference mirroring the kernel's packing + bf16 quantization (f32 math)."""
    w1, b1, w2, b2, w3, b3, w4, b4 = packed
    f32 = lambda a: a.astype(jnp.float32)
    B = x.shape[0]

    x_p = jnp.zeros((B, IN_PAD), jnp.float32).at[:, :IN_FEATURES].set(f32(x.astype(jnp.bfloat16)))
    eps_p = jnp.zeros((B, LATENT_PAD), jnp.float32).at[:, LATENT:2 * LATENT].set(
        f32(eps.astype(jnp.bfloat16)))

    h1 = jnp.maximum(x_p @ f32(w1) + b1, 0.0)
    h1 = f32(h1.astype(jnp.bfloat16))
    enc = h1 @ f32(w2) + b2                                      # (B, 128)
    lane = jnp.arange(LATENT_PAD)[None, :]
    mu_part = jnp.where(lane < LATENT, enc, 0.0)
    z = f32((mu_part + eps_p * jnp.exp(0.5 * enc)).astype(jnp.bfloat16))
    h2 = jnp.maximum(z @ f32(w3) + b3, 0.0)
    h2 = f32(h2.astype(jnp.bfloat16))
    recon = jax.nn.sigmoid(h2 @ f32(w4) + b4).astype(jnp.bfloat16)
    return recon[:, :IN_FEATURES], enc[:, :LATENT], enc[:, LATENT:2 * LATENT]


if __name__ == "__main__":
    key = jax.random.PRNGKey(0)
    k_params, k_x, k_eps = jax.random.split(key, 3)

    B = 32
    raw_params = init_params(k_params)
    params = pack_params(raw_params)
    x = jax.random.normal(k_x, (B, IN_FEATURES), jnp.float32)
    eps = jax.random.normal(k_eps, (B, LATENT), jnp.float32)   # randn_like(std), passed in

    # Default heuristic -> tm=16, grid=(2,): exercises the pipelined batch grid + even 2-TC split.
    recon, mu, log_var = linear_vae_forward(x, eps, params)
    jax.block_until_ready((recon, mu, log_var))

    # correctness vs pure-JAX reference using the same packed bf16 params
    r_ref, mu_ref, lv_ref = reference_forward(x, eps, params)
    assert recon.shape == (B, IN_FEATURES) and recon.dtype == jnp.bfloat16
    assert mu.shape == (B, LATENT) and log_var.shape == (B, LATENT)
    assert jnp.allclose(mu, mu_ref, atol=1e-3, rtol=1e-3)
    assert jnp.allclose(log_var, lv_ref, atol=1e-3, rtol=1e-3)
    # recon tolerance accounts for bf16 storage + the EUP approx reciprocal in the sigmoid
    assert jnp.allclose(recon.astype(jnp.float32), r_ref.astype(jnp.float32),
                        atol=1e-2, rtol=1e-2)

    print("KERNEL_OK")
</pallas_src>

<mosaic_0001>
module attributes {stable_mosaic.version = 11 : i64} {
  func.func @_vae_forward_kernel(%arg0: i32, %arg1: memref<16x1152xbf16, #tpu.memory_space<vmem>>, %arg2: memref<16x128xbf16, #tpu.memory_space<vmem>>, %arg3: memref<1152x512xbf16, #tpu.memory_space<vmem>>, %arg4: memref<1x512xf32, #tpu.memory_space<vmem>>, %arg5: memref<512x128xbf16, #tpu.memory_space<vmem>>, %arg6: memref<1x128xf32, #tpu.memory_space<vmem>>, %arg7: memref<128x512xbf16, #tpu.memory_space<vmem>>, %arg8: memref<1x512xf32, #tpu.memory_space<vmem>>, %arg9: memref<512x1152xbf16, #tpu.memory_space<vmem>>, %arg10: memref<1x1152xf32, #tpu.memory_space<vmem>>, %arg11: memref<16x1152xbf16, #tpu.memory_space<vmem>>, %arg12: memref<16x128xf32, #tpu.memory_space<vmem>>) attributes {dimension_semantics = [#tpu.dimension_semantics<parallel>], iteration_bounds = array<i64: 2>, scalar_prefetch = 0 : i64, scratch_operands = 0 : i64, tpu.core_type = #tpu.core_type<tc>, window_params = [{transform_indices = @transform_0, window_bounds = array<i64: 16, 1152>}, {transform_indices = @transform_1, window_bounds = array<i64: 16, 128>}, {pipeline_mode = #tpu.pipeline_mode<synchronous>, transform_indices = @transform_2, window_bounds = array<i64: 1152, 512>}, {pipeline_mode = #tpu.pipeline_mode<synchronous>, transform_indices = @transform_3, window_bounds = array<i64: 1, 512>}, {pipeline_mode = #tpu.pipeline_mode<synchronous>, transform_indices = @transform_4, window_bounds = array<i64: 512, 128>}, {pipeline_mode = #tpu.pipeline_mode<synchronous>, transform_indices = @transform_5, window_bounds = array<i64: 1, 128>}, {pipeline_mode = #tpu.pipeline_mode<synchronous>, transform_indices = @transform_6, window_bounds = array<i64: 128, 512>}, {pipeline_mode = #tpu.pipeline_mode<synchronous>, transform_indices = @transform_7, window_bounds = array<i64: 1, 512>}, {pipeline_mode = #tpu.pipeline_mode<synchronous>, transform_indices = @transform_8, window_bounds = array<i64: 512, 1152>}, {pipeline_mode = #tpu.pipeline_mode<synchronous>, transform_indices = @transform_9, window_bounds = array<i64: 1, 1152>}, {transform_indices = @transform_10, window_bounds = array<i64: 16, 1152>}, {transform_indices = @transform_11, window_bounds = array<i64: 16, 128>}]} {
    %c0 = arith.constant 0 : index
    %c0_0 = arith.constant 0 : index
    %0 = vector.load %arg1[%c0, %c0_0] : memref<16x1152xbf16, #tpu.memory_space<vmem>>, vector<16x1152xbf16>
    %c0_1 = arith.constant 0 : index
    %c0_2 = arith.constant 0 : index
    %1 = vector.load %arg3[%c0_1, %c0_2] : memref<1152x512xbf16, #tpu.memory_space<vmem>>, vector<1152x512xbf16>
    %cst = arith.constant dense<0.000000e+00> : vector<16x512xf32>
    %2 = tpu.matmul %0, %1, %cst {dimension_numbers = #tpu.dot_dimension_numbers<[1], [0], [0], [1], [0, 0, 1, 1], [], []>} : vector<16x1152xbf16>, vector<1152x512xbf16>, vector<16x512xf32> -> vector<16x512xf32>
    %c0_3 = arith.constant 0 : index
    %c0_4 = arith.constant 0 : index
    %3 = vector.load %arg4[%c0_3, %c0_4] : memref<1x512xf32, #tpu.memory_space<vmem>>, vector<1x512xf32>
    %4 = vector.broadcast %3 : vector<1x512xf32> to vector<16x512xf32>
    %5 = arith.addf %2, %4 : vector<16x512xf32>
    %cst_5 = arith.constant 0.000000e+00 : f32
    %6 = vector.broadcast %cst_5 : f32 to vector<16x512xf32>
    %7 = arith.maximumf %5, %6 : vector<16x512xf32>
    %8 = arith.truncf %7 : vector<16x512xf32> to vector<16x512xbf16>
    %c0_6 = arith.constant 0 : index
    %c0_7 = arith.constant 0 : index
    %9 = vector.load %arg5[%c0_6, %c0_7] : memref<512x128xbf16, #tpu.memory_space<vmem>>, vector<512x128xbf16>
    %cst_8 = arith.constant dense<0.000000e+00> : vector<16x128xf32>
    %10 = tpu.matmul %8, %9, %cst_8 {dimension_numbers = #tpu.dot_dimension_numbers<[1], [0], [0], [1], [0, 0, 1, 1], [], []>} : vector<16x512xbf16>, vector<512x128xbf16>, vector<16x128xf32> -> vector<16x128xf32>
    %c0_9 = arith.constant 0 : index
    %c0_10 = arith.constant 0 : index
    %11 = vector.load %arg6[%c0_9, %c0_10] : memref<1x128xf32, #tpu.memory_space<vmem>>, vector<1x128xf32>
    %12 = vector.broadcast %11 : vector<1x128xf32> to vector<16x128xf32>
    %13 = arith.addf %10, %12 : vector<16x128xf32>
    %c0_11 = arith.constant 0 : index
    %c0_12 = arith.constant 0 : index
    %14 = vector.load %arg12[%c0_11, %c0_12] : memref<16x128xf32, #tpu.memory_space<vmem>>, vector<16x128xf32>
    tpu.vector_store %arg12[%c0_11, %c0_12], %13 {strides = array<i32>} : memref<16x128xf32, #tpu.memory_space<vmem>>, vector<16x128xf32>,
    %15 = tpu.iota {dimensions = array<i32: 1>} : vector<16x128xi32>
    %c16_i32 = arith.constant 16 : i32
    %16 = vector.broadcast %c16_i32 : i32 to vector<16x128xi32>
    %17 = arith.cmpi slt, %15, %16 : vector<16x128xi32>
    %cst_13 = arith.constant 0.000000e+00 : f32
    %18 = vector.broadcast %cst_13 : f32 to vector<16x128xf32>
    %19 = arith.select %17, %13, %18 : vector<16x128xi1>, vector<16x128xf32>
    %c0_14 = arith.constant 0 : index
    %c0_15 = arith.constant 0 : index
    %20 = vector.load %arg2[%c0_14, %c0_15] : memref<16x128xbf16, #tpu.memory_space<vmem>>, vector<16x128xbf16>
    %21 = arith.extf %20 : vector<16x128xbf16> to vector<16x128xf32>
    %cst_16 = arith.constant 5.000000e-01 : f32
    %22 = vector.broadcast %cst_16 : f32 to vector<16x128xf32>
    %23 = arith.mulf %22, %13 : vector<16x128xf32>
    %24 = math.exp %23 : vector<16x128xf32>
    %25 = arith.mulf %21, %24 : vector<16x128xf32>
    %26 = arith.addf %19, %25 : vector<16x128xf32>
    %27 = arith.truncf %26 : vector<16x128xf32> to vector<16x128xbf16>
    %c0_17 = arith.constant 0 : index
    %c0_18 = arith.constant 0 : index
    %28 = vector.load %arg7[%c0_17, %c0_18] : memref<128x512xbf16, #tpu.memory_space<vmem>>, vector<128x512xbf16>
    %cst_19 = arith.constant dense<0.000000e+00> : vector<16x512xf32>
    %29 = tpu.matmul %27, %28, %cst_19 {dimension_numbers = #tpu.dot_dimension_numbers<[1], [0], [0], [1], [0, 0, 1, 1], [], []>} : vector<16x128xbf16>, vector<128x512xbf16>, vector<16x512xf32> -> vector<16x512xf32>
    %c0_20 = arith.constant 0 : index
    %c0_21 = arith.constant 0 : index
    %30 = vector.load %arg8[%c0_20, %c0_21] : memref<1x512xf32, #tpu.memory_space<vmem>>, vector<1x512xf32>
    %31 = vector.broadcast %30 : vector<1x512xf32> to vector<16x512xf32>
    %32 = arith.addf %29, %31 : vector<16x512xf32>
    %cst_22 = arith.constant 0.000000e+00 : f32
    %33 = vector.broadcast %cst_22 : f32 to vector<16x512xf32>
    %34 = arith.maximumf %32, %33 : vector<16x512xf32>
    %35 = arith.truncf %34 : vector<16x512xf32> to vector<16x512xbf16>
    %c0_23 = arith.constant 0 : index
    %c0_24 = arith.constant 0 : index
    %36 = vector.load %arg9[%c0_23, %c0_24] : memref<512x1152xbf16, #tpu.memory_space<vmem>>, vector<512x1152xbf16>
    %cst_25 = arith.constant dense<0.000000e+00> : vector<16x1152xf32>
    %37 = tpu.matmul %35, %36, %cst_25 {dimension_numbers = #tpu.dot_dimension_numbers<[1], [0], [0], [1], [0, 0, 1, 1], [], []>} : vector<16x512xbf16>, vector<512x1152xbf16>, vector<16x1152xf32> -> vector<16x1152xf32>
    %c0_26 = arith.constant 0 : index
    %c0_27 = arith.constant 0 : index
    %38 = vector.load %arg10[%c0_26, %c0_27] : memref<1x1152xf32, #tpu.memory_space<vmem>>, vector<1x1152xf32>
    %39 = vector.broadcast %38 : vector<1x1152xf32> to vector<16x1152xf32>
    %40 = arith.addf %37, %39 : vector<16x1152xf32>
    %cst_28 = arith.constant 0.000000e+00 : f32
    %41 = vector.broadcast %cst_28 : f32 to vector<16x1152xf32>
    %42 = arith.subf %41, %40 : vector<16x1152xf32>
    %43 = math.exp %42 : vector<16x1152xf32>
    %cst_29 = arith.constant 1.000000e+00 : f32
    %44 = vector.broadcast %cst_29 : f32 to vector<16x1152xf32>
    %45 = arith.addf %44, %43 : vector<16x1152xf32>
    %46 = tpu.reciprocal %45 {approx = true} : vector<16x1152xf32> -> vector<16x1152xf32>
    %cst_30 = arith.constant 1.000000e+00 : f32
    %47 = vector.broadcast %cst_30 : f32 to vector<16x1152xf32>
    %48 = arith.minimumf %46, %47 : vector<16x1152xf32>
    %49 = arith.truncf %48 : vector<16x1152xf32> to vector<16x1152xbf16>
    %c0_31 = arith.constant 0 : index
    %c0_32 = arith.constant 0 : index
    %50 = vector.load %arg11[%c0_31, %c0_32] : memref<16x1152xbf16, #tpu.memory_space<vmem>>, vector<16x1152xbf16>
    tpu.vector_store %arg11[%c0_31, %c0_32], %49 {strides = array<i32>} : memref<16x1152xbf16, #tpu.memory_space<vmem>>, vector<16x1152xbf16>,
    return
  }
  func.func @transform_0(%arg0: i32) -> (i32, i32) {
    %c0_i32 = arith.constant 0 : i32
    %c0_i32_0 = arith.constant 0 : i32
    return %arg0, %c0_i32 : i32, i32
  }
  func.func @transform_1(%arg0: i32) -> (i32, i32) {
    %c0_i32 = arith.constant 0 : i32
    %c0_i32_0 = arith.constant 0 : i32
    return %arg0, %c0_i32 : i32, i32
  }
  func.func @transform_2(%arg0: i32) -> (i32, i32) {
    %c0_i32 = arith.constant 0 : i32
    %c0_i32_0 = arith.constant 0 : i32
    %c0_i32_1 = arith.constant 0 : i32
    return %c0_i32, %c0_i32_0 : i32, i32
  }
  func.func @transform_3(%arg0: i32) -> (i32, i32) {
    %c0_i32 = arith.constant 0 : i32
    %c0_i32_0 = arith.constant 0 : i32
    %c0_i32_1 = arith.constant 0 : i32
    return %c0_i32, %c0_i32_0 : i32, i32
  }
  func.func @transform_4(%arg0: i32) -> (i32, i32) {
    %c0_i32 = arith.constant 0 : i32
    %c0_i32_0 = arith.constant 0 : i32
    %c0_i32_1 = arith.constant 0 : i32
    return %c0_i32, %c0_i32_0 : i32, i32
  }
  func.func @transform_5(%arg0: i32) -> (i32, i32) {
    %c0_i32 = arith.constant 0 : i32
    %c0_i32_0 = arith.constant 0 : i32
    %c0_i32_1 = arith.constant 0 : i32
    return %c0_i32, %c0_i32_0 : i32, i32
  }
  func.func @transform_6(%arg0: i32) -> (i32, i32) {
    %c0_i32 = arith.constant 0 : i32
    %c0_i32_0 = arith.constant 0 : i32
    %c0_i32_1 = arith.constant 0 : i32
    return %c0_i32, %c0_i32_0 : i32, i32
  }
  func.func @transform_7(%arg0: i32) -> (i32, i32) {
    %c0_i32 = arith.constant 0 : i32
    %c0_i32_0 = arith.constant 0 : i32
    %c0_i32_1 = arith.constant 0 : i32
    return %c0_i32, %c0_i32_0 : i32, i32
  }
  func.func @transform_8(%arg0: i32) -> (i32, i32) {
    %c0_i32 = arith.constant 0 : i32
    %c0_i32_0 = arith.constant 0 : i32
    %c0_i32_1 = arith.constant 0 : i32
    return %c0_i32, %c0_i32_0 : i32, i32
  }
  func.func @transform_9(%arg0: i32) -> (i32, i32) {
    %c0_i32 = arith.constant 0 : i32
    %c0_i32_0 = arith.constant 0 : i32
    %c0_i32_1 = arith.constant 0 : i32
    return %c0_i32, %c0_i32_0 : i32, i32
  }
  func.func @transform_10(%arg0: i32) -> (i32, i32) {
    %c0_i32 = arith.constant 0 : i32
    %c0_i32_0 = arith.constant 0 : i32
    return %arg0, %c0_i32 : i32, i32
  }
  func.func @transform_11(%arg0: i32) -> (i32, i32) {
    %c0_i32 = arith.constant 0 : i32
    %c0_i32_0 = arith.constant 0 : i32
    return %arg0, %c0_i32 : i32, i32
  }
}

</mosaic_0001>

<llo_original>
// kernel: linear_vae_forward.1
$region0: #{linear_vae_forward.1}
  #allocation0 [shape = 'u32[]', space=smem, size = 0x4, offset = 0x4, fixed_abs, tag = 'smem constant byte address 0x4 - core index']
  #allocation1 [shape = 'u32[72,128]{1,0:T(1,128)}', space=vmem, size = 0x9000, scoped, tag = 'internal scratch']
  %s0 = inlined_call_operand.vmem [shape: bf16[32,1152], index: 0, kind: input, shape index: {}]
  %s1 = inlined_call_operand.vmem [shape: bf16[32,128], index: 1, kind: input, shape index: {}]
  %s2 = inlined_call_operand.hbm [shape: bf16[1152,512], index: 2, kind: input, shape index: {}]
  %s3 = inlined_call_operand.hbm [shape: f32[1,512], index: 3, kind: input, shape index: {}]
  %s4 = inlined_call_operand.hbm [shape: bf16[512,128], index: 4, kind: input, shape index: {}]
  %s5 = inlined_call_operand.hbm [shape: f32[1,128], index: 5, kind: input, shape index: {}]
  %s6 = inlined_call_operand.hbm [shape: bf16[128,512], index: 6, kind: input, shape index: {}]
  %s7 = inlined_call_operand.hbm [shape: f32[1,512], index: 7, kind: input, shape index: {}]
  %s8 = inlined_call_operand.hbm [shape: bf16[512,1152], index: 8, kind: input, shape index: {}]
  %s9 = inlined_call_operand.hbm [shape: f32[1,1152], index: 9, kind: input, shape index: {}]
  %s10 = inlined_call_operand.hbm [shape: bf16[32,1152], index: 10, kind: output, shape index: {0}]
  %s11 = inlined_call_operand.vmem [shape: f32[32,128], index: 11, kind: output, shape index: {1}]
  %12 = xla_tuple %s10, %s11
  %s13 = sld [smem:[#allocation0]]
  $region113: #{linear_vae_forward.1} parent=0
    _
  %s15 = ssub.s32 1, %s13
  %s16 = scalar_select 0, %s15, %s13
  $region1: #{linear_vae_forward.1} parent=0
    #allocation2 [shape = 'u8[1179648]{0}', space=vmem, size = 0x120000, scoped, tag = 'input window, operand 2, single buffered']
    #allocation3 [shape = 's32[2]{0}', space=sflag, size = 0x8, scoped, tag = 'scoped memory for linear_vae_forward.1']
    #allocation4 [shape = 's32[2]{0}', space=sflag, size = 0x8, scoped, tag = 'scoped memory for linear_vae_forward.1']
    #allocation5 [shape = 'u8[2048]{0}', space=vmem, size = 0x800, scoped, tag = 'input window, operand 3, single buffered']
    #allocation6 [shape = 's32[1]{0}', space=sflag, size = 0x4, scoped, tag = 'scoped memory for linear_vae_forward.1']
    #allocation7 [shape = 'u8[131072]{0}', space=vmem, size = 0x20000, scoped, tag = 'input window, operand 4, single buffered']
    #allocation8 [shape = 'u8[512]{0}', space=vmem, size = 0x400, scoped, tag = 'input window, operand 5, single buffered']
    #allocation9 [shape = 's32[1]{0}', space=sflag, size = 0x4, scoped, tag = 'scoped memory for linear_vae_forward.1']
    #allocation10 [shape = 'u8[131072]{0}', space=vmem, size = 0x20000, scoped, tag = 'input window, operand 6, single buffered']
    #allocation11 [shape = 'u8[2048]{0}', space=vmem, size = 0x800, scoped, tag = 'input window, operand 7, single buffered']
    #allocation12 [shape = 's32[1]{0}', space=sflag, size = 0x4, scoped, tag = 'scoped memory for linear_vae_forward.1']
    #allocation13 [shape = 'u8[1179648]{0}', space=vmem, size = 0x120000, scoped, tag = 'input window, operand 8, single buffered']
    #allocation14 [shape = 'u8[4608]{0}', space=vmem, size = 0x1400, scoped, tag = 'input window, operand 9, single buffered']
    #allocation15 [shape = 's32[1]{0}', space=sflag, size = 0x4, scoped, tag = 'scoped memory for linear_vae_forward.1']
    #allocation16 [shape = 'u8[73728]{0}', space=vmem, size = 0x12000, scoped, tag = 'output window, operand 0']
    %17 = vsyncpa [#allocation3], 0
    %18 = vsyncpa [#allocation6], 0
    %19 = vsyncpa [#allocation9], 0
    %20 = vsyncpa [#allocation12], 0
    %21 = vsyncpa [#allocation15], 0
    %22 = vsyncpa [#allocation4], 0
    %s23 = scalar_lea.sflag [#allocation4], 1
    %24 = vsyncpa %s23, 0
    loop: start=0, step=1, limit=4
    $region2: #{linear_vae_forward.1} parent=1 // loop_pre_header
      _
    $region3: #{linear_vae_forward.1} parent=1 // loop_header
      %s26 = sphi 0, %s30
      %p27 = scmp.ge.s32.totalorder %s26, 4
      %s36 = sphi 0, %s38
      %s39 = sphi 0, %s36
      %s40 = sphi 0, %s39
      %s56 = sphi 0, %s40
      %s62 = sphi 0, %s64
      %s65 = sphi 0, %s62
      %s66 = sphi 0, %s65
      %s82 = sphi 0, %s66
      %s86 = sphi 0, %s86
      %s88 = sphi 0, %s86
      %s89 = sphi 0, %s88
      %s103 = sphi 0, %s89
      %s107 = sphi 0, %s107
      %s109 = sphi 0, %s107
      %s110 = sphi 0, %s109
      %s124 = sphi 0, %s110
      %s128 = sphi 0, %s128
      %s130 = sphi 0, %s128
      %s131 = sphi 0, %s130
      %s145 = sphi 0, %s131
      %s149 = sphi 0, %s149
      %s151 = sphi 0, %s149
      %s152 = sphi 0, %s151
      %s166 = sphi 0, %s152
      %s170 = sphi 0, %s170
      %s172 = sphi 0, %s170
      %s173 = sphi 0, %s172
      %s187 = sphi 0, %s173
      %s191 = sphi 0, %s191
      %s193 = sphi 0, %s191
      %s194 = sphi 0, %s193
      %s208 = sphi 0, %s194
      %s212 = sphi 0, %s212
      %s214 = sphi 0, %s212
      %s215 = sphi 0, %s214
      %s229 = sphi 0, %s215
      %s233 = sphi 0, %s233
      %s235 = sphi 0, %s233
      %s236 = sphi 0, %s235
      %s250 = sphi 0, %s236
      %s256 = sphi 0, %s258
      %s259 = sphi 0, %s256
      %s260 = sphi 0, %s259
      %s276 = sphi 0, %s260
      %s282 = sphi 0, %s284
      %s285 = sphi 0, %s282
      %s286 = sphi 0, %s285
      %s302 = sphi 0, %s286
    $region4: #{linear_vae_forward.1} parent=1 // loop_header_branch
      %29 = sbr.rel (%p27) target = $region8
    $region5: #{linear_vae_forward.1} parent=1 // loop_body
      %s31 = ssub.s32 %s26, 1
      %s32 = ssub.s32 %s26, 2
      %s33 = sadd.s32 %s26, 1
      %s34 = ssub.s32 %s26, %s33
      %p35 = scmp.eq.s32.totalorder %s34, 0
      %s37 = sadd.s32 %s36, 1
      %s38 = scalar_select %p35, %s36, %s37
      %p41 = pneg %p35
      %p42 = scmp.eq.s32.totalorder %s26, 1
      %p43 = por %p41, %p42
      %p44 = scmp.ne.s32.totalorder %s36, %s39
      %p45 = scmp.eq.s32.totalorder %s26, 0
      %p46 = por %p44, %p45
      %p47 = scmp.ne.s32.totalorder %s36, %s39
      %p48 = scmp.eq.s32.totalorder %s31, 1
      %p49 = por %p47, %p48
      %p50 = scmp.ne.s32.totalorder %s39, %s40
      %p51 = scmp.eq.s32.totalorder %s31, 0
      %p52 = por %p50, %p51
      %p53 = scmp.ne.s32.totalorder %s39, %s40
      %p54 = scmp.eq.s32.totalorder %s32, 1
      %p55 = por %p53, %p54
      %p57 = scmp.ne.s32.totalorder %s40, %s56
      %p58 = scmp.eq.s32.totalorder %s32, 0
      %p59 = por %p57, %p58
      %s60 = ssub.s32 %s26, %s33
      %p61 = scmp.eq.s32.totalorder %s60, 0
      %s63 = sadd.s32 %s62, 1
      %s64 = scalar_select %p61, %s62, %s63
      %p67 = pneg %p61
      %p68 = scmp.eq.s32.totalorder %s26, 1
      %p69 = por %p67, %p68
      %p70 = scmp.ne.s32.totalorder %s62, %s65
      %p71 = scmp.eq.s32.totalorder %s26, 0
      %p72 = por %p70, %p71
      %p73 = scmp.ne.s32.totalorder %s62, %s65
      %p74 = scmp.eq.s32.totalorder %s31, 1
      %p75 = por %p73, %p74
      %p76 = scmp.ne.s32.totalorder %s65, %s66
      %p77 = scmp.eq.s32.totalorder %s31, 0
      %p78 = por %p76, %p77
      %p79 = scmp.ne.s32.totalorder %s65, %s66
      %p80 = scmp.eq.s32.totalorder %s32, 1
      %p81 = por %p79, %p80
      %p83 = scmp.ne.s32.totalorder %s66, %s82
      %p84 = scmp.eq.s32.totalorder %s32, 0
      %p85 = por %p83, %p84
      %s87 = sadd.s32 %s86, 1
      %p90 = scmp.eq.s32.totalorder %s26, 1
      %p91 = scmp.ne.s32.totalorder %s86, %s88
      %p92 = scmp.eq.s32.totalorder %s26, 0
      %p93 = por %p91, %p92
      %p94 = scmp.ne.s32.totalorder %s86, %s88
      %p95 = scmp.eq.s32.totalorder %s31, 1
      %p96 = por %p94, %p95
      %p97 = scmp.ne.s32.totalorder %s88, %s89
      %p98 = scmp.eq.s32.totalorder %s31, 0
      %p99 = por %p97, %p98
      %p100 = scmp.ne.s32.totalorder %s88, %s89
      %p101 = scmp.eq.s32.totalorder %s32, 1
      %p102 = por %p100, %p101
      %p104 = scmp.ne.s32.totalorder %s89, %s103
      %p105 = scmp.eq.s32.totalorder %s32, 0
      %p106 = por %p104, %p105
      %s108 = sadd.s32 %s107, 1
      %p111 = scmp.eq.s32.totalorder %s26, 1
      %p112 = scmp.ne.s32.totalorder %s107, %s109
      %p113 = scmp.eq.s32.totalorder %s26, 0
      %p114 = por %p112, %p113
      %p115 = scmp.ne.s32.totalorder %s107, %s109
      %p116 = scmp.eq.s32.totalorder %s31, 1
      %p117 = por %p115, %p116
      %p118 = scmp.ne.s32.totalorder %s109, %s110
      %p119 = scmp.eq.s32.totalorder %s31, 0
      %p120 = por %p118, %p119
      %p121 = scmp.ne.s32.totalorder %s109, %s110
      %p122 = scmp.eq.s32.totalorder %s32, 1
      %p123 = por %p121, %p122
      %p125 = scmp.ne.s32.totalorder %s110, %s124
      %p126 = scmp.eq.s32.totalorder %s32, 0
      %p127 = por %p125, %p126
      %s129 = sadd.s32 %s128, 1
      %p132 = scmp.eq.s32.totalorder %s26, 1
      %p133 = scmp.ne.s32.totalorder %s128, %s130
      %p134 = scmp.eq.s32.totalorder %s26, 0
      %p135 = por %p133, %p134
      %p136 = scmp.ne.s32.totalorder %s128, %s130
      %p137 = scmp.eq.s32.totalorder %s31, 1
      %p138 = por %p136, %p137
      %p139 = scmp.ne.s32.totalorder %s130, %s131
      %p140 = scmp.eq.s32.totalorder %s31, 0
      %p141 = por %p139, %p140
      %p142 = scmp.ne.s32.totalorder %s130, %s131
      %p143 = scmp.eq.s32.totalorder %s32, 1
      %p144 = por %p142, %p143
      %p146 = scmp.ne.s32.totalorder %s131, %s145
      %p147 = scmp.eq.s32.totalorder %s32, 0
      %p148 = por %p146, %p147
      %s150 = sadd.s32 %s149, 1
      %p153 = scmp.eq.s32.totalorder %s26, 1
      %p154 = scmp.ne.s32.totalorder %s149, %s151
      %p155 = scmp.eq.s32.totalorder %s26, 0
      %p156 = por %p154, %p155
      %p157 = scmp.ne.s32.totalorder %s149, %s151
      %p158 = scmp.eq.s32.totalorder %s31, 1
      %p159 = por %p157, %p158
      %p160 = scmp.ne.s32.totalorder %s151, %s152
      %p161 = scmp.eq.s32.totalorder %s31, 0
      %p162 = por %p160, %p161
      %p163 = scmp.ne.s32.totalorder %s151, %s152
      %p164 = scmp.eq.s32.totalorder %s32, 1
      %p165 = por %p163, %p164
      %p167 = scmp.ne.s32.totalorder %s152, %s166
      %p168 = scmp.eq.s32.totalorder %s32, 0
      %p169 = por %p167, %p168
      %s171 = sadd.s32 %s170, 1
      %p174 = scmp.eq.s32.totalorder %s26, 1
      %p175 = scmp.ne.s32.totalorder %s170, %s172
      %p176 = scmp.eq.s32.totalorder %s26, 0
      %p177 = por %p175, %p176
      %p178 = scmp.ne.s32.totalorder %s170, %s172
      %p179 = scmp.eq.s32.totalorder %s31, 1
      %p180 = por %p178, %p179
      %p181 = scmp.ne.s32.totalorder %s172, %s173
      %p182 = scmp.eq.s32.totalorder %s31, 0
      %p183 = por %p181, %p182
      %p184 = scmp.ne.s32.totalorder %s172, %s173
      %p185 = scmp.eq.s32.totalorder %s32, 1
      %p186 = por %p184, %p185
      %p188 = scmp.ne.s32.totalorder %s173, %s187
      %p189 = scmp.eq.s32.totalorder %s32, 0
      %p190 = por %p188, %p189
      %s192 = sadd.s32 %s191, 1
      %p195 = scmp.eq.s32.totalorder %s26, 1
      %p196 = scmp.ne.s32.totalorder %s191, %s193
      %p197 = scmp.eq.s32.totalorder %s26, 0
      %p198 = por %p196, %p197
      %p199 = scmp.ne.s32.totalorder %s191, %s193
      %p200 = scmp.eq.s32.totalorder %s31, 1
      %p201 = por %p199, %p200
      %p202 = scmp.ne.s32.totalorder %s193, %s194
      %p203 = scmp.eq.s32.totalorder %s31, 0
      %p204 = por %p202, %p203
      %p205 = scmp.ne.s32.totalorder %s193, %s194
      %p206 = scmp.eq.s32.totalorder %s32, 1
      %p207 = por %p205, %p206
      %p209 = scmp.ne.s32.totalorder %s194, %s208
      %p210 = scmp.eq.s32.totalorder %s32, 0
      %p211 = por %p209, %p210
      %s213 = sadd.s32 %s212, 1
      %p216 = scmp.eq.s32.totalorder %s26, 1
      %p217 = scmp.ne.s32.totalorder %s212, %s214
      %p218 = scmp.eq.s32.totalorder %s26, 0
      %p219 = por %p217, %p218
      %p220 = scmp.ne.s32.totalorder %s212, %s214
      %p221 = scmp.eq.s32.totalorder %s31, 1
      %p222 = por %p220, %p221
      %p223 = scmp.ne.s32.totalorder %s214, %s215
      %p224 = scmp.eq.s32.totalorder %s31, 0
      %p225 = por %p223, %p224
      %p226 = scmp.ne.s32.totalorder %s214, %s215
      %p227 = scmp.eq.s32.totalorder %s32, 1
      %p228 = por %p226, %p227
      %p230 = scmp.ne.s32.totalorder %s215, %s229
      %p231 = scmp.eq.s32.totalorder %s32, 0
      %p232 = por %p230, %p231
      %s234 = sadd.s32 %s233, 1
      %p237 = scmp.eq.s32.totalorder %s26, 1
      %p238 = scmp.ne.s32.totalorder %s233, %s235
      %p239 = scmp.eq.s32.totalorder %s26, 0
      %p240 = por %p238, %p239
      %p241 = scmp.ne.s32.totalorder %s233, %s235
      %p242 = scmp.eq.s32.totalorder %s31, 1
      %p243 = por %p241, %p242
      %p244 = scmp.ne.s32.totalorder %s235, %s236
      %p245 = scmp.eq.s32.totalorder %s31, 0
      %p246 = por %p244, %p245
      %p247 = scmp.ne.s32.totalorder %s235, %s236
      %p248 = scmp.eq.s32.totalorder %s32, 1
      %p249 = por %p247, %p248
      %p251 = scmp.ne.s32.totalorder %s236, %s250
      %p252 = scmp.eq.s32.totalorder %s32, 0
      %p253 = por %p251, %p252
      %s254 = ssub.s32 %s26, %s33
      %p255 = scmp.eq.s32.totalorder %s254, 0
      %s257 = sadd.s32 %s256, 1
      %s258 = scalar_select %p255, %s256, %s257
      %p261 = pneg %p255
      %p262 = scmp.eq.s32.totalorder %s26, 1
      %p263 = por %p261, %p262
      %p264 = scmp.ne.s32.totalorder %s256, %s259
      %p265 = scmp.eq.s32.totalorder %s26, 0
      %p266 = por %p264, %p265
      %p267 = scmp.ne.s32.totalorder %s256, %s259
      %p268 = scmp.eq.s32.totalorder %s31, 1
      %p269 = por %p267, %p268
      %p270 = scmp.ne.s32.totalorder %s259, %s260
      %p271 = scmp.eq.s32.totalorder %s31, 0
      %p272 = por %p270, %p271
      %p273 = scmp.ne.s32.totalorder %s259, %s260
      %p274 = scmp.eq.s32.totalorder %s32, 1
      %p275 = por %p273, %p274
      %p277 = scmp.ne.s32.totalorder %s260, %s276
      %p278 = scmp.eq.s32.totalorder %s32, 0
      %p279 = por %p277, %p278
      %s280 = ssub.s32 %s26, %s33
      %p281 = scmp.eq.s32.totalorder %s280, 0
      %s283 = sadd.s32 %s282, 1
      %s284 = scalar_select %p281, %s282, %s283
      %p287 = pneg %p281
      %p288 = scmp.eq.s32.totalorder %s26, 1
      %p289 = por %p287, %p288
      %p290 = scmp.ne.s32.totalorder %s282, %s285
      %p291 = scmp.eq.s32.totalorder %s26, 0
      %p292 = por %p290, %p291
      %p293 = scmp.ne.s32.totalorder %s282, %s285
      %p294 = scmp.eq.s32.totalorder %s31, 1
      %p295 = por %p293, %p294
      %p296 = scmp.ne.s32.totalorder %s285, %s286
      %p297 = scmp.eq.s32.totalorder %s31, 0
      %p298 = por %p296, %p297
      %p299 = scmp.ne.s32.totalorder %s285, %s286
      %p300 = scmp.eq.s32.totalorder %s32, 1
      %p301 = por %p299, %p300
      %p303 = scmp.ne.s32.totalorder %s286, %s302
      %p304 = scmp.eq.s32.totalorder %s32, 0
      %p305 = por %p303, %p304
      %p306 = scmp.le.s32.totalorder 1, %s26
      %p307 = scmp.lt.s32.totalorder %s26, 3
      %p308 = pnand %p306, %p307
      %p309 = pneg %p308
      // Predicated region
      $region9: #{linear_vae_forward.1} parent=5 // pred_check
        _
      $region10: #{linear_vae_forward.1} parent=5 // pred_check_branch
        %311 = sbr.rel (%p308) target = $region12
      $region11: #{linear_vae_forward.1} parent=5 // pred_region
        %s312 = ssub.s32 %s26, 1
        // Predicated region
        $region13: #{linear_vae_forward.1} parent=11 // pred_check
          %p313 = pneg %p99
        $region14: #{linear_vae_forward.1} parent=11 // pred_check_branch
          %315 = sbr.rel (%p313) target = $region16
        $region15: #{linear_vae_forward.1} parent=11 // pred_region
          %317 = vsyncadd [#allocation3], 0
          %s318 = sshll.u32 %s2, 4
          %s319 = int_to_ptr.hbm [resolvable:$true] %s318
          %s320 = sshll.u32 [#allocation2], 4
          %s321 = int_to_ptr.vmem [resolvable:$true] %s320
          %326 = dma.hbm_to_vmem [thread:$0]  %s319, 36864, %s321, [#allocation3], 256, 256, 16
        $region16: #{linear_vae_forward.1} parent=11 // pred_fallthru
          _
        // Predicated region
        $region17: #{linear_vae_forward.1} parent=11 // pred_check
          %p327 = pneg %p120
        $region18: #{linear_vae_forward.1} parent=11 // pred_check_branch
          %329 = sbr.rel (%p327) target = $region20
        $region19: #{linear_vae_forward.1} parent=11 // pred_region
          %331 = vsyncadd [#allocation6], 0
          %s333 = sshll.u32 %s3, 4
          %s334 = int_to_ptr.hbm [resolvable:$true] %s333
          %s335 = sshll.u32 [#allocation5], 4
          %s336 = int_to_ptr.vmem [resolvable:$true] %s335
          %338 = dma.hbm_to_vmem [thread:$0]  %s334, 64, %s336, [#allocation6]
        $region20: #{linear_vae_forward.1} parent=11 // pred_fallthru
          _
        // Predicated region
        $region21: #{linear_vae_forward.1} parent=11 // pred_check
          %p339 = pneg %p141
        $region22: #{linear_vae_forward.1} parent=11 // pred_check_branch
          %341 = sbr.rel (%p339) target = $region24
        $region23: #{linear_vae_forward.1} parent=11 // pred_region
          %343 = vsyncadd [#allocation6], 0
          %s344 = sshll.u32 %s4, 4
          %s345 = int_to_ptr.hbm [resolvable:$true] %s344
          %s346 = sshll.u32 [#allocation7], 4
          %s347 = int_to_ptr.vmem [resolvable:$true] %s346
          %352 = dma.hbm_to_vmem [thread:$0]  %s345, 4096, %s347, [#allocation6], 64, 64, 4
        $region24: #{linear_vae_forward.1} parent=11 // pred_fallthru
          _
        // Predicated region
        $region25: #{linear_vae_forward.1} parent=11 // pred_check
          %p353 = pneg %p162
        $region26: #{linear_vae_forward.1} parent=11 // pred_check_branch
          %355 = sbr.rel (%p353) target = $region28
        $region27: #{linear_vae_forward.1} parent=11 // pred_region
          %357 = vsyncadd [#allocation9], 0
          %s359 = sshll.u32 %s5, 4
          %s360 = int_to_ptr.hbm [resolvable:$true] %s359
          %s361 = sshll.u32 [#allocation8], 4
          %s362 = int_to_ptr.vmem [resolvable:$true] %s361
          %364 = dma.hbm_to_vmem [thread:$0]  %s360, 16, %s362, [#allocation9]
        $region28: #{linear_vae_forward.1} parent=11 // pred_fallthru
          _
        // Predicated region
        $region29: #{linear_vae_forward.1} parent=11 // pred_check
          %p365 = pneg %p183
        $region30: #{linear_vae_forward.1} parent=11 // pred_check_branch
          %367 = sbr.rel (%p365) target = $region32
        $region31: #{linear_vae_forward.1} parent=11 // pred_region
          %369 = vsyncadd [#allocation9], 0
          %s370 = sshll.u32 %s6, 4
          %s371 = int_to_ptr.hbm [resolvable:$true] %s370
          %s372 = sshll.u32 [#allocation10], 4
          %s373 = int_to_ptr.vmem [resolvable:$true] %s372
          %378 = dma.hbm_to_vmem [thread:$0]  %s371, 4096, %s373, [#allocation9], 256, 256, 16
        $region32: #{linear_vae_forward.1} parent=11 // pred_fallthru
          _
        // Predicated region
        $region33: #{linear_vae_forward.1} parent=11 // pred_check
          %p379 = pneg %p204
        $region34: #{linear_vae_forward.1} parent=11 // pred_check_branch
          %381 = sbr.rel (%p379) target = $region36
        $region35: #{linear_vae_forward.1} parent=11 // pred_region
          %383 = vsyncadd [#allocation12], 0
          %s385 = sshll.u32 %s7, 4
          %s386 = int_to_ptr.hbm [resolvable:$true] %s385
          %s387 = sshll.u32 [#allocation11], 4
          %s388 = int_to_ptr.vmem [resolvable:$true] %s387
          %390 = dma.hbm_to_vmem [thread:$0]  %s386, 64, %s388, [#allocation12]
        $region36: #{linear_vae_forward.1} parent=11 // pred_fallthru
          _
        // Predicated region
        $region37: #{linear_vae_forward.1} parent=11 // pred_check
          %p391 = pneg %p225
        $region38: #{linear_vae_forward.1} parent=11 // pred_check_branch
          %393 = sbr.rel (%p391) target = $region40
        $region39: #{linear_vae_forward.1} parent=11 // pred_region
          %395 = vsyncadd [#allocation12], 0
          %s396 = sshll.u32 %s8, 4
          %s397 = int_to_ptr.hbm [resolvable:$true] %s396
          %s398 = sshll.u32 [#allocation13], 4
          %s399 = int_to_ptr.vmem [resolvable:$true] %s398
          %404 = dma.hbm_to_vmem [thread:$0]  %s397, 36864, %s399, [#allocation12], 576, 576, 36
        $region40: #{linear_vae_forward.1} parent=11 // pred_fallthru
          _
        // Predicated region
        $region41: #{linear_vae_forward.1} parent=11 // pred_check
          %p405 = pneg %p246
        $region42: #{linear_vae_forward.1} parent=11 // pred_check_branch
          %407 = sbr.rel (%p405) target = $region44
        $region43: #{linear_vae_forward.1} parent=11 // pred_region
          %409 = vsyncadd [#allocation15], 0
          %s411 = sshll.u32 %s9, 4
          %s412 = int_to_ptr.hbm [resolvable:$true] %s411
          %s413 = sshll.u32 [#allocation14], 4
          %s414 = int_to_ptr.vmem [resolvable:$true] %s413
          %416 = dma.hbm_to_vmem [thread:$0]  %s412, 144, %s414, [#allocation15]
        $region44: #{linear_vae_forward.1} parent=11 // pred_fallthru
          _
      $region12: #{linear_vae_forward.1} parent=5 // pred_fallthru
        _
      %p417 = scmp.lt.s32.totalorder %s26, 2
      // Predicated region
      $region45: #{linear_vae_forward.1} parent=5 // pred_check
        %p418 = pneg %p417
      $region46: #{linear_vae_forward.1} parent=5 // pred_check_branch
        %420 = sbr.rel (%p418) target = $region48
      $region47: #{linear_vae_forward.1} parent=5 // pred_region
        // Predicated region
        $region49: #{linear_vae_forward.1} parent=47 // pred_check
          %p421 = pneg %p46
        $region50: #{linear_vae_forward.1} parent=47 // pred_check_branch
          %423 = sbr.rel (%p421) target = $region52
        $region51: #{linear_vae_forward.1} parent=47 // pred_region
          %s424 = smul.u32 2, %s26
          %p425 = scmp.lt.s32.totalorder %s424, 3
          %s426 = scalar_select %p425, %s424, 3
          %s427 = smul.addr %s426, 9
          %s428 = smul.addr %s427, 4
          %s429 = scalar_lea.vmem %s0, %s428
          %s430 = smul.u32 2, %s26
        $region52: #{linear_vae_forward.1} parent=47 // pred_fallthru
          _
        // Predicated region
        $region53: #{linear_vae_forward.1} parent=47 // pred_check
          %p431 = pneg %p72
        $region54: #{linear_vae_forward.1} parent=47 // pred_check_branch
          %433 = sbr.rel (%p431) target = $region56
        $region55: #{linear_vae_forward.1} parent=47 // pred_region
          %s434 = smul.u32 2, %s26
          %p435 = scmp.lt.s32.totalorder %s434, 3
          %s436 = scalar_select %p435, %s434, 3
          %s437 = smul.addr %s436, 4
          %s438 = scalar_lea.vmem %s1, %s437
          %s439 = smul.u32 2, %s26
        $region56: #{linear_vae_forward.1} parent=47 // pred_fallthru
          _
      $region48: #{linear_vae_forward.1} parent=5 // pred_fallthru
        _
      %p440 = scmp.le.s32.totalorder 1, %s26
      %p441 = scmp.lt.s32.totalorder %s26, 3
      %p442 = pnand %p440, %p441
      %p443 = pneg %p442
      // Predicated region
      $region57: #{linear_vae_forward.1} parent=5 // pred_check
        _
      $region58: #{linear_vae_forward.1} parent=5 // pred_check_branch
        %445 = sbr.rel (%p442) target = $region60
      $region59: #{linear_vae_forward.1} parent=5 // pred_region
        %s446 = ssub.s32 %s26, 1
        // Predicated region
        $region61: #{linear_vae_forward.1} parent=59 // pred_check
          %p447 = pneg %p99
        $region62: #{linear_vae_forward.1} parent=59 // pred_check_branch
          %449 = sbr.rel (%p447) target = $region64
        $region63: #{linear_vae_forward.1} parent=59 // pred_region
          %451 = dma.done [#allocation3], 36864
        $region64: #{linear_vae_forward.1} parent=59 // pred_fallthru
          _
        // Predicated region
        $region65: #{linear_vae_forward.1} parent=59 // pred_check
          %p452 = pneg %p120
        $region66: #{linear_vae_forward.1} parent=59 // pred_check_branch
          %454 = sbr.rel (%p452) target = $region68
        $region67: #{linear_vae_forward.1} parent=59 // pred_region
          %456 = dma.done [#allocation6], 64
        $region68: #{linear_vae_forward.1} parent=59 // pred_fallthru
          _
        // Predicated region
        $region69: #{linear_vae_forward.1} parent=59 // pred_check
          %p457 = pneg %p141
        $region70: #{linear_vae_forward.1} parent=59 // pred_check_branch
          %459 = sbr.rel (%p457) target = $region72
        $region71: #{linear_vae_forward.1} parent=59 // pred_region
          %461 = dma.done [#allocation6], 4096
        $region72: #{linear_vae_forward.1} parent=59 // pred_fallthru
          _
        // Predicated region
        $region73: #{linear_vae_forward.1} parent=59 // pred_check
          %p462 = pneg %p162
        $region74: #{linear_vae_forward.1} parent=59 // pred_check_branch
          %464 = sbr.rel (%p462) target = $region76
        $region75: #{linear_vae_forward.1} parent=59 // pred_region
          %466 = dma.done [#allocation9], 16
        $region76: #{linear_vae_forward.1} parent=59 // pred_fallthru
          _
        // Predicated region
        $region77: #{linear_vae_forward.1} parent=59 // pred_check
          %p467 = pneg %p183
        $region78: #{linear_vae_forward.1} parent=59 // pred_check_branch
          %469 = sbr.rel (%p467) target = $region80
        $region79: #{linear_vae_forward.1} parent=59 // pred_region
          %471 = dma.done [#allocation9], 4096
        $region80: #{linear_vae_forward.1} parent=59 // pred_fallthru
          _
        // Predicated region
        $region81: #{linear_vae_forward.1} parent=59 // pred_check
          %p472 = pneg %p204
        $region82: #{linear_vae_forward.1} parent=59 // pred_check_branch
          %474 = sbr.rel (%p472) target = $region84
        $region83: #{linear_vae_forward.1} parent=59 // pred_region
          %476 = dma.done [#allocation12], 64
        $region84: #{linear_vae_forward.1} parent=59 // pred_fallthru
          _
        // Predicated region
        $region85: #{linear_vae_forward.1} parent=59 // pred_check
          %p477 = pneg %p225
        $region86: #{linear_vae_forward.1} parent=59 // pred_check_branch
          %479 = sbr.rel (%p477) target = $region88
        $region87: #{linear_vae_forward.1} parent=59 // pred_region
          %481 = dma.done [#allocation12], 36864
        $region88: #{linear_vae_forward.1} parent=59 // pred_fallthru
          _
        // Predicated region
        $region89: #{linear_vae_forward.1} parent=59 // pred_check
          %p482 = pneg %p246
        $region90: #{linear_vae_forward.1} parent=59 // pred_check_branch
          %484 = sbr.rel (%p482) target = $region92
        $region91: #{linear_vae_forward.1} parent=59 // pred_region
          %486 = dma.done [#allocation15], 144
        $region92: #{linear_vae_forward.1} parent=59 // pred_fallthru
          _
        %s487 = smul.u32 2, %s31
        %p488 = scmp.lt.s32.totalorder %s487, 3
        %s489 = scalar_select %p488, %s487, 3
        %s490 = smul.addr %s489, 9
        %s491 = smul.addr %s490, 4
        %s492 = scalar_lea.vmem %s0, %s491
        %p493 = pneg %p52
        %p494 = pneg %p49
        %s495 = smul.u32 2, %s31
        %p496 = scmp.lt.s32.totalorder %s495, 3
        %s497 = scalar_select %p496, %s495, 3
        %s498 = smul.addr %s497, 4
        %s499 = scalar_lea.vmem %s1, %s498
        %p500 = pneg %p78
        %p501 = pneg %p75
        %p502 = pneg %p99
        %p503 = pneg %p96
        %p504 = pneg %p120
        %p505 = pneg %p117
        %p506 = pneg %p141
        %p507 = pneg %p138
        %p508 = pneg %p162
        %p509 = pneg %p159
        %p510 = pneg %p183
        %p511 = pneg %p180
        %p512 = pneg %p204
        %p513 = pneg %p201
        %p514 = pneg %p225
        %p515 = pneg %p222
        %p516 = pneg %p246
        %p517 = pneg %p243
        %p518 = pneg %p272
        %p519 = pneg %p269
        %s520 = sand.u32 %s259, 1
        %s521 = scalar_lea.sflag [#allocation4], %s520
        %s522 = sand.u32 %s259, 1
        %s523 = smul.addr %s522, 72
        %s524 = scalar_lea.vmem [#allocation16], %s523
        %p525 = pneg %p298
        %p526 = pneg %p295
        %s527 = smul.u32 2, %s31
        %p528 = scmp.lt.s32.totalorder %s527, 3
        %s529 = scalar_select %p528, %s527, 3
        %s530 = smul.addr %s529, 8
        %s531 = scalar_lea.vmem %s11, %s530
        %s532 = smul.u32 2, %s31
        %p533 = scmp.lt.s32.totalorder %s532, 3
        %s534 = scalar_select %p533, %s532, 3
        %s535 = smul.addr %s534, 9
        %s536 = smul.addr %s535, 4
        %s537 = scalar_lea.vmem %s0, %s536
        %s538 = smul.u32 2, %s31
        %s539 = smul.u32 2, %s31
        %p540 = scmp.lt.s32.totalorder %s539, 3
        %s541 = scalar_select %p540, %s539, 3
        %s542 = smul.addr %s541, 4
        %s543 = scalar_lea.vmem %s1, %s542
        %s544 = smul.u32 2, %s31
        %s545 = smul.u32 2, %s31
        %s546 = smul.u32 2, %s31
        %p547 = scmp.lt.s32.totalorder %s546, 3
        %s548 = scalar_select %p547, %s546, 3
        %s549 = smul.addr %s548, 8
        %s550 = scalar_lea.vmem %s11, %s549
        %s551 = smul.u32 2, %s31
        %v552 = vld [vmem:[%s537] sm:$0xff]
        %v553 = vld [vmem:[%s537 + $0x8] sm:$0xff]
        %v554 = vld [vmem:[%s537 + $0x10] sm:$0xff]
        %v555 = vld [vmem:[%s537 + $0x18] sm:$0xff]
        %v556 = vld [vmem:[%s537 + $0x20] sm:$0xf]
        %v557 = vld [vmem:[%s537 + $0x24] sm:$0xff]
        %v558 = vld [vmem:[%s537 + $0x2c] sm:$0xff]
        %v559 = vld [vmem:[%s537 + $0x34] sm:$0xff]
        %v560 = vld [vmem:[%s537 + $0x3c] sm:$0xff]
        %v561 = vld [vmem:[%s537 + $0x44] sm:$0xf]
        %v562 = vld [vmem:[#allocation2] sm:$0xff]
        %v563 = vld [vmem:[#allocation2 + $0x8] sm:$0xff]
        %v564 = vld [vmem:[#allocation2 + $0x10] sm:$0xff]
        %v565 = vld [vmem:[#allocation2 + $0x18] sm:$0xff]
        %v566 = vld [vmem:[#allocation2 + $0x20] sm:$0xff]
        %v567 = vld [vmem:[#allocation2 + $0x28] sm:$0xff]
        %v568 = vld [vmem:[#allocation2 + $0x30] sm:$0xff]
        %v569 = vld [vmem:[#allocation2 + $0x38] sm:$0xff]
        %v570 = vld [vmem:[#allocation2 + $0x40] sm:$0xff]
        %v571 = vld [vmem:[#allocation2 + $0x48] sm:$0xff]
        %v572 = vld [vmem:[#allocation2 + $0x50] sm:$0xff]
        %v573 = vld [vmem:[#allocation2 + $0x58] sm:$0xff]
        %v574 = vld [vmem:[#allocation2 + $0x60] sm:$0xff]
        %v575 = vld [vmem:[#allocation2 + $0x68] sm:$0xff]
        %v576 = vld [vmem:[#allocation2 + $0x70] sm:$0xff]
        %v577 = vld [vmem:[#allocation2 + $0x78] sm:$0xff]
        %v578 = vld [vmem:[#allocation2 + $0x80] sm:$0xff]
        %v579 = vld [vmem:[#allocation2 + $0x88] sm:$0xff]
        %v580 = vld [vmem:[#allocation2 + $0x90] sm:$0xff]
        %v581 = vld [vmem:[#allocation2 + $0x98] sm:$0xff]
        %v582 = vld [vmem:[#allocation2 + $0xa0] sm:$0xff]
        %v583 = vld [vmem:[#allocation2 + $0xa8] sm:$0xff]
        %v584 = vld [vmem:[#allocation2 + $0xb0] sm:$0xff]
        %v585 = vld [vmem:[#allocation2 + $0xb8] sm:$0xff]
        %v586 = vld [vmem:[#allocation2 + $0xc0] sm:$0xff]
        %v587 = vld [vmem:[#allocation2 + $0xc8] sm:$0xff]
        %v588 = vld [vmem:[#allocation2 + $0xd0] sm:$0xff]
        %v589 = vld [vmem:[#allocation2 + $0xd8] sm:$0xff]
        %v590 = vld [vmem:[#allocation2 + $0xe0] sm:$0xff]
        %v591 = vld [vmem:[#allocation2 + $0xe8] sm:$0xff]
        %v592 = vld [vmem:[#allocation2 + $0xf0] sm:$0xff]
        %v593 = vld [vmem:[#allocation2 + $0xf8] sm:$0xff]
        %v594 = vld [vmem:[#allocation2 + $0x100] sm:$0xff]
        %v595 = vld [vmem:[#allocation2 + $0x108] sm:$0xff]
        %v596 = vld [vmem:[#allocation2 + $0x110] sm:$0xff]
        %v597 = vld [vmem:[#allocation2 + $0x118] sm:$0xff]
        %v598 = vld [vmem:[#allocation2 + $0x120] sm:$0xff]
        %v599 = vld [vmem:[#allocation2 + $0x128] sm:$0xff]
        %v600 = vld [vmem:[#allocation2 + $0x130] sm:$0xff]
        %v601 = vld [vmem:[#allocation2 + $0x138] sm:$0xff]
        %v602 = vld [vmem:[#allocation2 + $0x140] sm:$0xff]
        %v603 = vld [vmem:[#allocation2 + $0x148] sm:$0xff]
        %v604 = vld [vmem:[#allocation2 + $0x150] sm:$0xff]
        %v605 = vld [vmem:[#allocation2 + $0x158] sm:$0xff]
        %v606 = vld [vmem:[#allocation2 + $0x160] sm:$0xff]
        %v607 = vld [vmem:[#allocation2 + $0x168] sm:$0xff]
        %v608 = vld [vmem:[#allocation2 + $0x170] sm:$0xff]
        %v609 = vld [vmem:[#allocation2 + $0x178] sm:$0xff]
        %v610 = vld [vmem:[#allocation2 + $0x180] sm:$0xff]
        %v611 = vld [vmem:[#allocation2 + $0x188] sm:$0xff]
        %v612 = vld [vmem:[#allocation2 + $0x190] sm:$0xff]
        %v613 = vld [vmem:[#allocation2 + $0x198] sm:$0xff]
        %v614 = vld [vmem:[#allocation2 + $0x1a0] sm:$0xff]
        %v615 = vld [vmem:[#allocation2 + $0x1a8] sm:$0xff]
        %v616 = vld [vmem:[#allocation2 + $0x1b0] sm:$0xff]
        %v617 = vld [vmem:[#allocation2 + $0x1b8] sm:$0xff]
        %v618 = vld [vmem:[#allocation2 + $0x1c0] sm:$0xff]
        %v619 = vld [vmem:[#allocation2 + $0x1c8] sm:$0xff]
        %v620 = vld [vmem:[#allocation2 + $0x1d0] sm:$0xff]
        %v621 = vld [vmem:[#allocation2 + $0x1d8] sm:$0xff]
        %v622 = vld [vmem:[#allocation2 + $0x1e0] sm:$0xff]
        %v623 = vld [vmem:[#allocation2 + $0x1e8] sm:$0xff]
        %v624 = vld [vmem:[#allocation2 + $0x1f0] sm:$0xff]
        %v625 = vld [vmem:[#allocation2 + $0x1f8] sm:$0xff]
        %v626 = vld [vmem:[#allocation2 + $0x200] sm:$0xff]
        %v627 = vld [vmem:[#allocation2 + $0x208] sm:$0xff]
        %v628 = vld [vmem:[#allocation2 + $0x210] sm:$0xff]
        %v629 = vld [vmem:[#allocation2 + $0x218] sm:$0xff]
        %v630 = vld [vmem:[#allocation2 + $0x220] sm:$0xff]
        %v631 = vld [vmem:[#allocation2 + $0x228] sm:$0xff]
        %v632 = vld [vmem:[#allocation2 + $0x230] sm:$0xff]
        %v633 = vld [vmem:[#allocation2 + $0x238] sm:$0xff]
        %v634 = vld [vmem:[#allocation2 + $0x240] sm:$0xff]
        %v635 = vld [vmem:[#allocation2 + $0x248] sm:$0xff]
        %v636 = vld [vmem:[#allocation2 + $0x250] sm:$0xff]
        %v637 = vld [vmem:[#allocation2 + $0x258] sm:$0xff]
        %v638 = vld [vmem:[#allocation2 + $0x260] sm:$0xff]
        %v639 = vld [vmem:[#allocation2 + $0x268] sm:$0xff]
        %v640 = vld [vmem:[#allocation2 + $0x270] sm:$0xff]
        %v641 = vld [vmem:[#allocation2 + $0x278] sm:$0xff]
        %v642 = vld [vmem:[#allocation2 + $0x280] sm:$0xff]
        %v643 = vld [vmem:[#allocation2 + $0x288] sm:$0xff]
        %v644 = vld [vmem:[#allocation2 + $0x290] sm:$0xff]
        %v645 = vld [vmem:[#allocation2 + $0x298] sm:$0xff]
        %v646 = vld [vmem:[#allocation2 + $0x2a0] sm:$0xff]
        %v647 = vld [vmem:[#allocation2 + $0x2a8] sm:$0xff]
        %v648 = vld [vmem:[#allocation2 + $0x2b0] sm:$0xff]
        %v649 = vld [vmem:[#allocation2 + $0x2b8] sm:$0xff]
        %v650 = vld [vmem:[#allocation2 + $0x2c0] sm:$0xff]
        %v651 = vld [vmem:[#allocation2 + $0x2c8] sm:$0xff]
        %v652 = vld [vmem:[#allocation2 + $0x2d0] sm:$0xff]
        %v653 = vld [vmem:[#allocation2 + $0x2d8] sm:$0xff]
        %v654 = vld [vmem:[#allocation2 + $0x2e0] sm:$0xff]
        %v655 = vld [vmem:[#allocation2 + $0x2e8] sm:$0xff]
        %v656 = vld [vmem:[#allocation2 + $0x2f0] sm:$0xff]
        %v657 = vld [vmem:[#allocation2 + $0x2f8] sm:$0xff]
        %v658 = vld [vmem:[#allocation2 + $0x300] sm:$0xff]
        %v659 = vld [vmem:[#allocation2 + $0x308] sm:$0xff]
        %v660 = vld [vmem:[#allocation2 + $0x310] sm:$0xff]
        %v661 = vld [vmem:[#allocation2 + $0x318] sm:$0xff]
        %v662 = vld [vmem:[#allocation2 + $0x320] sm:$0xff]
        %v663 = vld [vmem:[#allocation2 + $0x328] sm:$0xff]
        %v664 = vld [vmem:[#allocation2 + $0x330] sm:$0xff]
        %v665 = vld [vmem:[#allocation2 + $0x338] sm:$0xff]
        %v666 = vld [vmem:[#allocation2 + $0x340] sm:$0xff]
        %v667 = vld [vmem:[#allocation2 + $0x348] sm:$0xff]
        %v668 = vld [vmem:[#allocation2 + $0x350] sm:$0xff]
        %v669 = vld [vmem:[#allocation2 + $0x358] sm:$0xff]
        %v670 = vld [vmem:[#allocation2 + $0x360] sm:$0xff]
        %v671 = vld [vmem:[#allocation2 + $0x368] sm:$0xff]
        %v672 = vld [vmem:[#allocation2 + $0x370] sm:$0xff]
        %v673 = vld [vmem:[#allocation2 + $0x378] sm:$0xff]
        %v674 = vld [vmem:[#allocation2 + $0x380] sm:$0xff]
        %v675 = vld [vmem:[#allocation2 + $0x388] sm:$0xff]
        %v676 = vld [vmem:[#allocation2 + $0x390] sm:$0xff]
        %v677 = vld [vmem:[#allocation2 + $0x398] sm:$0xff]
        %v678 = vld [vmem:[#allocation2 + $0x3a0] sm:$0xff]
        %v679 = vld [vmem:[#allocation2 + $0x3a8] sm:$0xff]
        %v680 = vld [vmem:[#allocation2 + $0x3b0] sm:$0xff]
        %v681 = vld [vmem:[#allocation2 + $0x3b8] sm:$0xff]
        %v682 = vld [vmem:[#allocation2 + $0x3c0] sm:$0xff]
        %v683 = vld [vmem:[#allocation2 + $0x3c8] sm:$0xff]
        %v684 = vld [vmem:[#allocation2 + $0x3d0] sm:$0xff]
        %v685 = vld [vmem:[#allocation2 + $0x3d8] sm:$0xff]
        %v686 = vld [vmem:[#allocation2 + $0x3e0] sm:$0xff]
        %v687 = vld [vmem:[#allocation2 + $0x3e8] sm:$0xff]
        %v688 = vld [vmem:[#allocation2 + $0x3f0] sm:$0xff]
        %v689 = vld [vmem:[#allocation2 + $0x3f8] sm:$0xff]
        %v690 = vld [vmem:[#allocation2 + $0x400] sm:$0xff]
        %v691 = vld [vmem:[#allocation2 + $0x408] sm:$0xff]
        %v692 = vld [vmem:[#allocation2 + $0x410] sm:$0xff]
        %v693 = vld [vmem:[#allocation2 + $0x418] sm:$0xff]
        %v694 = vld [vmem:[#allocation2 + $0x420] sm:$0xff]
        %v695 = vld [vmem:[#allocation2 + $0x428] sm:$0xff]
        %v696 = vld [vmem:[#allocation2 + $0x430] sm:$0xff]
        %v697 = vld [vmem:[#allocation2 + $0x438] sm:$0xff]
        %v698 = vld [vmem:[#allocation2 + $0x440] sm:$0xff]
        %v699 = vld [vmem:[#allocation2 + $0x448] sm:$0xff]
        %v700 = vld [vmem:[#allocation2 + $0x450] sm:$0xff]
        %v701 = vld [vmem:[#allocation2 + $0x458] sm:$0xff]
        %v702 = vld [vmem:[#allocation2 + $0x460] sm:$0xff]
        %v703 = vld [vmem:[#allocation2 + $0x468] sm:$0xff]
        %v704 = vld [vmem:[#allocation2 + $0x470] sm:$0xff]
        %v705 = vld [vmem:[#allocation2 + $0x478] sm:$0xff]
        %v706 = vld [vmem:[#allocation2 + $0x480] sm:$0xff]
        %v707 = vld [vmem:[#allocation2 + $0x488] sm:$0xff]
        %v708 = vld [vmem:[#allocation2 + $0x490] sm:$0xff]
        %v709 = vld [vmem:[#allocation2 + $0x498] sm:$0xff]
        %v710 = vld [vmem:[#allocation2 + $0x4a0] sm:$0xff]
        %v711 = vld [vmem:[#allocation2 + $0x4a8] sm:$0xff]
        %v712 = vld [vmem:[#allocation2 + $0x4b0] sm:$0xff]
        %v713 = vld [vmem:[#allocation2 + $0x4b8] sm:$0xff]
        %v714 = vld [vmem:[#allocation2 + $0x4c0] sm:$0xff]
        %v715 = vld [vmem:[#allocation2 + $0x4c8] sm:$0xff]
        %v716 = vld [vmem:[#allocation2 + $0x4d0] sm:$0xff]
        %v717 = vld [vmem:[#allocation2 + $0x4d8] sm:$0xff]
        %v718 = vld [vmem:[#allocation2 + $0x4e0] sm:$0xff]
        %v719 = vld [vmem:[#allocation2 + $0x4e8] sm:$0xff]
        %v720 = vld [vmem:[#allocation2 + $0x4f0] sm:$0xff]
        %v721 = vld [vmem:[#allocation2 + $0x4f8] sm:$0xff]
        %v722 = vld [vmem:[#allocation2 + $0x500] sm:$0xff]
        %v723 = vld [vmem:[#allocation2 + $0x508] sm:$0xff]
        %v724 = vld [vmem:[#allocation2 + $0x510] sm:$0xff]
        %v725 = vld [vmem:[#allocation2 + $0x518] sm:$0xff]
        %v726 = vld [vmem:[#allocation2 + $0x520] sm:$0xff]
        %v727 = vld [vmem:[#allocation2 + $0x528] sm:$0xff]
        %v728 = vld [vmem:[#allocation2 + $0x530] sm:$0xff]
        %v729 = vld [vmem:[#allocation2 + $0x538] sm:$0xff]
        %v730 = vld [vmem:[#allocation2 + $0x540] sm:$0xff]
        %v731 = vld [vmem:[#allocation2 + $0x548] sm:$0xff]
        %v732 = vld [vmem:[#allocation2 + $0x550] sm:$0xff]
        %v733 = vld [vmem:[#allocation2 + $0x558] sm:$0xff]
        %v734 = vld [vmem:[#allocation2 + $0x560] sm:$0xff]
        %v735 = vld [vmem:[#allocation2 + $0x568] sm:$0xff]
        %v736 = vld [vmem:[#allocation2 + $0x570] sm:$0xff]
        %v737 = vld [vmem:[#allocation2 + $0x578] sm:$0xff]
        %v738 = vld [vmem:[#allocation2 + $0x580] sm:$0xff]
        %v739 = vld [vmem:[#allocation2 + $0x588] sm:$0xff]
        %v740 = vld [vmem:[#allocation2 + $0x590] sm:$0xff]
        %v741 = vld [vmem:[#allocation2 + $0x598] sm:$0xff]
        %v742 = vld [vmem:[#allocation2 + $0x5a0] sm:$0xff]
        %v743 = vld [vmem:[#allocation2 + $0x5a8] sm:$0xff]
        %v744 = vld [vmem:[#allocation2 + $0x5b0] sm:$0xff]
        %v745 = vld [vmem:[#allocation2 + $0x5b8] sm:$0xff]
        %v746 = vld [vmem:[#allocation2 + $0x5c0] sm:$0xff]
        %v747 = vld [vmem:[#allocation2 + $0x5c8] sm:$0xff]
        %v748 = vld [vmem:[#allocation2 + $0x5d0] sm:$0xff]
        %v749 = vld [vmem:[#allocation2 + $0x5d8] sm:$0xff]
        %v750 = vld [vmem:[#allocation2 + $0x5e0] sm:$0xff]
        %v751 = vld [vmem:[#allocation2 + $0x5e8] sm:$0xff]
        %v752 = vld [vmem:[#allocation2 + $0x5f0] sm:$0xff]
        %v753 = vld [vmem:[#allocation2 + $0x5f8] sm:$0xff]
        %v754 = vld [vmem:[#allocation2 + $0x600] sm:$0xff]
        %v755 = vld [vmem:[#allocation2 + $0x608] sm:$0xff]
        %v756 = vld [vmem:[#allocation2 + $0x610] sm:$0xff]
        %v757 = vld [vmem:[#allocation2 + $0x618] sm:$0xff]
        %v758 = vld [vmem:[#allocation2 + $0x620] sm:$0xff]
        %v759 = vld [vmem:[#allocation2 + $0x628] sm:$0xff]
        %v760 = vld [vmem:[#allocation2 + $0x630] sm:$0xff]
        %v761 = vld [vmem:[#allocation2 + $0x638] sm:$0xff]
        %v762 = vld [vmem:[#allocation2 + $0x640] sm:$0xff]
        %v763 = vld [vmem:[#allocation2 + $0x648] sm:$0xff]
        %v764 = vld [vmem:[#allocation2 + $0x650] sm:$0xff]
        %v765 = vld [vmem:[#allocation2 + $0x658] sm:$0xff]
        %v766 = vld [vmem:[#allocation2 + $0x660] sm:$0xff]
        %v767 = vld [vmem:[#allocation2 + $0x668] sm:$0xff]
        %v768 = vld [vmem:[#allocation2 + $0x670] sm:$0xff]
        %v769 = vld [vmem:[#allocation2 + $0x678] sm:$0xff]
        %v770 = vld [vmem:[#allocation2 + $0x680] sm:$0xff]
        %v771 = vld [vmem:[#allocation2 + $0x688] sm:$0xff]
        %v772 = vld [vmem:[#allocation2 + $0x690] sm:$0xff]
        %v773 = vld [vmem:[#allocation2 + $0x698] sm:$0xff]
        %v774 = vld [vmem:[#allocation2 + $0x6a0] sm:$0xff]
        %v775 = vld [vmem:[#allocation2 + $0x6a8] sm:$0xff]
        %v776 = vld [vmem:[#allocation2 + $0x6b0] sm:$0xff]
        %v777 = vld [vmem:[#allocation2 + $0x6b8] sm:$0xff]
        %v778 = vld [vmem:[#allocation2 + $0x6c0] sm:$0xff]
        %v779 = vld [vmem:[#allocation2 + $0x6c8] sm:$0xff]
        %v780 = vld [vmem:[#allocation2 + $0x6d0] sm:$0xff]
        %v781 = vld [vmem:[#allocation2 + $0x6d8] sm:$0xff]
        %v782 = vld [vmem:[#allocation2 + $0x6e0] sm:$0xff]
        %v783 = vld [vmem:[#allocation2 + $0x6e8] sm:$0xff]
        %v784 = vld [vmem:[#allocation2 + $0x6f0] sm:$0xff]
        %v785 = vld [vmem:[#allocation2 + $0x6f8] sm:$0xff]
        %v786 = vld [vmem:[#allocation2 + $0x700] sm:$0xff]
        %v787 = vld [vmem:[#allocation2 + $0x708] sm:$0xff]
        %v788 = vld [vmem:[#allocation2 + $0x710] sm:$0xff]
        %v789 = vld [vmem:[#allocation2 + $0x718] sm:$0xff]
        %v790 = vld [vmem:[#allocation2 + $0x720] sm:$0xff]
        %v791 = vld [vmem:[#allocation2 + $0x728] sm:$0xff]
        %v792 = vld [vmem:[#allocation2 + $0x730] sm:$0xff]
        %v793 = vld [vmem:[#allocation2 + $0x738] sm:$0xff]
        %v794 = vld [vmem:[#allocation2 + $0x740] sm:$0xff]
        %v795 = vld [vmem:[#allocation2 + $0x748] sm:$0xff]
        %v796 = vld [vmem:[#allocation2 + $0x750] sm:$0xff]
        %v797 = vld [vmem:[#allocation2 + $0x758] sm:$0xff]
        %v798 = vld [vmem:[#allocation2 + $0x760] sm:$0xff]
        %v799 = vld [vmem:[#allocation2 + $0x768] sm:$0xff]
        %v800 = vld [vmem:[#allocation2 + $0x770] sm:$0xff]
        %v801 = vld [vmem:[#allocation2 + $0x778] sm:$0xff]
        %v802 = vld [vmem:[#allocation2 + $0x780] sm:$0xff]
        %v803 = vld [vmem:[#allocation2 + $0x788] sm:$0xff]
        %v804 = vld [vmem:[#allocation2 + $0x790] sm:$0xff]
        %v805 = vld [vmem:[#allocation2 + $0x798] sm:$0xff]
        %v806 = vld [vmem:[#allocation2 + $0x7a0] sm:$0xff]
        %v807 = vld [vmem:[#allocation2 + $0x7a8] sm:$0xff]
        %v808 = vld [vmem:[#allocation2 + $0x7b0] sm:$0xff]
        %v809 = vld [vmem:[#allocation2 + $0x7b8] sm:$0xff]
        %v810 = vld [vmem:[#allocation2 + $0x7c0] sm:$0xff]
        %v811 = vld [vmem:[#allocation2 + $0x7c8] sm:$0xff]
        %v812 = vld [vmem:[#allocation2 + $0x7d0] sm:$0xff]
        %v813 = vld [vmem:[#allocation2 + $0x7d8] sm:$0xff]
        %v814 = vld [vmem:[#allocation2 + $0x7e0] sm:$0xff]
        %v815 = vld [vmem:[#allocation2 + $0x7e8] sm:$0xff]
        %v816 = vld [vmem:[#allocation2 + $0x7f0] sm:$0xff]
        %v817 = vld [vmem:[#allocation2 + $0x7f8] sm:$0xff]
        %v818 = vld [vmem:[#allocation2 + $0x800] sm:$0xff]
        %v819 = vld [vmem:[#allocation2 + $0x808] sm:$0xff]
        %v820 = vld [vmem:[#allocation2 + $0x810] sm:$0xff]
        %v821 = vld [vmem:[#allocation2 + $0x818] sm:$0xff]
        %v822 = vld [vmem:[#allocation2 + $0x820] sm:$0xff]
        %v823 = vld [vmem:[#allocation2 + $0x828] sm:$0xff]
        %v824 = vld [vmem:[#allocation2 + $0x830] sm:$0xff]
        %v825 = vld [vmem:[#allocation2 + $0x838] sm:$0xff]
        %v826 = vld [vmem:[#allocation2 + $0x840] sm:$0xff]
        %v827 = vld [vmem:[#allocation2 + $0x848] sm:$0xff]
        %v828 = vld [vmem:[#allocation2 + $0x850] sm:$0xff]
        %v829 = vld [vmem:[#allocation2 + $0x858] sm:$0xff]
        %v830 = vld [vmem:[#allocation2 + $0x860] sm:$0xff]
        %v831 = vld [vmem:[#allocation2 + $0x868] sm:$0xff]
        %v832 = vld [vmem:[#allocation2 + $0x870] sm:$0xff]
        %v833 = vld [vmem:[#allocation2 + $0x878] sm:$0xff]
        %v834 = vld [vmem:[#allocation2 + $0x880] sm:$0xff]
        %v835 = vld [vmem:[#allocation2 + $0x888] sm:$0xff]
        %v836 = vld [vmem:[#allocation2 + $0x890] sm:$0xff]
        %v837 = vld [vmem:[#allocation2 + $0x898] sm:$0xff]
        %v838 = vld [vmem:[#allocation2 + $0x8a0] sm:$0xff]
        %v839 = vld [vmem:[#allocation2 + $0x8a8] sm:$0xff]
        %v840 = vld [vmem:[#allocation2 + $0x8b0] sm:$0xff]
        %v841 = vld [vmem:[#allocation2 + $0x8b8] sm:$0xff]
        %v842 = vld [vmem:[#allocation2 + $0x8c0] sm:$0xff]
        %v843 = vld [vmem:[#allocation2 + $0x8c8] sm:$0xff]
        %v844 = vld [vmem:[#allocation2 + $0x8d0] sm:$0xff]
        %v845 = vld [vmem:[#allocation2 + $0x8d8] sm:$0xff]
        %v846 = vld [vmem:[#allocation2 + $0x8e0] sm:$0xff]
        %v847 = vld [vmem:[#allocation2 + $0x8e8] sm:$0xff]
        %v848 = vld [vmem:[#allocation2 + $0x8f0] sm:$0xff]
        %v849 = vld [vmem:[#allocation2 + $0x8f8] sm:$0xff]
        %v850 = vld [vmem:[#allocation5] sm:$0xf]
        %v852 = vperm.slane %v850, 0
        %v853 = vperm.slane %v850, 1
        %v854 = vperm.slane %v850, 2
        %v855 = vperm.slane %v850, 3
        %v870 = vunpack.c.l.b16 %v552
        %v871 = vunpack.c.h.b16 %v552
        %v872 = vunpack.c.l.b16 %v553
        %v873 = vunpack.c.h.b16 %v553
        %v874 = vunpack.c.l.b16 %v554
        %v875 = vunpack.c.h.b16 %v554
        %v876 = vunpack.c.l.b16 %v555
        %v877 = vunpack.c.h.b16 %v555
        %v878 = vunpack.c.l.b16 %v556
        %v879 = vunpack.c.l.b16 %v557
        %v880 = vunpack.c.h.b16 %v557
        %v881 = vunpack.c.l.b16 %v558
        %v882 = vunpack.c.h.b16 %v558
        %v883 = vunpack.c.l.b16 %v559
        %v884 = vunpack.c.h.b16 %v559
        %v885 = vunpack.c.l.b16 %v560
        %v886 = vunpack.c.h.b16 %v560
        %v887 = vunpack.c.l.b16 %v561
        %v888 = vpack.c.b16 %v879, %v870
        %v889 = vpack.c.b16 %v880, %v871
        %v890 = vpack.c.b16 %v881, %v872
        %v891 = vpack.c.b16 %v882, %v873
        %v892 = vpack.c.b16 %v883, %v874
        %v893 = vpack.c.b16 %v884, %v875
        %v894 = vpack.c.b16 %v885, %v876
        %v895 = vpack.c.b16 %v886, %v877
        %v896 = vpack.c.b16 %v887, %v878
        %v1194 = vunpack.c.l.b16 %v562
        %v1195 = vunpack.c.h.b16 %v562
        %v1196 = vunpack.c.l.b16 %v563
        %v1197 = vunpack.c.h.b16 %v563
        %v1198 = vunpack.c.l.b16 %v564
        %v1199 = vunpack.c.h.b16 %v564
        %v1200 = vunpack.c.l.b16 %v565
        %v1201 = vunpack.c.h.b16 %v565
        %v1202 = vunpack.c.l.b16 %v566
        %v1203 = vunpack.c.h.b16 %v566
        %v1204 = vunpack.c.l.b16 %v567
        %v1205 = vunpack.c.h.b16 %v567
        %v1206 = vunpack.c.l.b16 %v568
        %v1207 = vunpack.c.h.b16 %v568
        %v1208 = vunpack.c.l.b16 %v569
        %v1209 = vunpack.c.h.b16 %v569
        %v1210 = vunpack.c.l.b16 %v570
        %v1211 = vunpack.c.h.b16 %v570
        %v1212 = vunpack.c.l.b16 %v571
        %v1213 = vunpack.c.h.b16 %v571
        %v1214 = vunpack.c.l.b16 %v572
        %v1215 = vunpack.c.h.b16 %v572
        %v1216 = vunpack.c.l.b16 %v573
        %v1217 = vunpack.c.h.b16 %v573
        %v1218 = vunpack.c.l.b16 %v574
        %v1219 = vunpack.c.h.b16 %v574
        %v1220 = vunpack.c.l.b16 %v575
        %v1221 = vunpack.c.h.b16 %v575
        %v1222 = vunpack.c.l.b16 %v576
        %v1223 = vunpack.c.h.b16 %v576
        %v1224 = vunpack.c.l.b16 %v577
        %v1225 = vunpack.c.h.b16 %v577
        %v1226 = vunpack.c.l.b16 %v578
        %v1227 = vunpack.c.h.b16 %v578
        %v1228 = vunpack.c.l.b16 %v579
        %v1229 = vunpack.c.h.b16 %v579
        %v1230 = vunpack.c.l.b16 %v580
        %v1231 = vunpack.c.h.b16 %v580
        %v1232 = vunpack.c.l.b16 %v581
        %v1233 = vunpack.c.h.b16 %v581
        %v1234 = vunpack.c.l.b16 %v582
        %v1235 = vunpack.c.h.b16 %v582
        %v1236 = vunpack.c.l.b16 %v583
        %v1237 = vunpack.c.h.b16 %v583
        %v1238 = vunpack.c.l.b16 %v584
        %v1239 = vunpack.c.h.b16 %v584
        %v1240 = vunpack.c.l.b16 %v585
        %v1241 = vunpack.c.h.b16 %v585
        %v1242 = vunpack.c.l.b16 %v586
        %v1243 = vunpack.c.h.b16 %v586
        %v1244 = vunpack.c.l.b16 %v587
        %v1245 = vunpack.c.h.b16 %v587
        %v1246 = vunpack.c.l.b16 %v588
        %v1247 = vunpack.c.h.b16 %v588
        %v1248 = vunpack.c.l.b16 %v589
        %v1249 = vunpack.c.h.b16 %v589
        %v1250 = vunpack.c.l.b16 %v590
        %v1251 = vunpack.c.h.b16 %v590
        %v1252 = vunpack.c.l.b16 %v591
        %v1253 = vunpack.c.h.b16 %v591
        %v1254 = vunpack.c.l.b16 %v592
        %v1255 = vunpack.c.h.b16 %v592
        %v1256 = vunpack.c.l.b16 %v593
        %v1257 = vunpack.c.h.b16 %v593
        %v1258 = vunpack.c.l.b16 %v594
        %v1259 = vunpack.c.h.b16 %v594
        %v1260 = vunpack.c.l.b16 %v595
        %v1261 = vunpack.c.h.b16 %v595
        %v1262 = vunpack.c.l.b16 %v596
        %v1263 = vunpack.c.h.b16 %v596
        %v1264 = vunpack.c.l.b16 %v597
        %v1265 = vunpack.c.h.b16 %v597
        %v1266 = vunpack.c.l.b16 %v598
        %v1267 = vunpack.c.h.b16 %v598
        %v1268 = vunpack.c.l.b16 %v599
        %v1269 = vunpack.c.h.b16 %v599
        %v1270 = vunpack.c.l.b16 %v600
        %v1271 = vunpack.c.h.b16 %v600
        %v1272 = vunpack.c.l.b16 %v601
        %v1273 = vunpack.c.h.b16 %v601
        %v1274 = vunpack.c.l.b16 %v602
        %v1275 = vunpack.c.h.b16 %v602
        %v1276 = vunpack.c.l.b16 %v603
        %v1277 = vunpack.c.h.b16 %v603
        %v1278 = vunpack.c.l.b16 %v604
        %v1279 = vunpack.c.h.b16 %v604
        %v1280 = vunpack.c.l.b16 %v605
        %v1281 = vunpack.c.h.b16 %v605
        %v1282 = vunpack.c.l.b16 %v606
        %v1283 = vunpack.c.h.b16 %v606
        %v1284 = vunpack.c.l.b16 %v607
        %v1285 = vunpack.c.h.b16 %v607
        %v1286 = vunpack.c.l.b16 %v608
        %v1287 = vunpack.c.h.b16 %v608
        %v1288 = vunpack.c.l.b16 %v609
        %v1289 = vunpack.c.h.b16 %v609
        %v1290 = vunpack.c.l.b16 %v610
        %v1291 = vunpack.c.h.b16 %v610
        %v1292 = vunpack.c.l.b16 %v611
        %v1293 = vunpack.c.h.b16 %v611
        %v1294 = vunpack.c.l.b16 %v612
        %v1295 = vunpack.c.h.b16 %v612
        %v1296 = vunpack.c.l.b16 %v613
        %v1297 = vunpack.c.h.b16 %v613
        %v1298 = vunpack.c.l.b16 %v614
        %v1299 = vunpack.c.h.b16 %v614
        %v1300 = vunpack.c.l.b16 %v615
        %v1301 = vunpack.c.h.b16 %v615
        %v1302 = vunpack.c.l.b16 %v616
        %v1303 = vunpack.c.h.b16 %v616
        %v1304 = vunpack.c.l.b16 %v617
        %v1305 = vunpack.c.h.b16 %v617
        %v1306 = vunpack.c.l.b16 %v618
        %v1307 = vunpack.c.h.b16 %v618
        %v1308 = vunpack.c.l.b16 %v619
        %v1309 = vunpack.c.h.b16 %v619
        %v1310 = vunpack.c.l.b16 %v620
        %v1311 = vunpack.c.h.b16 %v620
        %v1312 = vunpack.c.l.b16 %v621
        %v1313 = vunpack.c.h.b16 %v621
        %v1314 = vunpack.c.l.b16 %v622
        %v1315 = vunpack.c.h.b16 %v622
        %v1316 = vunpack.c.l.b16 %v623
        %v1317 = vunpack.c.h.b16 %v623
        %v1318 = vunpack.c.l.b16 %v624
        %v1319 = vunpack.c.h.b16 %v624
        %v1320 = vunpack.c.l.b16 %v625
        %v1321 = vunpack.c.h.b16 %v625
        %v1322 = vunpack.c.l.b16 %v626
        %v1323 = vunpack.c.h.b16 %v626
        %v1324 = vunpack.c.l.b16 %v627
        %v1325 = vunpack.c.h.b16 %v627
        %v1326 = vunpack.c.l.b16 %v628
        %v1327 = vunpack.c.h.b16 %v628
        %v1328 = vunpack.c.l.b16 %v629
        %v1329 = vunpack.c.h.b16 %v629
        %v1330 = vunpack.c.l.b16 %v630
        %v1331 = vunpack.c.h.b16 %v630
        %v1332 = vunpack.c.l.b16 %v631
        %v1333 = vunpack.c.h.b16 %v631
        %v1334 = vunpack.c.l.b16 %v632
        %v1335 = vunpack.c.h.b16 %v632
        %v1336 = vunpack.c.l.b16 %v633
        %v1337 = vunpack.c.h.b16 %v633
        %v1338 = vunpack.c.l.b16 %v634
        %v1339 = vunpack.c.h.b16 %v634
        %v1340 = vunpack.c.l.b16 %v635
        %v1341 = vunpack.c.h.b16 %v635
        %v1342 = vunpack.c.l.b16 %v636
        %v1343 = vunpack.c.h.b16 %v636
        %v1344 = vunpack.c.l.b16 %v637
        %v1345 = vunpack.c.h.b16 %v637
        %v1346 = vunpack.c.l.b16 %v638
        %v1347 = vunpack.c.h.b16 %v638
        %v1348 = vunpack.c.l.b16 %v639
        %v1349 = vunpack.c.h.b16 %v639
        %v1350 = vunpack.c.l.b16 %v640
        %v1351 = vunpack.c.h.b16 %v640
        %v1352 = vunpack.c.l.b16 %v641
        %v1353 = vunpack.c.h.b16 %v641
        %v1354 = vunpack.c.l.b16 %v642
        %v1355 = vunpack.c.h.b16 %v642
        %v1356 = vunpack.c.l.b16 %v643
        %v1357 = vunpack.c.h.b16 %v643
        %v1358 = vunpack.c.l.b16 %v644
        %v1359 = vunpack.c.h.b16 %v644
        %v1360 = vunpack.c.l.b16 %v645
        %v1361 = vunpack.c.h.b16 %v645
        %v1362 = vunpack.c.l.b16 %v646
        %v1363 = vunpack.c.h.b16 %v646
        %v1364 = vunpack.c.l.b16 %v647
        %v1365 = vunpack.c.h.b16 %v647
        %v1366 = vunpack.c.l.b16 %v648
        %v1367 = vunpack.c.h.b16 %v648
        %v1368 = vunpack.c.l.b16 %v649
        %v1369 = vunpack.c.h.b16 %v649
        %v1370 = vunpack.c.l.b16 %v650
        %v1371 = vunpack.c.h.b16 %v650
        %v1372 = vunpack.c.l.b16 %v651
        %v1373 = vunpack.c.h.b16 %v651
        %v1374 = vunpack.c.l.b16 %v652
        %v1375 = vunpack.c.h.b16 %v652
        %v1376 = vunpack.c.l.b16 %v653
        %v1377 = vunpack.c.h.b16 %v653
        %v1378 = vunpack.c.l.b16 %v654
        %v1379 = vunpack.c.h.b16 %v654
        %v1380 = vunpack.c.l.b16 %v655
        %v1381 = vunpack.c.h.b16 %v655
        %v1382 = vunpack.c.l.b16 %v656
        %v1383 = vunpack.c.h.b16 %v656
        %v1384 = vunpack.c.l.b16 %v657
        %v1385 = vunpack.c.h.b16 %v657
        %v1386 = vunpack.c.l.b16 %v658
        %v1387 = vunpack.c.h.b16 %v658
        %v1388 = vunpack.c.l.b16 %v659
        %v1389 = vunpack.c.h.b16 %v659
        %v1390 = vunpack.c.l.b16 %v660
        %v1391 = vunpack.c.h.b16 %v660
        %v1392 = vunpack.c.l.b16 %v661
        %v1393 = vunpack.c.h.b16 %v661
        %v1394 = vunpack.c.l.b16 %v662
        %v1395 = vunpack.c.h.b16 %v662
        %v1396 = vunpack.c.l.b16 %v663
        %v1397 = vunpack.c.h.b16 %v663
        %v1398 = vunpack.c.l.b16 %v664
        %v1399 = vunpack.c.h.b16 %v664
        %v1400 = vunpack.c.l.b16 %v665
        %v1401 = vunpack.c.h.b16 %v665
        %v1402 = vunpack.c.l.b16 %v666
        %v1403 = vunpack.c.h.b16 %v666
        %v1404 = vunpack.c.l.b16 %v667
        %v1405 = vunpack.c.h.b16 %v667
        %v1406 = vunpack.c.l.b16 %v668
        %v1407 = vunpack.c.h.b16 %v668
        %v1408 = vunpack.c.l.b16 %v669
        %v1409 = vunpack.c.h.b16 %v669
        %v1410 = vunpack.c.l.b16 %v670
        %v1411 = vunpack.c.h.b16 %v670
        %v1412 = vunpack.c.l.b16 %v671
        %v1413 = vunpack.c.h.b16 %v671
        %v1414 = vunpack.c.l.b16 %v672
        %v1415 = vunpack.c.h.b16 %v672
        %v1416 = vunpack.c.l.b16 %v673
        %v1417 = vunpack.c.h.b16 %v673
        %v1418 = vunpack.c.l.b16 %v674
        %v1419 = vunpack.c.h.b16 %v674
        %v1420 = vunpack.c.l.b16 %v675
        %v1421 = vunpack.c.h.b16 %v675
        %v1422 = vunpack.c.l.b16 %v676
        %v1423 = vunpack.c.h.b16 %v676
        %v1424 = vunpack.c.l.b16 %v677
        %v1425 = vunpack.c.h.b16 %v677
        %v1426 = vunpack.c.l.b16 %v678
        %v1427 = vunpack.c.h.b16 %v678
        %v1428 = vunpack.c.l.b16 %v679
        %v1429 = vunpack.c.h.b16 %v679
        %v1430 = vunpack.c.l.b16 %v680
        %v1431 = vunpack.c.h.b16 %v680
        %v1432 = vunpack.c.l.b16 %v681
        %v1433 = vunpack.c.h.b16 %v681
        %v1434 = vunpack.c.l.b16 %v682
        %v1435 = vunpack.c.h.b16 %v682
        %v1436 = vunpack.c.l.b16 %v683
        %v1437 = vunpack.c.h.b16 %v683
        %v1438 = vunpack.c.l.b16 %v684
        %v1439 = vunpack.c.h.b16 %v684
        %v1440 = vunpack.c.l.b16 %v685
        %v1441 = vunpack.c.h.b16 %v685
        %v1442 = vunpack.c.l.b16 %v686
        %v1443 = vunpack.c.h.b16 %v686
        %v1444 = vunpack.c.l.b16 %v687
        %v1445 = vunpack.c.h.b16 %v687
        %v1446 = vunpack.c.l.b16 %v688
        %v1447 = vunpack.c.h.b16 %v688
        %v1448 = vunpack.c.l.b16 %v689
        %v1449 = vunpack.c.h.b16 %v689
        %v1450 = vunpack.c.l.b16 %v690
        %v1451 = vunpack.c.h.b16 %v690
        %v1452 = vunpack.c.l.b16 %v691
        %v1453 = vunpack.c.h.b16 %v691
        %v1454 = vunpack.c.l.b16 %v692
        %v1455 = vunpack.c.h.b16 %v692
        %v1456 = vunpack.c.l.b16 %v693
        %v1457 = vunpack.c.h.b16 %v693
        %v1458 = vunpack.c.l.b16 %v694
        %v1459 = vunpack.c.h.b16 %v694
        %v1460 = vunpack.c.l.b16 %v695
        %v1461 = vunpack.c.h.b16 %v695
        %v1462 = vunpack.c.l.b16 %v696
        %v1463 = vunpack.c.h.b16 %v696
        %v1464 = vunpack.c.l.b16 %v697
        %v1465 = vunpack.c.h.b16 %v697
        %v1466 = vunpack.c.l.b16 %v698
        %v1467 = vunpack.c.h.b16 %v698
        %v1468 = vunpack.c.l.b16 %v699
        %v1469 = vunpack.c.h.b16 %v699
        %v1470 = vunpack.c.l.b16 %v700
        %v1471 = vunpack.c.h.b16 %v700
        %v1472 = vunpack.c.l.b16 %v701
        %v1473 = vunpack.c.h.b16 %v701
        %v1474 = vunpack.c.l.b16 %v702
        %v1475 = vunpack.c.h.b16 %v702
        %v1476 = vunpack.c.l.b16 %v703
        %v1477 = vunpack.c.h.b16 %v703
        %v1478 = vunpack.c.l.b16 %v704
        %v1479 = vunpack.c.h.b16 %v704
        %v1480 = vunpack.c.l.b16 %v705
        %v1481 = vunpack.c.h.b16 %v705
        %v1482 = vunpack.c.l.b16 %v706
        %v1483 = vunpack.c.h.b16 %v706
        %v1484 = vunpack.c.l.b16 %v707
        %v1485 = vunpack.c.h.b16 %v707
        %v1486 = vunpack.c.l.b16 %v708
        %v1487 = vunpack.c.h.b16 %v708
        %v1488 = vunpack.c.l.b16 %v709
        %v1489 = vunpack.c.h.b16 %v709
        %v1490 = vunpack.c.l.b16 %v710
        %v1491 = vunpack.c.h.b16 %v710
        %v1492 = vunpack.c.l.b16 %v711
        %v1493 = vunpack.c.h.b16 %v711
        %v1494 = vunpack.c.l.b16 %v712
        %v1495 = vunpack.c.h.b16 %v712
        %v1496 = vunpack.c.l.b16 %v713
        %v1497 = vunpack.c.h.b16 %v713
        %v1498 = vunpack.c.l.b16 %v714
        %v1499 = vunpack.c.h.b16 %v714
        %v1500 = vunpack.c.l.b16 %v715
        %v1501 = vunpack.c.h.b16 %v715
        %v1502 = vunpack.c.l.b16 %v716
        %v1503 = vunpack.c.h.b16 %v716
        %v1504 = vunpack.c.l.b16 %v717
        %v1505 = vunpack.c.h.b16 %v717
        %v1506 = vunpack.c.l.b16 %v718
        %v1507 = vunpack.c.h.b16 %v718
        %v1508 = vunpack.c.l.b16 %v719
        %v1509 = vunpack.c.h.b16 %v719
        %v1510 = vunpack.c.l.b16 %v720
        %v1511 = vunpack.c.h.b16 %v720
        %v1512 = vunpack.c.l.b16 %v721
        %v1513 = vunpack.c.h.b16 %v721
        %v1514 = vunpack.c.l.b16 %v722
        %v1515 = vunpack.c.h.b16 %v722
        %v1516 = vunpack.c.l.b16 %v723
        %v1517 = vunpack.c.h.b16 %v723
        %v1518 = vunpack.c.l.b16 %v724
        %v1519 = vunpack.c.h.b16 %v724
        %v1520 = vunpack.c.l.b16 %v725
        %v1521 = vunpack.c.h.b16 %v725
        %v1522 = vunpack.c.l.b16 %v726
        %v1523 = vunpack.c.h.b16 %v726
        %v1524 = vunpack.c.l.b16 %v727
        %v1525 = vunpack.c.h.b16 %v727
        %v1526 = vunpack.c.l.b16 %v728
        %v1527 = vunpack.c.h.b16 %v728
        %v1528 = vunpack.c.l.b16 %v729
        %v1529 = vunpack.c.h.b16 %v729
        %v1530 = vunpack.c.l.b16 %v730
        %v1531 = vunpack.c.h.b16 %v730
        %v1532 = vunpack.c.l.b16 %v731
        %v1533 = vunpack.c.h.b16 %v731
        %v1534 = vunpack.c.l.b16 %v732
        %v1535 = vunpack.c.h.b16 %v732
        %v1536 = vunpack.c.l.b16 %v733
        %v1537 = vunpack.c.h.b16 %v733
        %v1538 = vunpack.c.l.b16 %v734
        %v1539 = vunpack.c.h.b16 %v734
        %v1540 = vunpack.c.l.b16 %v735
        %v1541 = vunpack.c.h.b16 %v735
        %v1542 = vunpack.c.l.b16 %v736
        %v1543 = vunpack.c.h.b16 %v736
        %v1544 = vunpack.c.l.b16 %v737
        %v1545 = vunpack.c.h.b16 %v737
        %v1546 = vunpack.c.l.b16 %v738
        %v1547 = vunpack.c.h.b16 %v738
        %v1548 = vunpack.c.l.b16 %v739
        %v1549 = vunpack.c.h.b16 %v739
        %v1550 = vunpack.c.l.b16 %v740
        %v1551 = vunpack.c.h.b16 %v740
        %v1552 = vunpack.c.l.b16 %v741
        %v1553 = vunpack.c.h.b16 %v741
        %v1554 = vunpack.c.l.b16 %v742
        %v1555 = vunpack.c.h.b16 %v742
        %v1556 = vunpack.c.l.b16 %v743
        %v1557 = vunpack.c.h.b16 %v743
        %v1558 = vunpack.c.l.b16 %v744
        %v1559 = vunpack.c.h.b16 %v744
        %v1560 = vunpack.c.l.b16 %v745
        %v1561 = vunpack.c.h.b16 %v745
        %v1562 = vunpack.c.l.b16 %v746
        %v1563 = vunpack.c.h.b16 %v746
        %v1564 = vunpack.c.l.b16 %v747
        %v1565 = vunpack.c.h.b16 %v747
        %v1566 = vunpack.c.l.b16 %v748
        %v1567 = vunpack.c.h.b16 %v748
        %v1568 = vunpack.c.l.b16 %v749
        %v1569 = vunpack.c.h.b16 %v749
        %v1570 = vunpack.c.l.b16 %v750
        %v1571 = vunpack.c.h.b16 %v750
        %v1572 = vunpack.c.l.b16 %v751
        %v1573 = vunpack.c.h.b16 %v751
        %v1574 = vunpack.c.l.b16 %v752
        %v1575 = vunpack.c.h.b16 %v752
        %v1576 = vunpack.c.l.b16 %v753
        %v1577 = vunpack.c.h.b16 %v753
        %v1578 = vunpack.c.l.b16 %v754
        %v1579 = vunpack.c.h.b16 %v754
        %v1580 = vunpack.c.l.b16 %v755
        %v1581 = vunpack.c.h.b16 %v755
        %v1582 = vunpack.c.l.b16 %v756
        %v1583 = vunpack.c.h.b16 %v756
        %v1584 = vunpack.c.l.b16 %v757
        %v1585 = vunpack.c.h.b16 %v757
        %v1586 = vunpack.c.l.b16 %v758
        %v1587 = vunpack.c.h.b16 %v758
        %v1588 = vunpack.c.l.b16 %v759
        %v1589 = vunpack.c.h.b16 %v759
        %v1590 = vunpack.c.l.b16 %v760
        %v1591 = vunpack.c.h.b16 %v760
        %v1592 = vunpack.c.l.b16 %v761
        %v1593 = vunpack.c.h.b16 %v761
        %v1594 = vunpack.c.l.b16 %v762
        %v1595 = vunpack.c.h.b16 %v762
        %v1596 = vunpack.c.l.b16 %v763
        %v1597 = vunpack.c.h.b16 %v763
        %v1598 = vunpack.c.l.b16 %v764
        %v1599 = vunpack.c.h.b16 %v764
        %v1600 = vunpack.c.l.b16 %v765
        %v1601 = vunpack.c.h.b16 %v765
        %v1602 = vunpack.c.l.b16 %v766
        %v1603 = vunpack.c.h.b16 %v766
        %v1604 = vunpack.c.l.b16 %v767
        %v1605 = vunpack.c.h.b16 %v767
        %v1606 = vunpack.c.l.b16 %v768
        %v1607 = vunpack.c.h.b16 %v768
        %v1608 = vunpack.c.l.b16 %v769
        %v1609 = vunpack.c.h.b16 %v769
        %v1610 = vunpack.c.l.b16 %v770
        %v1611 = vunpack.c.h.b16 %v770
        %v1612 = vunpack.c.l.b16 %v771
        %v1613 = vunpack.c.h.b16 %v771
        %v1614 = vunpack.c.l.b16 %v772
        %v1615 = vunpack.c.h.b16 %v772
        %v1616 = vunpack.c.l.b16 %v773
        %v1617 = vunpack.c.h.b16 %v773
        %v1618 = vunpack.c.l.b16 %v774
        %v1619 = vunpack.c.h.b16 %v774
        %v1620 = vunpack.c.l.b16 %v775
        %v1621 = vunpack.c.h.b16 %v775
        %v1622 = vunpack.c.l.b16 %v776
        %v1623 = vunpack.c.h.b16 %v776
        %v1624 = vunpack.c.l.b16 %v777
        %v1625 = vunpack.c.h.b16 %v777
        %v1626 = vunpack.c.l.b16 %v778
        %v1627 = vunpack.c.h.b16 %v778
        %v1628 = vunpack.c.l.b16 %v779
        %v1629 = vunpack.c.h.b16 %v779
        %v1630 = vunpack.c.l.b16 %v780
        %v1631 = vunpack.c.h.b16 %v780
        %v1632 = vunpack.c.l.b16 %v781
        %v1633 = vunpack.c.h.b16 %v781
        %v1634 = vunpack.c.l.b16 %v782
        %v1635 = vunpack.c.h.b16 %v782
        %v1636 = vunpack.c.l.b16 %v783
        %v1637 = vunpack.c.h.b16 %v783
        %v1638 = vunpack.c.l.b16 %v784
        %v1639 = vunpack.c.h.b16 %v784
        %v1640 = vunpack.c.l.b16 %v785
        %v1641 = vunpack.c.h.b16 %v785
        %v1642 = vunpack.c.l.b16 %v786
        %v1643 = vunpack.c.h.b16 %v786
        %v1644 = vunpack.c.l.b16 %v787
        %v1645 = vunpack.c.h.b16 %v787
        %v1646 = vunpack.c.l.b16 %v788
        %v1647 = vunpack.c.h.b16 %v788
        %v1648 = vunpack.c.l.b16 %v789
        %v1649 = vunpack.c.h.b16 %v789
        %v1650 = vunpack.c.l.b16 %v790
        %v1651 = vunpack.c.h.b16 %v790
        %v1652 = vunpack.c.l.b16 %v791
        %v1653 = vunpack.c.h.b16 %v791
        %v1654 = vunpack.c.l.b16 %v792
        %v1655 = vunpack.c.h.b16 %v792
        %v1656 = vunpack.c.l.b16 %v793
        %v1657 = vunpack.c.h.b16 %v793
        %v1658 = vunpack.c.l.b16 %v794
        %v1659 = vunpack.c.h.b16 %v794
        %v1660 = vunpack.c.l.b16 %v795
        %v1661 = vunpack.c.h.b16 %v795
        %v1662 = vunpack.c.l.b16 %v796
        %v1663 = vunpack.c.h.b16 %v796
        %v1664 = vunpack.c.l.b16 %v797
        %v1665 = vunpack.c.h.b16 %v797
        %v1666 = vunpack.c.l.b16 %v798
        %v1667 = vunpack.c.h.b16 %v798
        %v1668 = vunpack.c.l.b16 %v799
        %v1669 = vunpack.c.h.b16 %v799
        %v1670 = vunpack.c.l.b16 %v800
        %v1671 = vunpack.c.h.b16 %v800
        %v1672 = vunpack.c.l.b16 %v801
        %v1673 = vunpack.c.h.b16 %v801
        %v1674 = vunpack.c.l.b16 %v802
        %v1675 = vunpack.c.h.b16 %v802
        %v1676 = vunpack.c.l.b16 %v803
        %v1677 = vunpack.c.h.b16 %v803
        %v1678 = vunpack.c.l.b16 %v804
        %v1679 = vunpack.c.h.b16 %v804
        %v1680 = vunpack.c.l.b16 %v805
        %v1681 = vunpack.c.h.b16 %v805
        %v1682 = vunpack.c.l.b16 %v806
        %v1683 = vunpack.c.h.b16 %v806
        %v1684 = vunpack.c.l.b16 %v807
        %v1685 = vunpack.c.h.b16 %v807
        %v1686 = vunpack.c.l.b16 %v808
        %v1687 = vunpack.c.h.b16 %v808
        %v1688 = vunpack.c.l.b16 %v809
        %v1689 = vunpack.c.h.b16 %v809
        %v1690 = vunpack.c.l.b16 %v810
        %v1691 = vunpack.c.h.b16 %v810
        %v1692 = vunpack.c.l.b16 %v811
        %v1693 = vunpack.c.h.b16 %v811
        %v1694 = vunpack.c.l.b16 %v812
        %v1695 = vunpack.c.h.b16 %v812
        %v1696 = vunpack.c.l.b16 %v813
        %v1697 = vunpack.c.h.b16 %v813
        %v1698 = vunpack.c.l.b16 %v814
        %v1699 = vunpack.c.h.b16 %v814
        %v1700 = vunpack.c.l.b16 %v815
        %v1701 = vunpack.c.h.b16 %v815
        %v1702 = vunpack.c.l.b16 %v816
        %v1703 = vunpack.c.h.b16 %v816
        %v1704 = vunpack.c.l.b16 %v817
        %v1705 = vunpack.c.h.b16 %v817
        %v1706 = vunpack.c.l.b16 %v818
        %v1707 = vunpack.c.h.b16 %v818
        %v1708 = vunpack.c.l.b16 %v819
        %v1709 = vunpack.c.h.b16 %v819
        %v1710 = vunpack.c.l.b16 %v820
        %v1711 = vunpack.c.h.b16 %v820
        %v1712 = vunpack.c.l.b16 %v821
        %v1713 = vunpack.c.h.b16 %v821
        %v1714 = vunpack.c.l.b16 %v822
        %v1715 = vunpack.c.h.b16 %v822
        %v1716 = vunpack.c.l.b16 %v823
        %v1717 = vunpack.c.h.b16 %v823
        %v1718 = vunpack.c.l.b16 %v824
        %v1719 = vunpack.c.h.b16 %v824
        %v1720 = vunpack.c.l.b16 %v825
        %v1721 = vunpack.c.h.b16 %v825
        %v1722 = vunpack.c.l.b16 %v826
        %v1723 = vunpack.c.h.b16 %v826
        %v1724 = vunpack.c.l.b16 %v827
        %v1725 = vunpack.c.h.b16 %v827
        %v1726 = vunpack.c.l.b16 %v828
        %v1727 = vunpack.c.h.b16 %v828
        %v1728 = vunpack.c.l.b16 %v829
        %v1729 = vunpack.c.h.b16 %v829
        %v1730 = vunpack.c.l.b16 %v830
        %v1731 = vunpack.c.h.b16 %v830
        %v1732 = vunpack.c.l.b16 %v831
        %v1733 = vunpack.c.h.b16 %v831
        %v1734 = vunpack.c.l.b16 %v832
        %v1735 = vunpack.c.h.b16 %v832
        %v1736 = vunpack.c.l.b16 %v833
        %v1737 = vunpack.c.h.b16 %v833
        %v1738 = vunpack.c.l.b16 %v834
        %v1739 = vunpack.c.h.b16 %v834
        %v1740 = vunpack.c.l.b16 %v835
        %v1741 = vunpack.c.h.b16 %v835
        %v1742 = vunpack.c.l.b16 %v836
        %v1743 = vunpack.c.h.b16 %v836
        %v1744 = vunpack.c.l.b16 %v837
        %v1745 = vunpack.c.h.b16 %v837
        %v1746 = vunpack.c.l.b16 %v838
        %v1747 = vunpack.c.h.b16 %v838
        %v1748 = vunpack.c.l.b16 %v839
        %v1749 = vunpack.c.h.b16 %v839
        %v1750 = vunpack.c.l.b16 %v840
        %v1751 = vunpack.c.h.b16 %v840
        %v1752 = vunpack.c.l.b16 %v841
        %v1753 = vunpack.c.h.b16 %v841
        %v1754 = vunpack.c.l.b16 %v842
        %v1755 = vunpack.c.h.b16 %v842
        %v1756 = vunpack.c.l.b16 %v843
        %v1757 = vunpack.c.h.b16 %v843
        %v1758 = vunpack.c.l.b16 %v844
        %v1759 = vunpack.c.h.b16 %v844
        %v1760 = vunpack.c.l.b16 %v845
        %v1761 = vunpack.c.h.b16 %v845
        %v1762 = vunpack.c.l.b16 %v846
        %v1763 = vunpack.c.h.b16 %v846
        %v1764 = vunpack.c.l.b16 %v847
        %v1765 = vunpack.c.h.b16 %v847
        %v1766 = vunpack.c.l.b16 %v848
        %v1767 = vunpack.c.h.b16 %v848
        %v1768 = vunpack.c.l.b16 %v849
        %v1769 = vunpack.c.h.b16 %v849
        %v1770 = vpack.c.b16 %v1198, %v1194
        %v1771 = vpack.c.b16 %v1199, %v1195
        %v1772 = vpack.c.b16 %v1200, %v1196
        %v1773 = vpack.c.b16 %v1201, %v1197
        %v1774 = vpack.c.b16 %v1206, %v1202
        %v1775 = vpack.c.b16 %v1207, %v1203
        %v1776 = vpack.c.b16 %v1208, %v1204
        %v1777 = vpack.c.b16 %v1209, %v1205
        %v1778 = vpack.c.b16 %v1214, %v1210
        %v1779 = vpack.c.b16 %v1215, %v1211
        %v1780 = vpack.c.b16 %v1216, %v1212
        %v1781 = vpack.c.b16 %v1217, %v1213
        %v1782 = vpack.c.b16 %v1222, %v1218
        %v1783 = vpack.c.b16 %v1223, %v1219
        %v1784 = vpack.c.b16 %v1224, %v1220
        %v1785 = vpack.c.b16 %v1225, %v1221
        %v1786 = vpack.c.b16 %v1230, %v1226
        %v1787 = vpack.c.b16 %v1231, %v1227
        %v1788 = vpack.c.b16 %v1232, %v1228
        %v1789 = vpack.c.b16 %v1233, %v1229
        %v1790 = vpack.c.b16 %v1238, %v1234
        %v1791 = vpack.c.b16 %v1239, %v1235
        %v1792 = vpack.c.b16 %v1240, %v1236
        %v1793 = vpack.c.b16 %v1241, %v1237
        %v1794 = vpack.c.b16 %v1246, %v1242
        %v1795 = vpack.c.b16 %v1247, %v1243
        %v1796 = vpack.c.b16 %v1248, %v1244
        %v1797 = vpack.c.b16 %v1249, %v1245
        %v1798 = vpack.c.b16 %v1254, %v1250
        %v1799 = vpack.c.b16 %v1255, %v1251
        %v1800 = vpack.c.b16 %v1256, %v1252
        %v1801 = vpack.c.b16 %v1257, %v1253
        %v1802 = vpack.c.b16 %v1262, %v1258
        %v1803 = vpack.c.b16 %v1263, %v1259
        %v1804 = vpack.c.b16 %v1264, %v1260
        %v1805 = vpack.c.b16 %v1265, %v1261
        %v1806 = vpack.c.b16 %v1270, %v1266
        %v1807 = vpack.c.b16 %v1271, %v1267
        %v1808 = vpack.c.b16 %v1272, %v1268
        %v1809 = vpack.c.b16 %v1273, %v1269
        %v1810 = vpack.c.b16 %v1278, %v1274
        %v1811 = vpack.c.b16 %v1279, %v1275
        %v1812 = vpack.c.b16 %v1280, %v1276
        %v1813 = vpack.c.b16 %v1281, %v1277
        %v1814 = vpack.c.b16 %v1286, %v1282
        %v1815 = vpack.c.b16 %v1287, %v1283
        %v1816 = vpack.c.b16 %v1288, %v1284
        %v1817 = vpack.c.b16 %v1289, %v1285
        %v1818 = vpack.c.b16 %v1294, %v1290
        %v1819 = vpack.c.b16 %v1295, %v1291
        %v1820 = vpack.c.b16 %v1296, %v1292
        %v1821 = vpack.c.b16 %v1297, %v1293
        %v1822 = vpack.c.b16 %v1302, %v1298
        %v1823 = vpack.c.b16 %v1303, %v1299
        %v1824 = vpack.c.b16 %v1304, %v1300
        %v1825 = vpack.c.b16 %v1305, %v1301
        %v1826 = vpack.c.b16 %v1310, %v1306
        %v1827 = vpack.c.b16 %v1311, %v1307
        %v1828 = vpack.c.b16 %v1312, %v1308
        %v1829 = vpack.c.b16 %v1313, %v1309
        %v1830 = vpack.c.b16 %v1318, %v1314
        %v1831 = vpack.c.b16 %v1319, %v1315
        %v1832 = vpack.c.b16 %v1320, %v1316
        %v1833 = vpack.c.b16 %v1321, %v1317
        %v1834 = vpack.c.b16 %v1326, %v1322
        %v1835 = vpack.c.b16 %v1327, %v1323
        %v1836 = vpack.c.b16 %v1328, %v1324
        %v1837 = vpack.c.b16 %v1329, %v1325
        %v1838 = vpack.c.b16 %v1334, %v1330
        %v1839 = vpack.c.b16 %v1335, %v1331
        %v1840 = vpack.c.b16 %v1336, %v1332
        %v1841 = vpack.c.b16 %v1337, %v1333
        %v1842 = vpack.c.b16 %v1342, %v1338
        %v1843 = vpack.c.b16 %v1343, %v1339
        %v1844 = vpack.c.b16 %v1344, %v1340
        %v1845 = vpack.c.b16 %v1345, %v1341
        %v1846 = vpack.c.b16 %v1350, %v1346
        %v1847 = vpack.c.b16 %v1351, %v1347
        %v1848 = vpack.c.b16 %v1352, %v1348
        %v1849 = vpack.c.b16 %v1353, %v1349
        %v1850 = vpack.c.b16 %v1358, %v1354
        %v1851 = vpack.c.b16 %v1359, %v1355
        %v1852 = vpack.c.b16 %v1360, %v1356
        %v1853 = vpack.c.b16 %v1361, %v1357
        %v1854 = vpack.c.b16 %v1366, %v1362
        %v1855 = vpack.c.b16 %v1367, %v1363
        %v1856 = vpack.c.b16 %v1368, %v1364
        %v1857 = vpack.c.b16 %v1369, %v1365
        %v1858 = vpack.c.b16 %v1374, %v1370
        %v1859 = vpack.c.b16 %v1375, %v1371
        %v1860 = vpack.c.b16 %v1376, %v1372
        %v1861 = vpack.c.b16 %v1377, %v1373
        %v1862 = vpack.c.b16 %v1382, %v1378
        %v1863 = vpack.c.b16 %v1383, %v1379
        %v1864 = vpack.c.b16 %v1384, %v1380
        %v1865 = vpack.c.b16 %v1385, %v1381
        %v1866 = vpack.c.b16 %v1390, %v1386
        %v1867 = vpack.c.b16 %v1391, %v1387
        %v1868 = vpack.c.b16 %v1392, %v1388
        %v1869 = vpack.c.b16 %v1393, %v1389
        %v1870 = vpack.c.b16 %v1398, %v1394
        %v1871 = vpack.c.b16 %v1399, %v1395
        %v1872 = vpack.c.b16 %v1400, %v1396
        %v1873 = vpack.c.b16 %v1401, %v1397
        %v1874 = vpack.c.b16 %v1406, %v1402
        %v1875 = vpack.c.b16 %v1407, %v1403
        %v1876 = vpack.c.b16 %v1408, %v1404
        %v1877 = vpack.c.b16 %v1409, %v1405
        %v1878 = vpack.c.b16 %v1414, %v1410
        %v1879 = vpack.c.b16 %v1415, %v1411
        %v1880 = vpack.c.b16 %v1416, %v1412
        %v1881 = vpack.c.b16 %v1417, %v1413
        %v1882 = vpack.c.b16 %v1422, %v1418
        %v1883 = vpack.c.b16 %v1423, %v1419
        %v1884 = vpack.c.b16 %v1424, %v1420
        %v1885 = vpack.c.b16 %v1425, %v1421
        %v1886 = vpack.c.b16 %v1430, %v1426
        %v1887 = vpack.c.b16 %v1431, %v1427
        %v1888 = vpack.c.b16 %v1432, %v1428
        %v1889 = vpack.c.b16 %v1433, %v1429
        %v1890 = vpack.c.b16 %v1438, %v1434
        %v1891 = vpack.c.b16 %v1439, %v1435
        %v1892 = vpack.c.b16 %v1440, %v1436
        %v1893 = vpack.c.b16 %v1441, %v1437
        %v1894 = vpack.c.b16 %v1446, %v1442
        %v1895 = vpack.c.b16 %v1447, %v1443
        %v1896 = vpack.c.b16 %v1448, %v1444
        %v1897 = vpack.c.b16 %v1449, %v1445
        %v1898 = vpack.c.b16 %v1454, %v1450
        %v1899 = vpack.c.b16 %v1455, %v1451
        %v1900 = vpack.c.b16 %v1456, %v1452
        %v1901 = vpack.c.b16 %v1457, %v1453
        %v1902 = vpack.c.b16 %v1462, %v1458
        %v1903 = vpack.c.b16 %v1463, %v1459
        %v1904 = vpack.c.b16 %v1464, %v1460
        %v1905 = vpack.c.b16 %v1465, %v1461
        %v1906 = vpack.c.b16 %v1470, %v1466
        %v1907 = vpack.c.b16 %v1471, %v1467
        %v1908 = vpack.c.b16 %v1472, %v1468
        %v1909 = vpack.c.b16 %v1473, %v1469
        %v1910 = vpack.c.b16 %v1478, %v1474
        %v1911 = vpack.c.b16 %v1479, %v1475
        %v1912 = vpack.c.b16 %v1480, %v1476
        %v1913 = vpack.c.b16 %v1481, %v1477
        %v1914 = vpack.c.b16 %v1486, %v1482
        %v1915 = vpack.c.b16 %v1487, %v1483
        %v1916 = vpack.c.b16 %v1488, %v1484
        %v1917 = vpack.c.b16 %v1489, %v1485
        %v1918 = vpack.c.b16 %v1494, %v1490
        %v1919 = vpack.c.b16 %v1495, %v1491
        %v1920 = vpack.c.b16 %v1496, %v1492
        %v1921 = vpack.c.b16 %v1497, %v1493
        %v1922 = vpack.c.b16 %v1502, %v1498
        %v1923 = vpack.c.b16 %v1503, %v1499
        %v1924 = vpack.c.b16 %v1504, %v1500
        %v1925 = vpack.c.b16 %v1505, %v1501
        %v1926 = vpack.c.b16 %v1510, %v1506
        %v1927 = vpack.c.b16 %v1511, %v1507
        %v1928 = vpack.c.b16 %v1512, %v1508
        %v1929 = vpack.c.b16 %v1513, %v1509
        %v1930 = vpack.c.b16 %v1518, %v1514
        %v1931 = vpack.c.b16 %v1519, %v1515
        %v1932 = vpack.c.b16 %v1520, %v1516
        %v1933 = vpack.c.b16 %v1521, %v1517
        %v1934 = vpack.c.b16 %v1526, %v1522
        %v1935 = vpack.c.b16 %v1527, %v1523
        %v1936 = vpack.c.b16 %v1528, %v1524
        %v1937 = vpack.c.b16 %v1529, %v1525
        %v1938 = vpack.c.b16 %v1534, %v1530
        %v1939 = vpack.c.b16 %v1535, %v1531
        %v1940 = vpack.c.b16 %v1536, %v1532
        %v1941 = vpack.c.b16 %v1537, %v1533
        %v1942 = vpack.c.b16 %v1542, %v1538
        %v1943 = vpack.c.b16 %v1543, %v1539
        %v1944 = vpack.c.b16 %v1544, %v1540
        %v1945 = vpack.c.b16 %v1545, %v1541
        %v1946 = vpack.c.b16 %v1550, %v1546
        %v1947 = vpack.c.b16 %v1551, %v1547
        %v1948 = vpack.c.b16 %v1552, %v1548
        %v1949 = vpack.c.b16 %v1553, %v1549
        %v1950 = vpack.c.b16 %v1558, %v1554
        %v1951 = vpack.c.b16 %v1559, %v1555
        %v1952 = vpack.c.b16 %v1560, %v1556
        %v1953 = vpack.c.b16 %v1561, %v1557
        %v1954 = vpack.c.b16 %v1566, %v1562
        %v1955 = vpack.c.b16 %v1567, %v1563
        %v1956 = vpack.c.b16 %v1568, %v1564
        %v1957 = vpack.c.b16 %v1569, %v1565
        %v1958 = vpack.c.b16 %v1574, %v1570
        %v1959 = vpack.c.b16 %v1575, %v1571
        %v1960 = vpack.c.b16 %v1576, %v1572
        %v1961 = vpack.c.b16 %v1577, %v1573
        %v1962 = vpack.c.b16 %v1582, %v1578
        %v1963 = vpack.c.b16 %v1583, %v1579
        %v1964 = vpack.c.b16 %v1584, %v1580
        %v1965 = vpack.c.b16 %v1585, %v1581
        %v1966 = vpack.c.b16 %v1590, %v1586
        %v1967 = vpack.c.b16 %v1591, %v1587
        %v1968 = vpack.c.b16 %v1592, %v1588
        %v1969 = vpack.c.b16 %v1593, %v1589
        %v1970 = vpack.c.b16 %v1598, %v1594
        %v1971 = vpack.c.b16 %v1599, %v1595
        %v1972 = vpack.c.b16 %v1600, %v1596
        %v1973 = vpack.c.b16 %v1601, %v1597
        %v1974 = vpack.c.b16 %v1606, %v1602
        %v1975 = vpack.c.b16 %v1607, %v1603
        %v1976 = vpack.c.b16 %v1608, %v1604
        %v1977 = vpack.c.b16 %v1609, %v1605
        %v1978 = vpack.c.b16 %v1614, %v1610
        %v1979 = vpack.c.b16 %v1615, %v1611
        %v1980 = vpack.c.b16 %v1616, %v1612
        %v1981 = vpack.c.b16 %v1617, %v1613
        %v1982 = vpack.c.b16 %v1622, %v1618
        %v1983 = vpack.c.b16 %v1623, %v1619
        %v1984 = vpack.c.b16 %v1624, %v1620
        %v1985 = vpack.c.b16 %v1625, %v1621
        %v1986 = vpack.c.b16 %v1630, %v1626
        %v1987 = vpack.c.b16 %v1631, %v1627
        %v1988 = vpack.c.b16 %v1632, %v1628
        %v1989 = vpack.c.b16 %v1633, %v1629
        %v1990 = vpack.c.b16 %v1638, %v1634
        %v1991 = vpack.c.b16 %v1639, %v1635
        %v1992 = vpack.c.b16 %v1640, %v1636
        %v1993 = vpack.c.b16 %v1641, %v1637
        %v1994 = vpack.c.b16 %v1646, %v1642
        %v1995 = vpack.c.b16 %v1647, %v1643
        %v1996 = vpack.c.b16 %v1648, %v1644
        %v1997 = vpack.c.b16 %v1649, %v1645
        %v1998 = vpack.c.b16 %v1654, %v1650
        %v1999 = vpack.c.b16 %v1655, %v1651
        %v2000 = vpack.c.b16 %v1656, %v1652
        %v2001 = vpack.c.b16 %v1657, %v1653
        %v2002 = vpack.c.b16 %v1662, %v1658
        %v2003 = vpack.c.b16 %v1663, %v1659
        %v2004 = vpack.c.b16 %v1664, %v1660
        %v2005 = vpack.c.b16 %v1665, %v1661
        %v2006 = vpack.c.b16 %v1670, %v1666
        %v2007 = vpack.c.b16 %v1671, %v1667
        %v2008 = vpack.c.b16 %v1672, %v1668
        %v2009 = vpack.c.b16 %v1673, %v1669
        %v2010 = vpack.c.b16 %v1678, %v1674
        %v2011 = vpack.c.b16 %v1679, %v1675
        %v2012 = vpack.c.b16 %v1680, %v1676
        %v2013 = vpack.c.b16 %v1681, %v1677
        %v2014 = vpack.c.b16 %v1686, %v1682
        %v2015 = vpack.c.b16 %v1687, %v1683
        %v2016 = vpack.c.b16 %v1688, %v1684
        %v2017 = vpack.c.b16 %v1689, %v1685
        %v2018 = vpack.c.b16 %v1694, %v1690
        %v2019 = vpack.c.b16 %v1695, %v1691
        %v2020 = vpack.c.b16 %v1696, %v1692
        %v2021 = vpack.c.b16 %v1697, %v1693
        %v2022 = vpack.c.b16 %v1702, %v1698
        %v2023 = vpack.c.b16 %v1703, %v1699
        %v2024 = vpack.c.b16 %v1704, %v1700
        %v2025 = vpack.c.b16 %v1705, %v1701
        %v2026 = vpack.c.b16 %v1710, %v1706
        %v2027 = vpack.c.b16 %v1711, %v1707
        %v2028 = vpack.c.b16 %v1712, %v1708
        %v2029 = vpack.c.b16 %v1713, %v1709
        %v2030 = vpack.c.b16 %v1718, %v1714
        %v2031 = vpack.c.b16 %v1719, %v1715
        %v2032 = vpack.c.b16 %v1720, %v1716
        %v2033 = vpack.c.b16 %v1721, %v1717
        %v2034 = vpack.c.b16 %v1726, %v1722
        %v2035 = vpack.c.b16 %v1727, %v1723
        %v2036 = vpack.c.b16 %v1728, %v1724
        %v2037 = vpack.c.b16 %v1729, %v1725
        %v2038 = vpack.c.b16 %v1734, %v1730
        %v2039 = vpack.c.b16 %v1735, %v1731
        %v2040 = vpack.c.b16 %v1736, %v1732
        %v2041 = vpack.c.b16 %v1737, %v1733
        %v2042 = vpack.c.b16 %v1742, %v1738
        %v2043 = vpack.c.b16 %v1743, %v1739
        %v2044 = vpack.c.b16 %v1744, %v1740
        %v2045 = vpack.c.b16 %v1745, %v1741
        %v2046 = vpack.c.b16 %v1750, %v1746
        %v2047 = vpack.c.b16 %v1751, %v1747
        %v2048 = vpack.c.b16 %v1752, %v1748
        %v2049 = vpack.c.b16 %v1753, %v1749
        %v2050 = vpack.c.b16 %v1758, %v1754
        %v2051 = vpack.c.b16 %v1759, %v1755
        %v2052 = vpack.c.b16 %v1760, %v1756
        %v2053 = vpack.c.b16 %v1761, %v1757
        %v2054 = vpack.c.b16 %v1766, %v1762
        %v2055 = vpack.c.b16 %v1767, %v1763
        %v2056 = vpack.c.b16 %v1768, %v1764
        %v2057 = vpack.c.b16 %v1769, %v1765
        %2346 = vmatpush.bf16.msra.mxu0 %v1798
        %2347 = vmatpush.bf16.msra.mxu0 %v1794
        %2348 = vmatpush.bf16.msra.mxu0 %v1790
        %2349 = vmatpush.bf16.msra.mxu0 %v1786
        %2350 = vmatpush.bf16.msra.mxu0 %v1782
        %2351 = vmatpush.bf16.msra.mxu0 %v1778
        %2352 = vmatpush.bf16.msra.mxu0 %v1774
        %2353 = vmatpush.bf16.msra.mxu0 %v1770
        %2354 = vmatmul.bf16.gmra.mxu0 %v888
        %v2355 = vpop.f32.mrf.mxu0
        %v2356 = vadd.f32 %v852, %v2355
        %v2357 = vpop.f32.mrf.mxu0
        %v2358 = vadd.f32 %v852, %v2357
        %2359 = vdwg.mxu0
        %2360 = vmatpush.bf16.msra.mxu0 %v1830
        %2361 = vmatpush.bf16.msra.mxu0 %v1826
        %2362 = vmatpush.bf16.msra.mxu0 %v1822
        %2363 = vmatpush.bf16.msra.mxu0 %v1818
        %2364 = vmatpush.bf16.msra.mxu0 %v1814
        %2365 = vmatpush.bf16.msra.mxu0 %v1810
        %2366 = vmatpush.bf16.msra.mxu0 %v1806
        %2367 = vmatpush.bf16.msra.mxu0 %v1802
        %2368 = vmatmul.bf16.gmra.mxu0 %v889
        %v2369 = vpop.f32.mrf.mxu0
        %v2370 = vadd.f32 %v2356, %v2369
        %v2371 = vpop.f32.mrf.mxu0
        %v2372 = vadd.f32 %v2358, %v2371
        %2373 = vdwg.mxu0
        %2374 = vmatpush.bf16.msra.mxu0 %v1862
        %2375 = vmatpush.bf16.msra.mxu0 %v1858
        %2376 = vmatpush.bf16.msra.mxu0 %v1854
        %2377 = vmatpush.bf16.msra.mxu0 %v1850
        %2378 = vmatpush.bf16.msra.mxu0 %v1846
        %2379 = vmatpush.bf16.msra.mxu0 %v1842
        %2380 = vmatpush.bf16.msra.mxu0 %v1838
        %2381 = vmatpush.bf16.msra.mxu0 %v1834
        %2382 = vmatmul.bf16.gmra.mxu0 %v890
        %v2383 = vpop.f32.mrf.mxu0
        %v2384 = vadd.f32 %v2370, %v2383
        %v2385 = vpop.f32.mrf.mxu0
        %v2386 = vadd.f32 %v2372, %v2385
        %2387 = vdwg.mxu0
        %2388 = vmatpush.bf16.msra.mxu0 %v1894
        %2389 = vmatpush.bf16.msra.mxu0 %v1890
        %2390 = vmatpush.bf16.msra.mxu0 %v1886
        %2391 = vmatpush.bf16.msra.mxu0 %v1882
        %2392 = vmatpush.bf16.msra.mxu0 %v1878
        %2393 = vmatpush.bf16.msra.mxu0 %v1874
        %2394 = vmatpush.bf16.msra.mxu0 %v1870
        %2395 = vmatpush.bf16.msra.mxu0 %v1866
        %2396 = vmatmul.bf16.gmra.mxu0 %v891
        %v2397 = vpop.f32.mrf.mxu0
        %v2398 = vadd.f32 %v2384, %v2397
        %v2399 = vpop.f32.mrf.mxu0
        %v2400 = vadd.f32 %v2386, %v2399
        %2401 = vdwg.mxu0
        %2402 = vmatpush.bf16.msra.mxu0 %v1926
        %2403 = vmatpush.bf16.msra.mxu0 %v1922
        %2404 = vmatpush.bf16.msra.mxu0 %v1918
        %2405 = vmatpush.bf16.msra.mxu0 %v1914
        %2406 = vmatpush.bf16.msra.mxu0 %v1910
        %2407 = vmatpush.bf16.msra.mxu0 %v1906
        %2408 = vmatpush.bf16.msra.mxu0 %v1902
        %2409 = vmatpush.bf16.msra.mxu0 %v1898
        %2410 = vmatmul.bf16.gmra.mxu0 %v892
        %v2411 = vpop.f32.mrf.mxu0
        %v2412 = vadd.f32 %v2398, %v2411
        %v2413 = vpop.f32.mrf.mxu0
        %v2414 = vadd.f32 %v2400, %v2413
        %2415 = vdwg.mxu0
        %2416 = vmatpush.bf16.msra.mxu0 %v1958
        %2417 = vmatpush.bf16.msra.mxu0 %v1954
        %2418 = vmatpush.bf16.msra.mxu0 %v1950
        %2419 = vmatpush.bf16.msra.mxu0 %v1946
        %2420 = vmatpush.bf16.msra.mxu0 %v1942
        %2421 = vmatpush.bf16.msra.mxu0 %v1938
        %2422 = vmatpush.bf16.msra.mxu0 %v1934
        %2423 = vmatpush.bf16.msra.mxu0 %v1930
        %2424 = vmatmul.bf16.gmra.mxu0 %v893
        %v2425 = vpop.f32.mrf.mxu0
        %v2426 = vadd.f32 %v2412, %v2425
        %v2427 = vpop.f32.mrf.mxu0
        %v2428 = vadd.f32 %v2414, %v2427
        %2429 = vdwg.mxu0
        %2430 = vmatpush.bf16.msra.mxu0 %v1990
        %2431 = vmatpush.bf16.msra.mxu0 %v1986
        %2432 = vmatpush.bf16.msra.mxu0 %v1982
        %2433 = vmatpush.bf16.msra.mxu0 %v1978
        %2434 = vmatpush.bf16.msra.mxu0 %v1974
        %2435 = vmatpush.bf16.msra.mxu0 %v1970
        %2436 = vmatpush.bf16.msra.mxu0 %v1966
        %2437 = vmatpush.bf16.msra.mxu0 %v1962
        %2438 = vmatmul.bf16.gmra.mxu0 %v894
        %v2439 = vpop.f32.mrf.mxu0
        %v2440 = vadd.f32 %v2426, %v2439
        %v2441 = vpop.f32.mrf.mxu0
        %v2442 = vadd.f32 %v2428, %v2441
        %2443 = vdwg.mxu0
        %2444 = vmatpush.bf16.msra.mxu0 %v2022
        %2445 = vmatpush.bf16.msra.mxu0 %v2018
        %2446 = vmatpush.bf16.msra.mxu0 %v2014
        %2447 = vmatpush.bf16.msra.mxu0 %v2010
        %2448 = vmatpush.bf16.msra.mxu0 %v2006
        %2449 = vmatpush.bf16.msra.mxu0 %v2002
        %2450 = vmatpush.bf16.msra.mxu0 %v1998
        %2451 = vmatpush.bf16.msra.mxu0 %v1994
        %2452 = vmatmul.bf16.gmra.mxu0 %v895
        %v2453 = vpop.f32.mrf.mxu0
        %v2454 = vadd.f32 %v2440, %v2453
        %v2455 = vpop.f32.mrf.mxu0
        %v2456 = vadd.f32 %v2442, %v2455
        %2457 = vdwg.mxu0
        %2458 = vmatpush.bf16.msra.mxu0 %v2054
        %2459 = vmatpush.bf16.msra.mxu0 %v2050
        %2460 = vmatpush.bf16.msra.mxu0 %v2046
        %2461 = vmatpush.bf16.msra.mxu0 %v2042
        %2462 = vmatpush.bf16.msra.mxu0 %v2038
        %2463 = vmatpush.bf16.msra.mxu0 %v2034
        %2464 = vmatpush.bf16.msra.mxu0 %v2030
        %2465 = vmatpush.bf16.msra.mxu0 %v2026
        %2466 = vmatmul.bf16.gmra.mxu0 %v896
        %v2467 = vpop.f32.mrf.mxu0
        %v2468 = vadd.f32 %v2454, %v2467
        %v2469 = vpop.f32.mrf.mxu0
        %v2470 = vadd.f32 %v2456, %v2469
        %2471 = vdwg.mxu0
        %2472 = vmatpush.bf16.msra.mxu0 %v1799
        %2473 = vmatpush.bf16.msra.mxu0 %v1795
        %2474 = vmatpush.bf16.msra.mxu0 %v1791
        %2475 = vmatpush.bf16.msra.mxu0 %v1787
        %2476 = vmatpush.bf16.msra.mxu0 %v1783
        %2477 = vmatpush.bf16.msra.mxu0 %v1779
        %2478 = vmatpush.bf16.msra.mxu0 %v1775
        %2479 = vmatpush.bf16.msra.mxu0 %v1771
        %2480 = vmatmul.bf16.gmra.mxu0 %v888
        %v2481 = vpop.f32.mrf.mxu0
        %v2482 = vadd.f32 %v853, %v2481
        %v2483 = vpop.f32.mrf.mxu0
        %v2484 = vadd.f32 %v853, %v2483
        %2485 = vdwg.mxu0
        %2486 = vmatpush.bf16.msra.mxu0 %v1831
        %2487 = vmatpush.bf16.msra.mxu0 %v1827
        %2488 = vmatpush.bf16.msra.mxu0 %v1823
        %2489 = vmatpush.bf16.msra.mxu0 %v1819
        %2490 = vmatpush.bf16.msra.mxu0 %v1815
        %2491 = vmatpush.bf16.msra.mxu0 %v1811
        %2492 = vmatpush.bf16.msra.mxu0 %v1807
        %2493 = vmatpush.bf16.msra.mxu0 %v1803
        %2494 = vmatmul.bf16.gmra.mxu0 %v889
        %v2495 = vpop.f32.mrf.mxu0
        %v2496 = vadd.f32 %v2482, %v2495
        %v2497 = vpop.f32.mrf.mxu0
        %v2498 = vadd.f32 %v2484, %v2497
        %2499 = vdwg.mxu0
        %2500 = vmatpush.bf16.msra.mxu0 %v1863
        %2501 = vmatpush.bf16.msra.mxu0 %v1859
        %2502 = vmatpush.bf16.msra.mxu0 %v1855
        %2503 = vmatpush.bf16.msra.mxu0 %v1851
        %2504 = vmatpush.bf16.msra.mxu0 %v1847
        %2505 = vmatpush.bf16.msra.mxu0 %v1843
        %2506 = vmatpush.bf16.msra.mxu0 %v1839
        %2507 = vmatpush.bf16.msra.mxu0 %v1835
        %2508 = vmatmul.bf16.gmra.mxu0 %v890
        %v2509 = vpop.f32.mrf.mxu0
        %v2510 = vadd.f32 %v2496, %v2509
        %v2511 = vpop.f32.mrf.mxu0
        %v2512 = vadd.f32 %v2498, %v2511
        %2513 = vdwg.mxu0
        %2514 = vmatpush.bf16.msra.mxu0 %v1895
        %2515 = vmatpush.bf16.msra.mxu0 %v1891
        %2516 = vmatpush.bf16.msra.mxu0 %v1887
        %2517 = vmatpush.bf16.msra.mxu0 %v1883
        %2518 = vmatpush.bf16.msra.mxu0 %v1879
        %2519 = vmatpush.bf16.msra.mxu0 %v1875
        %2520 = vmatpush.bf16.msra.mxu0 %v1871
        %2521 = vmatpush.bf16.msra.mxu0 %v1867
        %2522 = vmatmul.bf16.gmra.mxu0 %v891
        %v2523 = vpop.f32.mrf.mxu0
        %v2524 = vadd.f32 %v2510, %v2523
        %v2525 = vpop.f32.mrf.mxu0
        %v2526 = vadd.f32 %v2512, %v2525
        %2527 = vdwg.mxu0
        %2528 = vmatpush.bf16.msra.mxu0 %v1927
        %2529 = vmatpush.bf16.msra.mxu0 %v1923
        %2530 = vmatpush.bf16.msra.mxu0 %v1919
        %2531 = vmatpush.bf16.msra.mxu0 %v1915
        %2532 = vmatpush.bf16.msra.mxu0 %v1911
        %2533 = vmatpush.bf16.msra.mxu0 %v1907
        %2534 = vmatpush.bf16.msra.mxu0 %v1903
        %2535 = vmatpush.bf16.msra.mxu0 %v1899
        %2536 = vmatmul.bf16.gmra.mxu0 %v892
        %v2537 = vpop.f32.mrf.mxu0
        %v2538 = vadd.f32 %v2524, %v2537
        %v2539 = vpop.f32.mrf.mxu0
        %v2540 = vadd.f32 %v2526, %v2539
        %2541 = vdwg.mxu0
        %2542 = vmatpush.bf16.msra.mxu0 %v1959
        %2543 = vmatpush.bf16.msra.mxu0 %v1955
        %2544 = vmatpush.bf16.msra.mxu0 %v1951
        %2545 = vmatpush.bf16.msra.mxu0 %v1947
        %2546 = vmatpush.bf16.msra.mxu0 %v1943
        %2547 = vmatpush.bf16.msra.mxu0 %v1939
        %2548 = vmatpush.bf16.msra.mxu0 %v1935
        %2549 = vmatpush.bf16.msra.mxu0 %v1931
        %2550 = vmatmul.bf16.gmra.mxu0 %v893
        %v2551 = vpop.f32.mrf.mxu0
        %v2552 = vadd.f32 %v2538, %v2551
        %v2553 = vpop.f32.mrf.mxu0
        %v2554 = vadd.f32 %v2540, %v2553
        %2555 = vdwg.mxu0
        %2556 = vmatpush.bf16.msra.mxu0 %v1991
        %2557 = vmatpush.bf16.msra.mxu0 %v1987
        %2558 = vmatpush.bf16.msra.mxu0 %v1983
        %2559 = vmatpush.bf16.msra.mxu0 %v1979
        %2560 = vmatpush.bf16.msra.mxu0 %v1975
        %2561 = vmatpush.bf16.msra.mxu0 %v1971
        %2562 = vmatpush.bf16.msra.mxu0 %v1967
        %2563 = vmatpush.bf16.msra.mxu0 %v1963
        %2564 = vmatmul.bf16.gmra.mxu0 %v894
        %v2565 = vpop.f32.mrf.mxu0
        %v2566 = vadd.f32 %v2552, %v2565
        %v2567 = vpop.f32.mrf.mxu0
        %v2568 = vadd.f32 %v2554, %v2567
        %2569 = vdwg.mxu0
        %2570 = vmatpush.bf16.msra.mxu0 %v2023
        %2571 = vmatpush.bf16.msra.mxu0 %v2019
        %2572 = vmatpush.bf16.msra.mxu0 %v2015
        %2573 = vmatpush.bf16.msra.mxu0 %v2011
        %2574 = vmatpush.bf16.msra.mxu0 %v2007
        %2575 = vmatpush.bf16.msra.mxu0 %v2003
        %2576 = vmatpush.bf16.msra.mxu0 %v1999
        %2577 = vmatpush.bf16.msra.mxu0 %v1995
        %2578 = vmatmul.bf16.gmra.mxu0 %v895
        %v2579 = vpop.f32.mrf.mxu0
        %v2580 = vadd.f32 %v2566, %v2579
        %v2581 = vpop.f32.mrf.mxu0
        %v2582 = vadd.f32 %v2568, %v2581
        %2583 = vdwg.mxu0
        %2584 = vmatpush.bf16.msra.mxu0 %v2055
        %2585 = vmatpush.bf16.msra.mxu0 %v2051
        %2586 = vmatpush.bf16.msra.mxu0 %v2047
        %2587 = vmatpush.bf16.msra.mxu0 %v2043
        %2588 = vmatpush.bf16.msra.mxu0 %v2039
        %2589 = vmatpush.bf16.msra.mxu0 %v2035
        %2590 = vmatpush.bf16.msra.mxu0 %v2031
        %2591 = vmatpush.bf16.msra.mxu0 %v2027
        %2592 = vmatmul.bf16.gmra.mxu0 %v896
        %v2593 = vpop.f32.mrf.mxu0
        %v2594 = vadd.f32 %v2580, %v2593
        %v2595 = vpop.f32.mrf.mxu0
        %v2596 = vadd.f32 %v2582, %v2595
        %2597 = vdwg.mxu0
        %2598 = vmatpush.bf16.msra.mxu0 %v1800
        %2599 = vmatpush.bf16.msra.mxu0 %v1796
        %2600 = vmatpush.bf16.msra.mxu0 %v1792
        %2601 = vmatpush.bf16.msra.mxu0 %v1788
        %2602 = vmatpush.bf16.msra.mxu0 %v1784
        %2603 = vmatpush.bf16.msra.mxu0 %v1780
        %2604 = vmatpush.bf16.msra.mxu0 %v1776
        %2605 = vmatpush.bf16.msra.mxu0 %v1772
        %2606 = vmatmul.bf16.gmra.mxu0 %v888
        %v2607 = vpop.f32.mrf.mxu0
        %v2608 = vadd.f32 %v854, %v2607
        %v2609 = vpop.f32.mrf.mxu0
        %v2610 = vadd.f32 %v854, %v2609
        %2611 = vdwg.mxu0
        %2612 = vmatpush.bf16.msra.mxu0 %v1832
        %2613 = vmatpush.bf16.msra.mxu0 %v1828
        %2614 = vmatpush.bf16.msra.mxu0 %v1824
        %2615 = vmatpush.bf16.msra.mxu0 %v1820
        %2616 = vmatpush.bf16.msra.mxu0 %v1816
        %2617 = vmatpush.bf16.msra.mxu0 %v1812
        %2618 = vmatpush.bf16.msra.mxu0 %v1808
        %2619 = vmatpush.bf16.msra.mxu0 %v1804
        %2620 = vmatmul.bf16.gmra.mxu0 %v889
        %v2621 = vpop.f32.mrf.mxu0
        %v2622 = vadd.f32 %v2608, %v2621
        %v2623 = vpop.f32.mrf.mxu0
        %v2624 = vadd.f32 %v2610, %v2623
        %2625 = vdwg.mxu0
        %2626 = vmatpush.bf16.msra.mxu0 %v1864
        %2627 = vmatpush.bf16.msra.mxu0 %v1860
        %2628 = vmatpush.bf16.msra.mxu0 %v1856
        %2629 = vmatpush.bf16.msra.mxu0 %v1852
        %2630 = vmatpush.bf16.msra.mxu0 %v1848
        %2631 = vmatpush.bf16.msra.mxu0 %v1844
        %2632 = vmatpush.bf16.msra.mxu0 %v1840
        %2633 = vmatpush.bf16.msra.mxu0 %v1836
        %2634 = vmatmul.bf16.gmra.mxu0 %v890
        %v2635 = vpop.f32.mrf.mxu0
        %v2636 = vadd.f32 %v2622, %v2635
        %v2637 = vpop.f32.mrf.mxu0
        %v2638 = vadd.f32 %v2624, %v2637
        %2639 = vdwg.mxu0
        %2640 = vmatpush.bf16.msra.mxu0 %v1896
        %2641 = vmatpush.bf16.msra.mxu0 %v1892
        %2642 = vmatpush.bf16.msra.mxu0 %v1888
        %2643 = vmatpush.bf16.msra.mxu0 %v1884
        %2644 = vmatpush.bf16.msra.mxu0 %v1880
        %2645 = vmatpush.bf16.msra.mxu0 %v1876
        %2646 = vmatpush.bf16.msra.mxu0 %v1872
        %2647 = vmatpush.bf16.msra.mxu0 %v1868
        %2648 = vmatmul.bf16.gmra.mxu0 %v891
        %v2649 = vpop.f32.mrf.mxu0
        %v2650 = vadd.f32 %v2636, %v2649
        %v2651 = vpop.f32.mrf.mxu0
        %v2652 = vadd.f32 %v2638, %v2651
        %2653 = vdwg.mxu0
        %2654 = vmatpush.bf16.msra.mxu0 %v1928
        %2655 = vmatpush.bf16.msra.mxu0 %v1924
        %2656 = vmatpush.bf16.msra.mxu0 %v1920
        %2657 = vmatpush.bf16.msra.mxu0 %v1916
        %2658 = vmatpush.bf16.msra.mxu0 %v1912
        %2659 = vmatpush.bf16.msra.mxu0 %v1908
        %2660 = vmatpush.bf16.msra.mxu0 %v1904
        %2661 = vmatpush.bf16.msra.mxu0 %v1900
        %2662 = vmatmul.bf16.gmra.mxu0 %v892
        %v2663 = vpop.f32.mrf.mxu0
        %v2664 = vadd.f32 %v2650, %v2663
        %v2665 = vpop.f32.mrf.mxu0
        %v2666 = vadd.f32 %v2652, %v2665
        %2667 = vdwg.mxu0
        %2668 = vmatpush.bf16.msra.mxu0 %v1960
        %2669 = vmatpush.bf16.msra.mxu0 %v1956
        %2670 = vmatpush.bf16.msra.mxu0 %v1952
        %2671 = vmatpush.bf16.msra.mxu0 %v1948
        %2672 = vmatpush.bf16.msra.mxu0 %v1944
        %2673 = vmatpush.bf16.msra.mxu0 %v1940
        %2674 = vmatpush.bf16.msra.mxu0 %v1936
        %2675 = vmatpush.bf16.msra.mxu0 %v1932
        %2676 = vmatmul.bf16.gmra.mxu0 %v893
        %v2677 = vpop.f32.mrf.mxu0
        %v2678 = vadd.f32 %v2664, %v2677
        %v2679 = vpop.f32.mrf.mxu0
        %v2680 = vadd.f32 %v2666, %v2679
        %2681 = vdwg.mxu0
        %2682 = vmatpush.bf16.msra.mxu0 %v1992
        %2683 = vmatpush.bf16.msra.mxu0 %v1988
        %2684 = vmatpush.bf16.msra.mxu0 %v1984
        %2685 = vmatpush.bf16.msra.mxu0 %v1980
        %2686 = vmatpush.bf16.msra.mxu0 %v1976
        %2687 = vmatpush.bf16.msra.mxu0 %v1972
        %2688 = vmatpush.bf16.msra.mxu0 %v1968
        %2689 = vmatpush.bf16.msra.mxu0 %v1964
        %2690 = vmatmul.bf16.gmra.mxu0 %v894
        %v2691 = vpop.f32.mrf.mxu0
        %v2692 = vadd.f32 %v2678, %v2691
        %v2693 = vpop.f32.mrf.mxu0
        %v2694 = vadd.f32 %v2680, %v2693
        %2695 = vdwg.mxu0
        %2696 = vmatpush.bf16.msra.mxu0 %v2024
        %2697 = vmatpush.bf16.msra.mxu0 %v2020
        %2698 = vmatpush.bf16.msra.mxu0 %v2016
        %2699 = vmatpush.bf16.msra.mxu0 %v2012
        %2700 = vmatpush.bf16.msra.mxu0 %v2008
        %2701 = vmatpush.bf16.msra.mxu0 %v2004
        %2702 = vmatpush.bf16.msra.mxu0 %v2000
        %2703 = vmatpush.bf16.msra.mxu0 %v1996
        %2704 = vmatmul.bf16.gmra.mxu0 %v895
        %v2705 = vpop.f32.mrf.mxu0
        %v2706 = vadd.f32 %v2692, %v2705
        %v2707 = vpop.f32.mrf.mxu0
        %v2708 = vadd.f32 %v2694, %v2707
        %2709 = vdwg.mxu0
        %2710 = vmatpush.bf16.msra.mxu0 %v2056
        %2711 = vmatpush.bf16.msra.mxu0 %v2052
        %2712 = vmatpush.bf16.msra.mxu0 %v2048
        %2713 = vmatpush.bf16.msra.mxu0 %v2044
        %2714 = vmatpush.bf16.msra.mxu0 %v2040
        %2715 = vmatpush.bf16.msra.mxu0 %v2036
        %2716 = vmatpush.bf16.msra.mxu0 %v2032
        %2717 = vmatpush.bf16.msra.mxu0 %v2028
        %2718 = vmatmul.bf16.gmra.mxu0 %v896
        %v2719 = vpop.f32.mrf.mxu0
        %v2720 = vadd.f32 %v2706, %v2719
        %v2721 = vpop.f32.mrf.mxu0
        %v2722 = vadd.f32 %v2708, %v2721
        %2723 = vdwg.mxu0
        %2724 = vmatpush.bf16.msra.mxu0 %v1801
        %2725 = vmatpush.bf16.msra.mxu0 %v1797
        %2726 = vmatpush.bf16.msra.mxu0 %v1793
        %2727 = vmatpush.bf16.msra.mxu0 %v1789
        %2728 = vmatpush.bf16.msra.mxu0 %v1785
        %2729 = vmatpush.bf16.msra.mxu0 %v1781
        %2730 = vmatpush.bf16.msra.mxu0 %v1777
        %2731 = vmatpush.bf16.msra.mxu0 %v1773
        %2732 = vmatmul.bf16.gmra.mxu0 %v888
        %v2733 = vpop.f32.mrf.mxu0
        %v2734 = vadd.f32 %v855, %v2733
        %v2735 = vpop.f32.mrf.mxu0
        %v2736 = vadd.f32 %v855, %v2735
        %2737 = vdwg.mxu0
        %2738 = vmatpush.bf16.msra.mxu0 %v1833
        %2739 = vmatpush.bf16.msra.mxu0 %v1829
        %2740 = vmatpush.bf16.msra.mxu0 %v1825
        %2741 = vmatpush.bf16.msra.mxu0 %v1821
        %2742 = vmatpush.bf16.msra.mxu0 %v1817
        %2743 = vmatpush.bf16.msra.mxu0 %v1813
        %2744 = vmatpush.bf16.msra.mxu0 %v1809
        %2745 = vmatpush.bf16.msra.mxu0 %v1805
        %2746 = vmatmul.bf16.gmra.mxu0 %v889
        %v2747 = vpop.f32.mrf.mxu0
        %v2748 = vadd.f32 %v2734, %v2747
        %v2749 = vpop.f32.mrf.mxu0
        %v2750 = vadd.f32 %v2736, %v2749
        %2751 = vdwg.mxu0
        %2752 = vmatpush.bf16.msra.mxu0 %v1865
        %2753 = vmatpush.bf16.msra.mxu0 %v1861
        %2754 = vmatpush.bf16.msra.mxu0 %v1857
        %2755 = vmatpush.bf16.msra.mxu0 %v1853
        %2756 = vmatpush.bf16.msra.mxu0 %v1849
        %2757 = vmatpush.bf16.msra.mxu0 %v1845
        %2758 = vmatpush.bf16.msra.mxu0 %v1841
        %2759 = vmatpush.bf16.msra.mxu0 %v1837
        %2760 = vmatmul.bf16.gmra.mxu0 %v890
        %v2761 = vpop.f32.mrf.mxu0
        %v2762 = vadd.f32 %v2748, %v2761
        %v2763 = vpop.f32.mrf.mxu0
        %v2764 = vadd.f32 %v2750, %v2763
        %2765 = vdwg.mxu0
        %2766 = vmatpush.bf16.msra.mxu0 %v1897
        %2767 = vmatpush.bf16.msra.mxu0 %v1893
        %2768 = vmatpush.bf16.msra.mxu0 %v1889
        %2769 = vmatpush.bf16.msra.mxu0 %v1885
        %2770 = vmatpush.bf16.msra.mxu0 %v1881
        %2771 = vmatpush.bf16.msra.mxu0 %v1877
        %2772 = vmatpush.bf16.msra.mxu0 %v1873
        %2773 = vmatpush.bf16.msra.mxu0 %v1869
        %2774 = vmatmul.bf16.gmra.mxu0 %v891
        %v2775 = vpop.f32.mrf.mxu0
        %v2776 = vadd.f32 %v2762, %v2775
        %v2777 = vpop.f32.mrf.mxu0
        %v2778 = vadd.f32 %v2764, %v2777
        %2779 = vdwg.mxu0
        %2780 = vmatpush.bf16.msra.mxu0 %v1929
        %2781 = vmatpush.bf16.msra.mxu0 %v1925
        %2782 = vmatpush.bf16.msra.mxu0 %v1921
        %2783 = vmatpush.bf16.msra.mxu0 %v1917
        %2784 = vmatpush.bf16.msra.mxu0 %v1913
        %2785 = vmatpush.bf16.msra.mxu0 %v1909
        %2786 = vmatpush.bf16.msra.mxu0 %v1905
        %2787 = vmatpush.bf16.msra.mxu0 %v1901
        %2788 = vmatmul.bf16.gmra.mxu0 %v892
        %v2789 = vpop.f32.mrf.mxu0
        %v2790 = vadd.f32 %v2776, %v2789
        %v2791 = vpop.f32.mrf.mxu0
        %v2792 = vadd.f32 %v2778, %v2791
        %2793 = vdwg.mxu0
        %2794 = vmatpush.bf16.msra.mxu0 %v1961
        %2795 = vmatpush.bf16.msra.mxu0 %v1957
        %2796 = vmatpush.bf16.msra.mxu0 %v1953
        %2797 = vmatpush.bf16.msra.mxu0 %v1949
        %2798 = vmatpush.bf16.msra.mxu0 %v1945
        %2799 = vmatpush.bf16.msra.mxu0 %v1941
        %2800 = vmatpush.bf16.msra.mxu0 %v1937
        %2801 = vmatpush.bf16.msra.mxu0 %v1933
        %2802 = vmatmul.bf16.gmra.mxu0 %v893
        %v2803 = vpop.f32.mrf.mxu0
        %v2804 = vadd.f32 %v2790, %v2803
        %v2805 = vpop.f32.mrf.mxu0
        %v2806 = vadd.f32 %v2792, %v2805
        %2807 = vdwg.mxu0
        %2808 = vmatpush.bf16.msra.mxu0 %v1993
        %2809 = vmatpush.bf16.msra.mxu0 %v1989
        %2810 = vmatpush.bf16.msra.mxu0 %v1985
        %2811 = vmatpush.bf16.msra.mxu0 %v1981
        %2812 = vmatpush.bf16.msra.mxu0 %v1977
        %2813 = vmatpush.bf16.msra.mxu0 %v1973
        %2814 = vmatpush.bf16.msra.mxu0 %v1969
        %2815 = vmatpush.bf16.msra.mxu0 %v1965
        %2816 = vmatmul.bf16.gmra.mxu0 %v894
        %v2817 = vpop.f32.mrf.mxu0
        %v2818 = vadd.f32 %v2804, %v2817
        %v2819 = vpop.f32.mrf.mxu0
        %v2820 = vadd.f32 %v2806, %v2819
        %2821 = vdwg.mxu0
        %2822 = vmatpush.bf16.msra.mxu0 %v2025
        %2823 = vmatpush.bf16.msra.mxu0 %v2021
        %2824 = vmatpush.bf16.msra.mxu0 %v2017
        %2825 = vmatpush.bf16.msra.mxu0 %v2013
        %2826 = vmatpush.bf16.msra.mxu0 %v2009
        %2827 = vmatpush.bf16.msra.mxu0 %v2005
        %2828 = vmatpush.bf16.msra.mxu0 %v2001
        %2829 = vmatpush.bf16.msra.mxu0 %v1997
        %2830 = vmatmul.bf16.gmra.mxu0 %v895
        %v2831 = vpop.f32.mrf.mxu0
        %v2832 = vadd.f32 %v2818, %v2831
        %v2833 = vpop.f32.mrf.mxu0
        %v2834 = vadd.f32 %v2820, %v2833
        %2835 = vdwg.mxu0
        %2836 = vmatpush.bf16.msra.mxu0 %v2057
        %2837 = vmatpush.bf16.msra.mxu0 %v2053
        %2838 = vmatpush.bf16.msra.mxu0 %v2049
        %2839 = vmatpush.bf16.msra.mxu0 %v2045
        %2840 = vmatpush.bf16.msra.mxu0 %v2041
        %2841 = vmatpush.bf16.msra.mxu0 %v2037
        %2842 = vmatpush.bf16.msra.mxu0 %v2033
        %2843 = vmatpush.bf16.msra.mxu0 %v2029
        %2844 = vmatmul.bf16.gmra.mxu0 %v896
        %v2845 = vpop.f32.mrf.mxu0
        %v2846 = vadd.f32 %v2832, %v2845
        %v2847 = vpop.f32.mrf.mxu0
        %v2848 = vadd.f32 %v2834, %v2847
        %2849 = vdwg.mxu0
        %v2850 = vmax.f32 %v2468, 0.0
        %v2851 = vmax.f32 %v2594, 0.0
        %v2852 = vmax.f32 %v2720, 0.0
        %v2853 = vmax.f32 %v2846, 0.0
        %v2854 = vmax.f32 %v2470, 0.0
        %v2855 = vmax.f32 %v2596, 0.0
        %v2856 = vmax.f32 %v2722, 0.0
        %v2857 = vmax.f32 %v2848, 0.0
        %v2858 = vpack.c.bf16 %v2854, %v2850
        %v2859 = vpack.c.bf16 %v2855, %v2851
        %v2860 = vpack.c.bf16 %v2856, %v2852
        %v2861 = vpack.c.bf16 %v2857, %v2853
        %v2862 = vld [vmem:[#allocation7] sm:$0xf]
        %v2863 = vld [vmem:[#allocation7 + $0x4] sm:$0xf]
        %v2864 = vld [vmem:[#allocation7 + $0x8] sm:$0xf]
        %v2865 = vld [vmem:[#allocation7 + $0xc] sm:$0xf]
        %v2866 = vld [vmem:[#allocation7 + $0x10] sm:$0xf]
        %v2867 = vld [vmem:[#allocation7 + $0x14] sm:$0xf]
        %v2868 = vld [vmem:[#allocation7 + $0x18] sm:$0xf]
        %v2869 = vld [vmem:[#allocation7 + $0x1c] sm:$0xf]
        %v2870 = vld [vmem:[#allocation7 + $0x20] sm:$0xf]
        %v2871 = vld [vmem:[#allocation7 + $0x24] sm:$0xf]
        %v2872 = vld [vmem:[#allocation7 + $0x28] sm:$0xf]
        %v2873 = vld [vmem:[#allocation7 + $0x2c] sm:$0xf]
        %v2874 = vld [vmem:[#allocation7 + $0x30] sm:$0xf]
        %v2875 = vld [vmem:[#allocation7 + $0x34] sm:$0xf]
        %v2876 = vld [vmem:[#allocation7 + $0x38] sm:$0xf]
        %v2877 = vld [vmem:[#allocation7 + $0x3c] sm:$0xf]
        %v2878 = vld [vmem:[#allocation7 + $0x40] sm:$0xf]
        %v2879 = vld [vmem:[#allocation7 + $0x44] sm:$0xf]
        %v2880 = vld [vmem:[#allocation7 + $0x48] sm:$0xf]
        %v2881 = vld [vmem:[#allocation7 + $0x4c] sm:$0xf]
        %v2882 = vld [vmem:[#allocation7 + $0x50] sm:$0xf]
        %v2883 = vld [vmem:[#allocation7 + $0x54] sm:$0xf]
        %v2884 = vld [vmem:[#allocation7 + $0x58] sm:$0xf]
        %v2885 = vld [vmem:[#allocation7 + $0x5c] sm:$0xf]
        %v2886 = vld [vmem:[#allocation7 + $0x60] sm:$0xf]
        %v2887 = vld [vmem:[#allocation7 + $0x64] sm:$0xf]
        %v2888 = vld [vmem:[#allocation7 + $0x68] sm:$0xf]
        %v2889 = vld [vmem:[#allocation7 + $0x6c] sm:$0xf]
        %v2890 = vld [vmem:[#allocation7 + $0x70] sm:$0xf]
        %v2891 = vld [vmem:[#allocation7 + $0x74] sm:$0xf]
        %v2892 = vld [vmem:[#allocation7 + $0x78] sm:$0xf]
        %v2893 = vld [vmem:[#allocation7 + $0x7c] sm:$0xf]
        %v2894 = vld [vmem:[#allocation7 + $0x80] sm:$0xf]
        %v2895 = vld [vmem:[#allocation7 + $0x84] sm:$0xf]
        %v2896 = vld [vmem:[#allocation7 + $0x88] sm:$0xf]
        %v2897 = vld [vmem:[#allocation7 + $0x8c] sm:$0xf]
        %v2898 = vld [vmem:[#allocation7 + $0x90] sm:$0xf]
        %v2899 = vld [vmem:[#allocation7 + $0x94] sm:$0xf]
        %v2900 = vld [vmem:[#allocation7 + $0x98] sm:$0xf]
        %v2901 = vld [vmem:[#allocation7 + $0x9c] sm:$0xf]
        %v2902 = vld [vmem:[#allocation7 + $0xa0] sm:$0xf]
        %v2903 = vld [vmem:[#allocation7 + $0xa4] sm:$0xf]
        %v2904 = vld [vmem:[#allocation7 + $0xa8] sm:$0xf]
        %v2905 = vld [vmem:[#allocation7 + $0xac] sm:$0xf]
        %v2906 = vld [vmem:[#allocation7 + $0xb0] sm:$0xf]
        %v2907 = vld [vmem:[#allocation7 + $0xb4] sm:$0xf]
        %v2908 = vld [vmem:[#allocation7 + $0xb8] sm:$0xf]
        %v2909 = vld [vmem:[#allocation7 + $0xbc] sm:$0xf]
        %v2910 = vld [vmem:[#allocation7 + $0xc0] sm:$0xf]
        %v2911 = vld [vmem:[#allocation7 + $0xc4] sm:$0xf]
        %v2912 = vld [vmem:[#allocation7 + $0xc8] sm:$0xf]
        %v2913 = vld [vmem:[#allocation7 + $0xcc] sm:$0xf]
        %v2914 = vld [vmem:[#allocation7 + $0xd0] sm:$0xf]
        %v2915 = vld [vmem:[#allocation7 + $0xd4] sm:$0xf]
        %v2916 = vld [vmem:[#allocation7 + $0xd8] sm:$0xf]
        %v2917 = vld [vmem:[#allocation7 + $0xdc] sm:$0xf]
        %v2918 = vld [vmem:[#allocation7 + $0xe0] sm:$0xf]
        %v2919 = vld [vmem:[#allocation7 + $0xe4] sm:$0xf]
        %v2920 = vld [vmem:[#allocation7 + $0xe8] sm:$0xf]
        %v2921 = vld [vmem:[#allocation7 + $0xec] sm:$0xf]
        %v2922 = vld [vmem:[#allocation7 + $0xf0] sm:$0xf]
        %v2923 = vld [vmem:[#allocation7 + $0xf4] sm:$0xf]
        %v2924 = vld [vmem:[#allocation7 + $0xf8] sm:$0xf]
        %v2925 = vld [vmem:[#allocation7 + $0xfc] sm:$0xf]
        %v2926 = vld [vmem:[#allocation8] sm:$0x1]
        %v2928 = vperm.slane %v2926, 0
        %v2994 = vunpack.c.l.b16 %v2862
        %v2995 = vunpack.c.l.b16 %v2863
        %v2996 = vunpack.c.l.b16 %v2864
        %v2997 = vunpack.c.l.b16 %v2865
        %v2998 = vunpack.c.l.b16 %v2866
        %v2999 = vunpack.c.l.b16 %v2867
        %v3000 = vunpack.c.l.b16 %v2868
        %v3001 = vunpack.c.l.b16 %v2869
        %v3002 = vunpack.c.l.b16 %v2870
        %v3003 = vunpack.c.l.b16 %v2871
        %v3004 = vunpack.c.l.b16 %v2872
        %v3005 = vunpack.c.l.b16 %v2873
        %v3006 = vunpack.c.l.b16 %v2874
        %v3007 = vunpack.c.l.b16 %v2875
        %v3008 = vunpack.c.l.b16 %v2876
        %v3009 = vunpack.c.l.b16 %v2877
        %v3010 = vunpack.c.l.b16 %v2878
        %v3011 = vunpack.c.l.b16 %v2879
        %v3012 = vunpack.c.l.b16 %v2880
        %v3013 = vunpack.c.l.b16 %v2881
        %v3014 = vunpack.c.l.b16 %v2882
        %v3015 = vunpack.c.l.b16 %v2883
        %v3016 = vunpack.c.l.b16 %v2884
        %v3017 = vunpack.c.l.b16 %v2885
        %v3018 = vunpack.c.l.b16 %v2886
        %v3019 = vunpack.c.l.b16 %v2887
        %v3020 = vunpack.c.l.b16 %v2888
        %v3021 = vunpack.c.l.b16 %v2889
        %v3022 = vunpack.c.l.b16 %v2890
        %v3023 = vunpack.c.l.b16 %v2891
        %v3024 = vunpack.c.l.b16 %v2892
        %v3025 = vunpack.c.l.b16 %v2893
        %v3026 = vunpack.c.l.b16 %v2894
        %v3027 = vunpack.c.l.b16 %v2895
        %v3028 = vunpack.c.l.b16 %v2896
        %v3029 = vunpack.c.l.b16 %v2897
        %v3030 = vunpack.c.l.b16 %v2898
        %v3031 = vunpack.c.l.b16 %v2899
        %v3032 = vunpack.c.l.b16 %v2900
        %v3033 = vunpack.c.l.b16 %v2901
        %v3034 = vunpack.c.l.b16 %v2902
        %v3035 = vunpack.c.l.b16 %v2903
        %v3036 = vunpack.c.l.b16 %v2904
        %v3037 = vunpack.c.l.b16 %v2905
        %v3038 = vunpack.c.l.b16 %v2906
        %v3039 = vunpack.c.l.b16 %v2907
        %v3040 = vunpack.c.l.b16 %v2908
        %v3041 = vunpack.c.l.b16 %v2909
        %v3042 = vunpack.c.l.b16 %v2910
        %v3043 = vunpack.c.l.b16 %v2911
        %v3044 = vunpack.c.l.b16 %v2912
        %v3045 = vunpack.c.l.b16 %v2913
        %v3046 = vunpack.c.l.b16 %v2914
        %v3047 = vunpack.c.l.b16 %v2915
        %v3048 = vunpack.c.l.b16 %v2916
        %v3049 = vunpack.c.l.b16 %v2917
        %v3050 = vunpack.c.l.b16 %v2918
        %v3051 = vunpack.c.l.b16 %v2919
        %v3052 = vunpack.c.l.b16 %v2920
        %v3053 = vunpack.c.l.b16 %v2921
        %v3054 = vunpack.c.l.b16 %v2922
        %v3055 = vunpack.c.l.b16 %v2923
        %v3056 = vunpack.c.l.b16 %v2924
        %v3057 = vunpack.c.l.b16 %v2925
        %v3058 = vpack.c.b16 %v2995, %v2994
        %v3059 = vpack.c.b16 %v2997, %v2996
        %v3060 = vpack.c.b16 %v2999, %v2998
        %v3061 = vpack.c.b16 %v3001, %v3000
        %v3062 = vpack.c.b16 %v3003, %v3002
        %v3063 = vpack.c.b16 %v3005, %v3004
        %v3064 = vpack.c.b16 %v3007, %v3006
        %v3065 = vpack.c.b16 %v3009, %v3008
        %v3066 = vpack.c.b16 %v3011, %v3010
        %v3067 = vpack.c.b16 %v3013, %v3012
        %v3068 = vpack.c.b16 %v3015, %v3014
        %v3069 = vpack.c.b16 %v3017, %v3016
        %v3070 = vpack.c.b16 %v3019, %v3018
        %v3071 = vpack.c.b16 %v3021, %v3020
        %v3072 = vpack.c.b16 %v3023, %v3022
        %v3073 = vpack.c.b16 %v3025, %v3024
        %v3074 = vpack.c.b16 %v3027, %v3026
        %v3075 = vpack.c.b16 %v3029, %v3028
        %v3076 = vpack.c.b16 %v3031, %v3030
        %v3077 = vpack.c.b16 %v3033, %v3032
        %v3078 = vpack.c.b16 %v3035, %v3034
        %v3079 = vpack.c.b16 %v3037, %v3036
        %v3080 = vpack.c.b16 %v3039, %v3038
        %v3081 = vpack.c.b16 %v3041, %v3040
        %v3082 = vpack.c.b16 %v3043, %v3042
        %v3083 = vpack.c.b16 %v3045, %v3044
        %v3084 = vpack.c.b16 %v3047, %v3046
        %v3085 = vpack.c.b16 %v3049, %v3048
        %v3086 = vpack.c.b16 %v3051, %v3050
        %v3087 = vpack.c.b16 %v3053, %v3052
        %v3088 = vpack.c.b16 %v3055, %v3054
        %v3089 = vpack.c.b16 %v3057, %v3056
        %3122 = vmatpush.bf16.msra.mxu0 %v3065
        %3123 = vmatpush.bf16.msra.mxu0 %v3064
        %3124 = vmatpush.bf16.msra.mxu0 %v3063
        %3125 = vmatpush.bf16.msra.mxu0 %v3062
        %3126 = vmatpush.bf16.msra.mxu0 %v3061
        %3127 = vmatpush.bf16.msra.mxu0 %v3060
        %3128 = vmatpush.bf16.msra.mxu0 %v3059
        %3129 = vmatpush.bf16.msra.mxu0 %v3058
        %3130 = vmatmul.bf16.gmra.mxu0 %v2858
        %v3131 = vpop.f32.mrf.mxu0
        %v3132 = vadd.f32 %v2928, %v3131
        %v3133 = vpop.f32.mrf.mxu0
        %v3134 = vadd.f32 %v2928, %v3133
        %3135 = vdwg.mxu0
        %3136 = vmatpush.bf16.msra.mxu0 %v3073
        %3137 = vmatpush.bf16.msra.mxu0 %v3072
        %3138 = vmatpush.bf16.msra.mxu0 %v3071
        %3139 = vmatpush.bf16.msra.mxu0 %v3070
        %3140 = vmatpush.bf16.msra.mxu0 %v3069
        %3141 = vmatpush.bf16.msra.mxu0 %v3068
        %3142 = vmatpush.bf16.msra.mxu0 %v3067
        %3143 = vmatpush.bf16.msra.mxu0 %v3066
        %3144 = vmatmul.bf16.gmra.mxu0 %v2859
        %v3145 = vpop.f32.mrf.mxu0
        %v3146 = vadd.f32 %v3132, %v3145
        %v3147 = vpop.f32.mrf.mxu0
        %v3148 = vadd.f32 %v3134, %v3147
        %3149 = vdwg.mxu0
        %3150 = vmatpush.bf16.msra.mxu0 %v3081
        %3151 = vmatpush.bf16.msra.mxu0 %v3080
        %3152 = vmatpush.bf16.msra.mxu0 %v3079
        %3153 = vmatpush.bf16.msra.mxu0 %v3078
        %3154 = vmatpush.bf16.msra.mxu0 %v3077
        %3155 = vmatpush.bf16.msra.mxu0 %v3076
        %3156 = vmatpush.bf16.msra.mxu0 %v3075
        %3157 = vmatpush.bf16.msra.mxu0 %v3074
        %3158 = vmatmul.bf16.gmra.mxu0 %v2860
        %v3159 = vpop.f32.mrf.mxu0
        %v3160 = vadd.f32 %v3146, %v3159
        %v3161 = vpop.f32.mrf.mxu0
        %v3162 = vadd.f32 %v3148, %v3161
        %3163 = vdwg.mxu0
        %3164 = vmatpush.bf16.msra.mxu0 %v3089
        %3165 = vmatpush.bf16.msra.mxu0 %v3088
        %3166 = vmatpush.bf16.msra.mxu0 %v3087
        %3167 = vmatpush.bf16.msra.mxu0 %v3086
        %3168 = vmatpush.bf16.msra.mxu0 %v3085
        %3169 = vmatpush.bf16.msra.mxu0 %v3084
        %3170 = vmatpush.bf16.msra.mxu0 %v3083
        %3171 = vmatpush.bf16.msra.mxu0 %v3082
        %3172 = vmatmul.bf16.gmra.mxu0 %v2861
        %v3173 = vpop.f32.mrf.mxu0
        %v3174 = vadd.f32 %v3160, %v3173
        %v3175 = vpop.f32.mrf.mxu0
        %v3176 = vadd.f32 %v3162, %v3175
        %3177 = vdwg.mxu0
        %3178 = vst [vmem:[%s550] sm:$0xff] %v3174
        %3179 = vst [vmem:[%s550 + $0x8] sm:$0xff] %v3176
        %v3180 = vlaneseq
        %v3181 = vand.u32 %v3180, 127
        %vm3182 = vcmp.lt.s32.totalorder %v3181, 16
        %v3183 = vsel %vm3182, %v3174, 0.0
        %v3184 = vsel %vm3182, %v3176, 0.0
        %v3185 = vld [vmem:[%s543] sm:$0xf]
        %v3186 = vld [vmem:[%s543 + $0x4] sm:$0xf]
        %v3187 = vunpack.c.l.bf16 %v3185
        %v3188 = vunpack.c.l.bf16 %v3186
        %v3189 = vmul.f32 %v3174, 0.5
        %v3190 = vmul.f32 %v3176, 0.5
        %v3191 = vmul.f32 %v3189, 1.442695
        %v3192 = vpow.pop %v3191
        %v3193 = vmul.f32 %v3190, 1.442695
        %v3194 = vpow.pop %v3193
        %v3195 = vmul.f32 %v3187, %v3192
        %v3196 = vmul.f32 %v3188, %v3194
        %v3197 = vadd.f32 %v3183, %v3195
        %v3198 = vadd.f32 %v3184, %v3196
        %v3199 = vpack.c.bf16 %v3198, %v3197
        %v3200 = vld [vmem:[#allocation10] sm:$0xff]
        %v3201 = vld [vmem:[#allocation10 + $0x8] sm:$0xff]
        %v3202 = vld [vmem:[#allocation10 + $0x10] sm:$0xff]
        %v3203 = vld [vmem:[#allocation10 + $0x18] sm:$0xff]
        %v3204 = vld [vmem:[#allocation10 + $0x20] sm:$0xff]
        %v3205 = vld [vmem:[#allocation10 + $0x28] sm:$0xff]
        %v3206 = vld [vmem:[#allocation10 + $0x30] sm:$0xff]
        %v3207 = vld [vmem:[#allocation10 + $0x38] sm:$0xff]
        %v3208 = vld [vmem:[#allocation10 + $0x40] sm:$0xff]
        %v3209 = vld [vmem:[#allocation10 + $0x48] sm:$0xff]
        %v3210 = vld [vmem:[#allocation10 + $0x50] sm:$0xff]
        %v3211 = vld [vmem:[#allocation10 + $0x58] sm:$0xff]
        %v3212 = vld [vmem:[#allocation10 + $0x60] sm:$0xff]
        %v3213 = vld [vmem:[#allocation10 + $0x68] sm:$0xff]
        %v3214 = vld [vmem:[#allocation10 + $0x70] sm:$0xff]
        %v3215 = vld [vmem:[#allocation10 + $0x78] sm:$0xff]
        %v3216 = vld [vmem:[#allocation10 + $0x80] sm:$0xff]
        %v3217 = vld [vmem:[#allocation10 + $0x88] sm:$0xff]
        %v3218 = vld [vmem:[#allocation10 + $0x90] sm:$0xff]
        %v3219 = vld [vmem:[#allocation10 + $0x98] sm:$0xff]
        %v3220 = vld [vmem:[#allocation10 + $0xa0] sm:$0xff]
        %v3221 = vld [vmem:[#allocation10 + $0xa8] sm:$0xff]
        %v3222 = vld [vmem:[#allocation10 + $0xb0] sm:$0xff]
        %v3223 = vld [vmem:[#allocation10 + $0xb8] sm:$0xff]
        %v3224 = vld [vmem:[#allocation10 + $0xc0] sm:$0xff]
        %v3225 = vld [vmem:[#allocation10 + $0xc8] sm:$0xff]
        %v3226 = vld [vmem:[#allocation10 + $0xd0] sm:$0xff]
        %v3227 = vld [vmem:[#allocation10 + $0xd8] sm:$0xff]
        %v3228 = vld [vmem:[#allocation10 + $0xe0] sm:$0xff]
        %v3229 = vld [vmem:[#allocation10 + $0xe8] sm:$0xff]
        %v3230 = vld [vmem:[#allocation10 + $0xf0] sm:$0xff]
        %v3231 = vld [vmem:[#allocation10 + $0xf8] sm:$0xff]
        %v3232 = vld [vmem:[#allocation11] sm:$0xf]
        %v3234 = vperm.slane %v3232, 0
        %v3235 = vperm.slane %v3232, 1
        %v3236 = vperm.slane %v3232, 2
        %v3237 = vperm.slane %v3232, 3
        %v3274 = vunpack.c.l.b16 %v3200
        %v3275 = vunpack.c.h.b16 %v3200
        %v3276 = vunpack.c.l.b16 %v3201
        %v3277 = vunpack.c.h.b16 %v3201
        %v3278 = vunpack.c.l.b16 %v3202
        %v3279 = vunpack.c.h.b16 %v3202
        %v3280 = vunpack.c.l.b16 %v3203
        %v3281 = vunpack.c.h.b16 %v3203
        %v3282 = vunpack.c.l.b16 %v3204
        %v3283 = vunpack.c.h.b16 %v3204
        %v3284 = vunpack.c.l.b16 %v3205
        %v3285 = vunpack.c.h.b16 %v3205
        %v3286 = vunpack.c.l.b16 %v3206
        %v3287 = vunpack.c.h.b16 %v3206
        %v3288 = vunpack.c.l.b16 %v3207
        %v3289 = vunpack.c.h.b16 %v3207
        %v3290 = vunpack.c.l.b16 %v3208
        %v3291 = vunpack.c.h.b16 %v3208
        %v3292 = vunpack.c.l.b16 %v3209
        %v3293 = vunpack.c.h.b16 %v3209
        %v3294 = vunpack.c.l.b16 %v3210
        %v3295 = vunpack.c.h.b16 %v3210
        %v3296 = vunpack.c.l.b16 %v3211
        %v3297 = vunpack.c.h.b16 %v3211
        %v3298 = vunpack.c.l.b16 %v3212
        %v3299 = vunpack.c.h.b16 %v3212
        %v3300 = vunpack.c.l.b16 %v3213
        %v3301 = vunpack.c.h.b16 %v3213
        %v3302 = vunpack.c.l.b16 %v3214
        %v3303 = vunpack.c.h.b16 %v3214
        %v3304 = vunpack.c.l.b16 %v3215
        %v3305 = vunpack.c.h.b16 %v3215
        %v3306 = vunpack.c.l.b16 %v3216
        %v3307 = vunpack.c.h.b16 %v3216
        %v3308 = vunpack.c.l.b16 %v3217
        %v3309 = vunpack.c.h.b16 %v3217
        %v3310 = vunpack.c.l.b16 %v3218
        %v3311 = vunpack.c.h.b16 %v3218
        %v3312 = vunpack.c.l.b16 %v3219
        %v3313 = vunpack.c.h.b16 %v3219
        %v3314 = vunpack.c.l.b16 %v3220
        %v3315 = vunpack.c.h.b16 %v3220
        %v3316 = vunpack.c.l.b16 %v3221
        %v3317 = vunpack.c.h.b16 %v3221
        %v3318 = vunpack.c.l.b16 %v3222
        %v3319 = vunpack.c.h.b16 %v3222
        %v3320 = vunpack.c.l.b16 %v3223
        %v3321 = vunpack.c.h.b16 %v3223
        %v3322 = vunpack.c.l.b16 %v3224
        %v3323 = vunpack.c.h.b16 %v3224
        %v3324 = vunpack.c.l.b16 %v3225
        %v3325 = vunpack.c.h.b16 %v3225
        %v3326 = vunpack.c.l.b16 %v3226
        %v3327 = vunpack.c.h.b16 %v3226
        %v3328 = vunpack.c.l.b16 %v3227
        %v3329 = vunpack.c.h.b16 %v3227
        %v3330 = vunpack.c.l.b16 %v3228
        %v3331 = vunpack.c.h.b16 %v3228
        %v3332 = vunpack.c.l.b16 %v3229
        %v3333 = vunpack.c.h.b16 %v3229
        %v3334 = vunpack.c.l.b16 %v3230
        %v3335 = vunpack.c.h.b16 %v3230
        %v3336 = vunpack.c.l.b16 %v3231
        %v3337 = vunpack.c.h.b16 %v3231
        %v3338 = vpack.c.b16 %v3278, %v3274
        %v3339 = vpack.c.b16 %v3279, %v3275
        %v3340 = vpack.c.b16 %v3280, %v3276
        %v3341 = vpack.c.b16 %v3281, %v3277
        %v3342 = vpack.c.b16 %v3286, %v3282
        %v3343 = vpack.c.b16 %v3287, %v3283
        %v3344 = vpack.c.b16 %v3288, %v3284
        %v3345 = vpack.c.b16 %v3289, %v3285
        %v3346 = vpack.c.b16 %v3294, %v3290
        %v3347 = vpack.c.b16 %v3295, %v3291
        %v3348 = vpack.c.b16 %v3296, %v3292
        %v3349 = vpack.c.b16 %v3297, %v3293
        %v3350 = vpack.c.b16 %v3302, %v3298
        %v3351 = vpack.c.b16 %v3303, %v3299
        %v3352 = vpack.c.b16 %v3304, %v3300
        %v3353 = vpack.c.b16 %v3305, %v3301
        %v3354 = vpack.c.b16 %v3310, %v3306
        %v3355 = vpack.c.b16 %v3311, %v3307
        %v3356 = vpack.c.b16 %v3312, %v3308
        %v3357 = vpack.c.b16 %v3313, %v3309
        %v3358 = vpack.c.b16 %v3318, %v3314
        %v3359 = vpack.c.b16 %v3319, %v3315
        %v3360 = vpack.c.b16 %v3320, %v3316
        %v3361 = vpack.c.b16 %v3321, %v3317
        %v3362 = vpack.c.b16 %v3326, %v3322
        %v3363 = vpack.c.b16 %v3327, %v3323
        %v3364 = vpack.c.b16 %v3328, %v3324
        %v3365 = vpack.c.b16 %v3329, %v3325
        %v3366 = vpack.c.b16 %v3334, %v3330
        %v3367 = vpack.c.b16 %v3335, %v3331
        %v3368 = vpack.c.b16 %v3336, %v3332
        %v3369 = vpack.c.b16 %v3337, %v3333
        %3402 = vmatpush.bf16.msra.mxu0 %v3366
        %3403 = vmatpush.bf16.msra.mxu0 %v3362
        %3404 = vmatpush.bf16.msra.mxu0 %v3358
        %3405 = vmatpush.bf16.msra.mxu0 %v3354
        %3406 = vmatpush.bf16.msra.mxu0 %v3350
        %3407 = vmatpush.bf16.msra.mxu0 %v3346
        %3408 = vmatpush.bf16.msra.mxu0 %v3342
        %3409 = vmatpush.bf16.msra.mxu0 %v3338
        %3410 = vmatmul.bf16.gmra.mxu0 %v3199
        %v3411 = vpop.f32.mrf.mxu0
        %v3412 = vadd.f32 %v3234, %v3411
        %v3413 = vpop.f32.mrf.mxu0
        %v3414 = vadd.f32 %v3234, %v3413
        %3415 = vdwg.mxu0
        %3416 = vmatpush.bf16.msra.mxu0 %v3367
        %3417 = vmatpush.bf16.msra.mxu0 %v3363
        %3418 = vmatpush.bf16.msra.mxu0 %v3359
        %3419 = vmatpush.bf16.msra.mxu0 %v3355
        %3420 = vmatpush.bf16.msra.mxu0 %v3351
        %3421 = vmatpush.bf16.msra.mxu0 %v3347
        %3422 = vmatpush.bf16.msra.mxu0 %v3343
        %3423 = vmatpush.bf16.msra.mxu0 %v3339
        %3424 = vmatmul.bf16.gmra.mxu0 %v3199
        %v3425 = vpop.f32.mrf.mxu0
        %v3426 = vadd.f32 %v3235, %v3425
        %v3427 = vpop.f32.mrf.mxu0
        %v3428 = vadd.f32 %v3235, %v3427
        %3429 = vdwg.mxu0
        %3430 = vmatpush.bf16.msra.mxu0 %v3368
        %3431 = vmatpush.bf16.msra.mxu0 %v3364
        %3432 = vmatpush.bf16.msra.mxu0 %v3360
        %3433 = vmatpush.bf16.msra.mxu0 %v3356
        %3434 = vmatpush.bf16.msra.mxu0 %v3352
        %3435 = vmatpush.bf16.msra.mxu0 %v3348
        %3436 = vmatpush.bf16.msra.mxu0 %v3344
        %3437 = vmatpush.bf16.msra.mxu0 %v3340
        %3438 = vmatmul.bf16.gmra.mxu0 %v3199
        %v3439 = vpop.f32.mrf.mxu0
        %v3440 = vadd.f32 %v3236, %v3439
        %v3441 = vpop.f32.mrf.mxu0
        %v3442 = vadd.f32 %v3236, %v3441
        %3443 = vdwg.mxu0
        %3444 = vmatpush.bf16.msra.mxu0 %v3369
        %3445 = vmatpush.bf16.msra.mxu0 %v3365
        %3446 = vmatpush.bf16.msra.mxu0 %v3361
        %3447 = vmatpush.bf16.msra.mxu0 %v3357
        %3448 = vmatpush.bf16.msra.mxu0 %v3353
        %3449 = vmatpush.bf16.msra.mxu0 %v3349
        %3450 = vmatpush.bf16.msra.mxu0 %v3345
        %3451 = vmatpush.bf16.msra.mxu0 %v3341
        %3452 = vmatmul.bf16.gmra.mxu0 %v3199
        %v3453 = vpop.f32.mrf.mxu0
        %v3454 = vadd.f32 %v3237, %v3453
        %v3455 = vpop.f32.mrf.mxu0
        %v3456 = vadd.f32 %v3237, %v3455
        %3457 = vdwg.mxu0
        %v3458 = vmax.f32 %v3412, 0.0
        %v3459 = vmax.f32 %v3426, 0.0
        %v3460 = vmax.f32 %v3440, 0.0
        %v3461 = vmax.f32 %v3454, 0.0
        %v3462 = vmax.f32 %v3414, 0.0
        %v3463 = vmax.f32 %v3428, 0.0
        %v3464 = vmax.f32 %v3442, 0.0
        %v3465 = vmax.f32 %v3456, 0.0
        %v3466 = vpack.c.bf16 %v3462, %v3458
        %v3467 = vpack.c.bf16 %v3463, %v3459
        %v3468 = vpack.c.bf16 %v3464, %v3460
        %v3469 = vpack.c.bf16 %v3465, %v3461
        %v3470 = vld [vmem:[#allocation13] sm:$0xff]
        %v3471 = vld [vmem:[#allocation13 + $0x8] sm:$0xff]
        %v3472 = vld [vmem:[#allocation13 + $0x10] sm:$0xff]
        %v3473 = vld [vmem:[#allocation13 + $0x18] sm:$0xff]
        %v3474 = vld [vmem:[#allocation13 + $0x20] sm:$0xf]
        %v3475 = vld [vmem:[#allocation13 + $0x24] sm:$0xff]
        %v3476 = vld [vmem:[#allocation13 + $0x2c] sm:$0xff]
        %v3477 = vld [vmem:[#allocation13 + $0x34] sm:$0xff]
        %v3478 = vld [vmem:[#allocation13 + $0x3c] sm:$0xff]
        %v3479 = vld [vmem:[#allocation13 + $0x44] sm:$0xf]
        %v3480 = vld [vmem:[#allocation13 + $0x48] sm:$0xff]
        %v3481 = vld [vmem:[#allocation13 + $0x50] sm:$0xff]
        %v3482 = vld [vmem:[#allocation13 + $0x58] sm:$0xff]
        %v3483 = vld [vmem:[#allocation13 + $0x60] sm:$0xff]
        %v3484 = vld [vmem:[#allocation13 + $0x68] sm:$0xf]
        %v3485 = vld [vmem:[#allocation13 + $0x6c] sm:$0xff]
        %v3486 = vld [vmem:[#allocation13 + $0x74] sm:$0xff]
        %v3487 = vld [vmem:[#allocation13 + $0x7c] sm:$0xff]
        %v3488 = vld [vmem:[#allocation13 + $0x84] sm:$0xff]
        %v3489 = vld [vmem:[#allocation13 + $0x8c] sm:$0xf]
        %v3490 = vld [vmem:[#allocation13 + $0x90] sm:$0xff]
        %v3491 = vld [vmem:[#allocation13 + $0x98] sm:$0xff]
        %v3492 = vld [vmem:[#allocation13 + $0xa0] sm:$0xff]
        %v3493 = vld [vmem:[#allocation13 + $0xa8] sm:$0xff]
        %v3494 = vld [vmem:[#allocation13 + $0xb0] sm:$0xf]
        %v3495 = vld [vmem:[#allocation13 + $0xb4] sm:$0xff]
        %v3496 = vld [vmem:[#allocation13 + $0xbc] sm:$0xff]
        %v3497 = vld [vmem:[#allocation13 + $0xc4] sm:$0xff]
        %v3498 = vld [vmem:[#allocation13 + $0xcc] sm:$0xff]
        %v3499 = vld [vmem:[#allocation13 + $0xd4] sm:$0xf]
        %v3500 = vld [vmem:[#allocation13 + $0xd8] sm:$0xff]
        %v3501 = vld [vmem:[#allocation13 + $0xe0] sm:$0xff]
        %v3502 = vld [vmem:[#allocation13 + $0xe8] sm:$0xff]
        %v3503 = vld [vmem:[#allocation13 + $0xf0] sm:$0xff]
        %v3504 = vld [vmem:[#allocation13 + $0xf8] sm:$0xf]
        %v3505 = vld [vmem:[#allocation13 + $0xfc] sm:$0xff]
        %v3506 = vld [vmem:[#allocation13 + $0x104] sm:$0xff]
        %v3507 = vld [vmem:[#allocation13 + $0x10c] sm:$0xff]
        %v3508 = vld [vmem:[#allocation13 + $0x114] sm:$0xff]
        %v3509 = vld [vmem:[#allocation13 + $0x11c] sm:$0xf]
        %v3510 = vld [vmem:[#allocation13 + $0x120] sm:$0xff]
        %v3511 = vld [vmem:[#allocation13 + $0x128] sm:$0xff]
        %v3512 = vld [vmem:[#allocation13 + $0x130] sm:$0xff]
        %v3513 = vld [vmem:[#allocation13 + $0x138] sm:$0xff]
        %v3514 = vld [vmem:[#allocation13 + $0x140] sm:$0xf]
        %v3515 = vld [vmem:[#allocation13 + $0x144] sm:$0xff]
        %v3516 = vld [vmem:[#allocation13 + $0x14c] sm:$0xff]
        %v3517 = vld [vmem:[#allocation13 + $0x154] sm:$0xff]
        %v3518 = vld [vmem:[#allocation13 + $0x15c] sm:$0xff]
        %v3519 = vld [vmem:[#allocation13 + $0x164] sm:$0xf]
        %v3520 = vld [vmem:[#allocation13 + $0x168] sm:$0xff]
        %v3521 = vld [vmem:[#allocation13 + $0x170] sm:$0xff]
        %v3522 = vld [vmem:[#allocation13 + $0x178] sm:$0xff]
        %v3523 = vld [vmem:[#allocation13 + $0x180] sm:$0xff]
        %v3524 = vld [vmem:[#allocation13 + $0x188] sm:$0xf]
        %v3525 = vld [vmem:[#allocation13 + $0x18c] sm:$0xff]
        %v3526 = vld [vmem:[#allocation13 + $0x194] sm:$0xff]
        %v3527 = vld [vmem:[#allocation13 + $0x19c] sm:$0xff]
        %v3528 = vld [vmem:[#allocation13 + $0x1a4] sm:$0xff]
        %v3529 = vld [vmem:[#allocation13 + $0x1ac] sm:$0xf]
        %v3530 = vld [vmem:[#allocation13 + $0x1b0] sm:$0xff]
        %v3531 = vld [vmem:[#allocation13 + $0x1b8] sm:$0xff]
        %v3532 = vld [vmem:[#allocation13 + $0x1c0] sm:$0xff]
        %v3533 = vld [vmem:[#allocation13 + $0x1c8] sm:$0xff]
        %v3534 = vld [vmem:[#allocation13 + $0x1d0] sm:$0xf]
        %v3535 = vld [vmem:[#allocation13 + $0x1d4] sm:$0xff]
        %v3536 = vld [vmem:[#allocation13 + $0x1dc] sm:$0xff]
        %v3537 = vld [vmem:[#allocation13 + $0x1e4] sm:$0xff]
        %v3538 = vld [vmem:[#allocation13 + $0x1ec] sm:$0xff]
        %v3539 = vld [vmem:[#allocation13 + $0x1f4] sm:$0xf]
        %v3540 = vld [vmem:[#allocation13 + $0x1f8] sm:$0xff]
        %v3541 = vld [vmem:[#allocation13 + $0x200] sm:$0xff]
        %v3542 = vld [vmem:[#allocation13 + $0x208] sm:$0xff]
        %v3543 = vld [vmem:[#allocation13 + $0x210] sm:$0xff]
        %v3544 = vld [vmem:[#allocation13 + $0x218] sm:$0xf]
        %v3545 = vld [vmem:[#allocation13 + $0x21c] sm:$0xff]
        %v3546 = vld [vmem:[#allocation13 + $0x224] sm:$0xff]
        %v3547 = vld [vmem:[#allocation13 + $0x22c] sm:$0xff]
        %v3548 = vld [vmem:[#allocation13 + $0x234] sm:$0xff]
        %v3549 = vld [vmem:[#allocation13 + $0x23c] sm:$0xf]
        %v3550 = vld [vmem:[#allocation13 + $0x240] sm:$0xff]
        %v3551 = vld [vmem:[#allocation13 + $0x248] sm:$0xff]
        %v3552 = vld [vmem:[#allocation13 + $0x250] sm:$0xff]
        %v3553 = vld [vmem:[#allocation13 + $0x258] sm:$0xff]
        %v3554 = vld [vmem:[#allocation13 + $0x260] sm:$0xf]
        %v3555 = vld [vmem:[#allocation13 + $0x264] sm:$0xff]
        %v3556 = vld [vmem:[#allocation13 + $0x26c] sm:$0xff]
        %v3557 = vld [vmem:[#allocation13 + $0x274] sm:$0xff]
        %v3558 = vld [vmem:[#allocation13 + $0x27c] sm:$0xff]
        %v3559 = vld [vmem:[#allocation13 + $0x284] sm:$0xf]
        %v3560 = vld [vmem:[#allocation13 + $0x288] sm:$0xff]
        %v3561 = vld [vmem:[#allocation13 + $0x290] sm:$0xff]
        %v3562 = vld [vmem:[#allocation13 + $0x298] sm:$0xff]
        %v3563 = vld [vmem:[#allocation13 + $0x2a0] sm:$0xff]
        %v3564 = vld [vmem:[#allocation13 + $0x2a8] sm:$0xf]
        %v3565 = vld [vmem:[#allocation13 + $0x2ac] sm:$0xff]
        %v3566 = vld [vmem:[#allocation13 + $0x2b4] sm:$0xff]
        %v3567 = vld [vmem:[#allocation13 + $0x2bc] sm:$0xff]
        %v3568 = vld [vmem:[#allocation13 + $0x2c4] sm:$0xff]
        %v3569 = vld [vmem:[#allocation13 + $0x2cc] sm:$0xf]
        %v3570 = vld [vmem:[#allocation13 + $0x2d0] sm:$0xff]
        %v3571 = vld [vmem:[#allocation13 + $0x2d8] sm:$0xff]
        %v3572 = vld [vmem:[#allocation13 + $0x2e0] sm:$0xff]
        %v3573 = vld [vmem:[#allocation13 + $0x2e8] sm:$0xff]
        %v3574 = vld [vmem:[#allocation13 + $0x2f0] sm:$0xf]
        %v3575 = vld [vmem:[#allocation13 + $0x2f4] sm:$0xff]
        %v3576 = vld [vmem:[#allocation13 + $0x2fc] sm:$0xff]
        %v3577 = vld [vmem:[#allocation13 + $0x304] sm:$0xff]
        %v3578 = vld [vmem:[#allocation13 + $0x30c] sm:$0xff]
        %v3579 = vld [vmem:[#allocation13 + $0x314] sm:$0xf]
        %v3580 = vld [vmem:[#allocation13 + $0x318] sm:$0xff]
        %v3581 = vld [vmem:[#allocation13 + $0x320] sm:$0xff]
        %v3582 = vld [vmem:[#allocation13 + $0x328] sm:$0xff]
        %v3583 = vld [vmem:[#allocation13 + $0x330] sm:$0xff]
        %v3584 = vld [vmem:[#allocation13 + $0x338] sm:$0xf]
        %v3585 = vld [vmem:[#allocation13 + $0x33c] sm:$0xff]
        %v3586 = vld [vmem:[#allocation13 + $0x344] sm:$0xff]
        %v3587 = vld [vmem:[#allocation13 + $0x34c] sm:$0xff]
        %v3588 = vld [vmem:[#allocation13 + $0x354] sm:$0xff]
        %v3589 = vld [vmem:[#allocation13 + $0x35c] sm:$0xf]
        %v3590 = vld [vmem:[#allocation13 + $0x360] sm:$0xff]
        %v3591 = vld [vmem:[#allocation13 + $0x368] sm:$0xff]
        %v3592 = vld [vmem:[#allocation13 + $0x370] sm:$0xff]
        %v3593 = vld [vmem:[#allocation13 + $0x378] sm:$0xff]
        %v3594 = vld [vmem:[#allocation13 + $0x380] sm:$0xf]
        %v3595 = vld [vmem:[#allocation13 + $0x384] sm:$0xff]
        %v3596 = vld [vmem:[#allocation13 + $0x38c] sm:$0xff]
        %v3597 = vld [vmem:[#allocation13 + $0x394] sm:$0xff]
        %v3598 = vld [vmem:[#allocation13 + $0x39c] sm:$0xff]
        %v3599 = vld [vmem:[#allocation13 + $0x3a4] sm:$0xf]
        %v3600 = vld [vmem:[#allocation13 + $0x3a8] sm:$0xff]
        %v3601 = vld [vmem:[#allocation13 + $0x3b0] sm:$0xff]
        %v3602 = vld [vmem:[#allocation13 + $0x3b8] sm:$0xff]
        %v3603 = vld [vmem:[#allocation13 + $0x3c0] sm:$0xff]
        %v3604 = vld [vmem:[#allocation13 + $0x3c8] sm:$0xf]
        %v3605 = vld [vmem:[#allocation13 + $0x3cc] sm:$0xff]
        %v3606 = vld [vmem:[#allocation13 + $0x3d4] sm:$0xff]
        %v3607 = vld [vmem:[#allocation13 + $0x3dc] sm:$0xff]
        %v3608 = vld [vmem:[#allocation13 + $0x3e4] sm:$0xff]
        %v3609 = vld [vmem:[#allocation13 + $0x3ec] sm:$0xf]
        %v3610 = vld [vmem:[#allocation13 + $0x3f0] sm:$0xff]
        %v3611 = vld [vmem:[#allocation13 + $0x3f8] sm:$0xff]
        %v3612 = vld [vmem:[#allocation13 + $0x400] sm:$0xff]
        %v3613 = vld [vmem:[#allocation13 + $0x408] sm:$0xff]
        %v3614 = vld [vmem:[#allocation13 + $0x410] sm:$0xf]
        %v3615 = vld [vmem:[#allocation13 + $0x414] sm:$0xff]
        %v3616 = vld [vmem:[#allocation13 + $0x41c] sm:$0xff]
        %v3617 = vld [vmem:[#allocation13 + $0x424] sm:$0xff]
        %v3618 = vld [vmem:[#allocation13 + $0x42c] sm:$0xff]
        %v3619 = vld [vmem:[#allocation13 + $0x434] sm:$0xf]
        %v3620 = vld [vmem:[#allocation13 + $0x438] sm:$0xff]
        %v3621 = vld [vmem:[#allocation13 + $0x440] sm:$0xff]
        %v3622 = vld [vmem:[#allocation13 + $0x448] sm:$0xff]
        %v3623 = vld [vmem:[#allocation13 + $0x450] sm:$0xff]
        %v3624 = vld [vmem:[#allocation13 + $0x458] sm:$0xf]
        %v3625 = vld [vmem:[#allocation13 + $0x45c] sm:$0xff]
        %v3626 = vld [vmem:[#allocation13 + $0x464] sm:$0xff]
        %v3627 = vld [vmem:[#allocation13 + $0x46c] sm:$0xff]
        %v3628 = vld [vmem:[#allocation13 + $0x474] sm:$0xff]
        %v3629 = vld [vmem:[#allocation13 + $0x47c] sm:$0xf]
        %v3630 = vld [vmem:[#allocation13 + $0x480] sm:$0xff]
        %v3631 = vld [vmem:[#allocation13 + $0x488] sm:$0xff]
        %v3632 = vld [vmem:[#allocation13 + $0x490] sm:$0xff]
        %v3633 = vld [vmem:[#allocation13 + $0x498] sm:$0xff]
        %v3634 = vld [vmem:[#allocation13 + $0x4a0] sm:$0xf]
        %v3635 = vld [vmem:[#allocation13 + $0x4a4] sm:$0xff]
        %v3636 = vld [vmem:[#allocation13 + $0x4ac] sm:$0xff]
        %v3637 = vld [vmem:[#allocation13 + $0x4b4] sm:$0xff]
        %v3638 = vld [vmem:[#allocation13 + $0x4bc] sm:$0xff]
        %v3639 = vld [vmem:[#allocation13 + $0x4c4] sm:$0xf]
        %v3640 = vld [vmem:[#allocation13 + $0x4c8] sm:$0xff]
        %v3641 = vld [vmem:[#allocation13 + $0x4d0] sm:$0xff]
        %v3642 = vld [vmem:[#allocation13 + $0x4d8] sm:$0xff]
        %v3643 = vld [vmem:[#allocation13 + $0x4e0] sm:$0xff]
        %v3644 = vld [vmem:[#allocation13 + $0x4e8] sm:$0xf]
        %v3645 = vld [vmem:[#allocation13 + $0x4ec] sm:$0xff]
        %v3646 = vld [vmem:[#allocation13 + $0x4f4] sm:$0xff]
        %v3647 = vld [vmem:[#allocation13 + $0x4fc] sm:$0xff]
        %v3648 = vld [vmem:[#allocation13 + $0x504] sm:$0xff]
        %v3649 = vld [vmem:[#allocation13 + $0x50c] sm:$0xf]
        %v3650 = vld [vmem:[#allocation13 + $0x510] sm:$0xff]
        %v3651 = vld [vmem:[#allocation13 + $0x518] sm:$0xff]
        %v3652 = vld [vmem:[#allocation13 + $0x520] sm:$0xff]
        %v3653 = vld [vmem:[#allocation13 + $0x528] sm:$0xff]
        %v3654 = vld [vmem:[#allocation13 + $0x530] sm:$0xf]
        %v3655 = vld [vmem:[#allocation13 + $0x534] sm:$0xff]
        %v3656 = vld [vmem:[#allocation13 + $0x53c] sm:$0xff]
        %v3657 = vld [vmem:[#allocation13 + $0x544] sm:$0xff]
        %v3658 = vld [vmem:[#allocation13 + $0x54c] sm:$0xff]
        %v3659 = vld [vmem:[#allocation13 + $0x554] sm:$0xf]
        %v3660 = vld [vmem:[#allocation13 + $0x558] sm:$0xff]
        %v3661 = vld [vmem:[#allocation13 + $0x560] sm:$0xff]
        %v3662 = vld [vmem:[#allocation13 + $0x568] sm:$0xff]
        %v3663 = vld [vmem:[#allocation13 + $0x570] sm:$0xff]
        %v3664 = vld [vmem:[#allocation13 + $0x578] sm:$0xf]
        %v3665 = vld [vmem:[#allocation13 + $0x57c] sm:$0xff]
        %v3666 = vld [vmem:[#allocation13 + $0x584] sm:$0xff]
        %v3667 = vld [vmem:[#allocation13 + $0x58c] sm:$0xff]
        %v3668 = vld [vmem:[#allocation13 + $0x594] sm:$0xff]
        %v3669 = vld [vmem:[#allocation13 + $0x59c] sm:$0xf]
        %v3670 = vld [vmem:[#allocation13 + $0x5a0] sm:$0xff]
        %v3671 = vld [vmem:[#allocation13 + $0x5a8] sm:$0xff]
        %v3672 = vld [vmem:[#allocation13 + $0x5b0] sm:$0xff]
        %v3673 = vld [vmem:[#allocation13 + $0x5b8] sm:$0xff]
        %v3674 = vld [vmem:[#allocation13 + $0x5c0] sm:$0xf]
        %v3675 = vld [vmem:[#allocation13 + $0x5c4] sm:$0xff]
        %v3676 = vld [vmem:[#allocation13 + $0x5cc] sm:$0xff]
        %v3677 = vld [vmem:[#allocation13 + $0x5d4] sm:$0xff]
        %v3678 = vld [vmem:[#allocation13 + $0x5dc] sm:$0xff]
        %v3679 = vld [vmem:[#allocation13 + $0x5e4] sm:$0xf]
        %v3680 = vld [vmem:[#allocation13 + $0x5e8] sm:$0xff]
        %v3681 = vld [vmem:[#allocation13 + $0x5f0] sm:$0xff]
        %v3682 = vld [vmem:[#allocation13 + $0x5f8] sm:$0xff]
        %v3683 = vld [vmem:[#allocation13 + $0x600] sm:$0xff]
        %v3684 = vld [vmem:[#allocation13 + $0x608] sm:$0xf]
        %v3685 = vld [vmem:[#allocation13 + $0x60c] sm:$0xff]
        %v3686 = vld [vmem:[#allocation13 + $0x614] sm:$0xff]
        %v3687 = vld [vmem:[#allocation13 + $0x61c] sm:$0xff]
        %v3688 = vld [vmem:[#allocation13 + $0x624] sm:$0xff]
        %v3689 = vld [vmem:[#allocation13 + $0x62c] sm:$0xf]
        %v3690 = vld [vmem:[#allocation13 + $0x630] sm:$0xff]
        %v3691 = vld [vmem:[#allocation13 + $0x638] sm:$0xff]
        %v3692 = vld [vmem:[#allocation13 + $0x640] sm:$0xff]
        %v3693 = vld [vmem:[#allocation13 + $0x648] sm:$0xff]
        %v3694 = vld [vmem:[#allocation13 + $0x650] sm:$0xf]
        %v3695 = vld [vmem:[#allocation13 + $0x654] sm:$0xff]
        %v3696 = vld [vmem:[#allocation13 + $0x65c] sm:$0xff]
        %v3697 = vld [vmem:[#allocation13 + $0x664] sm:$0xff]
        %v3698 = vld [vmem:[#allocation13 + $0x66c] sm:$0xff]
        %v3699 = vld [vmem:[#allocation13 + $0x674] sm:$0xf]
        %v3700 = vld [vmem:[#allocation13 + $0x678] sm:$0xff]
        %v3701 = vld [vmem:[#allocation13 + $0x680] sm:$0xff]
        %v3702 = vld [vmem:[#allocation13 + $0x688] sm:$0xff]
        %v3703 = vld [vmem:[#allocation13 + $0x690] sm:$0xff]
        %v3704 = vld [vmem:[#allocation13 + $0x698] sm:$0xf]
        %v3705 = vld [vmem:[#allocation13 + $0x69c] sm:$0xff]
        %v3706 = vld [vmem:[#allocation13 + $0x6a4] sm:$0xff]
        %v3707 = vld [vmem:[#allocation13 + $0x6ac] sm:$0xff]
        %v3708 = vld [vmem:[#allocation13 + $0x6b4] sm:$0xff]
        %v3709 = vld [vmem:[#allocation13 + $0x6bc] sm:$0xf]
        %v3710 = vld [vmem:[#allocation13 + $0x6c0] sm:$0xff]
        %v3711 = vld [vmem:[#allocation13 + $0x6c8] sm:$0xff]
        %v3712 = vld [vmem:[#allocation13 + $0x6d0] sm:$0xff]
        %v3713 = vld [vmem:[#allocation13 + $0x6d8] sm:$0xff]
        %v3714 = vld [vmem:[#allocation13 + $0x6e0] sm:$0xf]
        %v3715 = vld [vmem:[#allocation13 + $0x6e4] sm:$0xff]
        %v3716 = vld [vmem:[#allocation13 + $0x6ec] sm:$0xff]
        %v3717 = vld [vmem:[#allocation13 + $0x6f4] sm:$0xff]
        %v3718 = vld [vmem:[#allocation13 + $0x6fc] sm:$0xff]
        %v3719 = vld [vmem:[#allocation13 + $0x704] sm:$0xf]
        %v3720 = vld [vmem:[#allocation13 + $0x708] sm:$0xff]
        %v3721 = vld [vmem:[#allocation13 + $0x710] sm:$0xff]
        %v3722 = vld [vmem:[#allocation13 + $0x718] sm:$0xff]
        %v3723 = vld [vmem:[#allocation13 + $0x720] sm:$0xff]
        %v3724 = vld [vmem:[#allocation13 + $0x728] sm:$0xf]
        %v3725 = vld [vmem:[#allocation13 + $0x72c] sm:$0xff]
        %v3726 = vld [vmem:[#allocation13 + $0x734] sm:$0xff]
        %v3727 = vld [vmem:[#allocation13 + $0x73c] sm:$0xff]
        %v3728 = vld [vmem:[#allocation13 + $0x744] sm:$0xff]
        %v3729 = vld [vmem:[#allocation13 + $0x74c] sm:$0xf]
        %v3730 = vld [vmem:[#allocation13 + $0x750] sm:$0xff]
        %v3731 = vld [vmem:[#allocation13 + $0x758] sm:$0xff]
        %v3732 = vld [vmem:[#allocation13 + $0x760] sm:$0xff]
        %v3733 = vld [vmem:[#allocation13 + $0x768] sm:$0xff]
        %v3734 = vld [vmem:[#allocation13 + $0x770] sm:$0xf]
        %v3735 = vld [vmem:[#allocation13 + $0x774] sm:$0xff]
        %v3736 = vld [vmem:[#allocation13 + $0x77c] sm:$0xff]
        %v3737 = vld [vmem:[#allocation13 + $0x784] sm:$0xff]
        %v3738 = vld [vmem:[#allocation13 + $0x78c] sm:$0xff]
        %v3739 = vld [vmem:[#allocation13 + $0x794] sm:$0xf]
        %v3740 = vld [vmem:[#allocation13 + $0x798] sm:$0xff]
        %v3741 = vld [vmem:[#allocation13 + $0x7a0] sm:$0xff]
        %v3742 = vld [vmem:[#allocation13 + $0x7a8] sm:$0xff]
        %v3743 = vld [vmem:[#allocation13 + $0x7b0] sm:$0xff]
        %v3744 = vld [vmem:[#allocation13 + $0x7b8] sm:$0xf]
        %v3745 = vld [vmem:[#allocation13 + $0x7bc] sm:$0xff]
        %v3746 = vld [vmem:[#allocation13 + $0x7c4] sm:$0xff]
        %v3747 = vld [vmem:[#allocation13 + $0x7cc] sm:$0xff]
        %v3748 = vld [vmem:[#allocation13 + $0x7d4] sm:$0xff]
        %v3749 = vld [vmem:[#allocation13 + $0x7dc] sm:$0xf]
        %v3750 = vld [vmem:[#allocation13 + $0x7e0] sm:$0xff]
        %v3751 = vld [vmem:[#allocation13 + $0x7e8] sm:$0xff]
        %v3752 = vld [vmem:[#allocation13 + $0x7f0] sm:$0xff]
        %v3753 = vld [vmem:[#allocation13 + $0x7f8] sm:$0xff]
        %v3754 = vld [vmem:[#allocation13 + $0x800] sm:$0xf]
        %v3755 = vld [vmem:[#allocation13 + $0x804] sm:$0xff]
        %v3756 = vld [vmem:[#allocation13 + $0x80c] sm:$0xff]
        %v3757 = vld [vmem:[#allocation13 + $0x814] sm:$0xff]
        %v3758 = vld [vmem:[#allocation13 + $0x81c] sm:$0xff]
        %v3759 = vld [vmem:[#allocation13 + $0x824] sm:$0xf]
        %v3760 = vld [vmem:[#allocation13 + $0x828] sm:$0xff]
        %v3761 = vld [vmem:[#allocation13 + $0x830] sm:$0xff]
        %v3762 = vld [vmem:[#allocation13 + $0x838] sm:$0xff]
        %v3763 = vld [vmem:[#allocation13 + $0x840] sm:$0xff]
        %v3764 = vld [vmem:[#allocation13 + $0x848] sm:$0xf]
        %v3765 = vld [vmem:[#allocation13 + $0x84c] sm:$0xff]
        %v3766 = vld [vmem:[#allocation13 + $0x854] sm:$0xff]
        %v3767 = vld [vmem:[#allocation13 + $0x85c] sm:$0xff]
        %v3768 = vld [vmem:[#allocation13 + $0x864] sm:$0xff]
        %v3769 = vld [vmem:[#allocation13 + $0x86c] sm:$0xf]
        %v3770 = vld [vmem:[#allocation13 + $0x870] sm:$0xff]
        %v3771 = vld [vmem:[#allocation13 + $0x878] sm:$0xff]
        %v3772 = vld [vmem:[#allocation13 + $0x880] sm:$0xff]
        %v3773 = vld [vmem:[#allocation13 + $0x888] sm:$0xff]
        %v3774 = vld [vmem:[#allocation13 + $0x890] sm:$0xf]
        %v3775 = vld [vmem:[#allocation13 + $0x894] sm:$0xff]
        %v3776 = vld [vmem:[#allocation13 + $0x89c] sm:$0xff]
        %v3777 = vld [vmem:[#allocation13 + $0x8a4] sm:$0xff]
        %v3778 = vld [vmem:[#allocation13 + $0x8ac] sm:$0xff]
        %v3779 = vld [vmem:[#allocation13 + $0x8b4] sm:$0xf]
        %v3780 = vld [vmem:[#allocation13 + $0x8b8] sm:$0xff]
        %v3781 = vld [vmem:[#allocation13 + $0x8c0] sm:$0xff]
        %v3782 = vld [vmem:[#allocation13 + $0x8c8] sm:$0xff]
        %v3783 = vld [vmem:[#allocation13 + $0x8d0] sm:$0xff]
        %v3784 = vld [vmem:[#allocation13 + $0x8d8] sm:$0xf]
        %v3785 = vld [vmem:[#allocation13 + $0x8dc] sm:$0xff]
        %v3786 = vld [vmem:[#allocation13 + $0x8e4] sm:$0xff]
        %v3787 = vld [vmem:[#allocation13 + $0x8ec] sm:$0xff]
        %v3788 = vld [vmem:[#allocation13 + $0x8f4] sm:$0xff]
        %v3789 = vld [vmem:[#allocation13 + $0x8fc] sm:$0xf]
        %v3790 = vld [vmem:[#allocation14] sm:$0xff]
        %v3791 = vld [vmem:[#allocation14 + $0x8] sm:$0x1]
        %v3794 = vperm.slane %v3790, 0
        %v3795 = vperm.slane %v3790, 1
        %v3796 = vperm.slane %v3790, 2
        %v3797 = vperm.slane %v3790, 3
        %v3798 = vperm.slane %v3790, 4
        %v3799 = vperm.slane %v3790, 5
        %v3800 = vperm.slane %v3790, 6
        %v3801 = vperm.slane %v3790, 7
        %v3802 = vperm.slane %v3791, 0
        %v4132 = vunpack.c.l.b16 %v3470
        %v4133 = vunpack.c.h.b16 %v3470
        %v4134 = vunpack.c.l.b16 %v3471
        %v4135 = vunpack.c.h.b16 %v3471
        %v4136 = vunpack.c.l.b16 %v3472
        %v4137 = vunpack.c.h.b16 %v3472
        %v4138 = vunpack.c.l.b16 %v3473
        %v4139 = vunpack.c.h.b16 %v3473
        %v4140 = vunpack.c.l.b16 %v3474
        %v4141 = vunpack.c.l.b16 %v3475
        %v4142 = vunpack.c.h.b16 %v3475
        %v4143 = vunpack.c.l.b16 %v3476
        %v4144 = vunpack.c.h.b16 %v3476
        %v4145 = vunpack.c.l.b16 %v3477
        %v4146 = vunpack.c.h.b16 %v3477
        %v4147 = vunpack.c.l.b16 %v3478
        %v4148 = vunpack.c.h.b16 %v3478
        %v4149 = vunpack.c.l.b16 %v3479
        %v4150 = vunpack.c.l.b16 %v3480
        %v4151 = vunpack.c.h.b16 %v3480
        %v4152 = vunpack.c.l.b16 %v3481
        %v4153 = vunpack.c.h.b16 %v3481
        %v4154 = vunpack.c.l.b16 %v3482
        %v4155 = vunpack.c.h.b16 %v3482
        %v4156 = vunpack.c.l.b16 %v3483
        %v4157 = vunpack.c.h.b16 %v3483
        %v4158 = vunpack.c.l.b16 %v3484
        %v4159 = vunpack.c.l.b16 %v3485
        %v4160 = vunpack.c.h.b16 %v3485
        %v4161 = vunpack.c.l.b16 %v3486
        %v4162 = vunpack.c.h.b16 %v3486
        %v4163 = vunpack.c.l.b16 %v3487
        %v4164 = vunpack.c.h.b16 %v3487
        %v4165 = vunpack.c.l.b16 %v3488
        %v4166 = vunpack.c.h.b16 %v3488
        %v4167 = vunpack.c.l.b16 %v3489
        %v4168 = vunpack.c.l.b16 %v3490
        %v4169 = vunpack.c.h.b16 %v3490
        %v4170 = vunpack.c.l.b16 %v3491
        %v4171 = vunpack.c.h.b16 %v3491
        %v4172 = vunpack.c.l.b16 %v3492
        %v4173 = vunpack.c.h.b16 %v3492
        %v4174 = vunpack.c.l.b16 %v3493
        %v4175 = vunpack.c.h.b16 %v3493
        %v4176 = vunpack.c.l.b16 %v3494
        %v4177 = vunpack.c.l.b16 %v3495
        %v4178 = vunpack.c.h.b16 %v3495
        %v4179 = vunpack.c.l.b16 %v3496
        %v4180 = vunpack.c.h.b16 %v3496
        %v4181 = vunpack.c.l.b16 %v3497
        %v4182 = vunpack.c.h.b16 %v3497
        %v4183 = vunpack.c.l.b16 %v3498
        %v4184 = vunpack.c.h.b16 %v3498
        %v4185 = vunpack.c.l.b16 %v3499
        %v4186 = vunpack.c.l.b16 %v3500
        %v4187 = vunpack.c.h.b16 %v3500
        %v4188 = vunpack.c.l.b16 %v3501
        %v4189 = vunpack.c.h.b16 %v3501
        %v4190 = vunpack.c.l.b16 %v3502
        %v4191 = vunpack.c.h.b16 %v3502
        %v4192 = vunpack.c.l.b16 %v3503
        %v4193 = vunpack.c.h.b16 %v3503
        %v4194 = vunpack.c.l.b16 %v3504
        %v4195 = vunpack.c.l.b16 %v3505
        %v4196 = vunpack.c.h.b16 %v3505
        %v4197 = vunpack.c.l.b16 %v3506
        %v4198 = vunpack.c.h.b16 %v3506
        %v4199 = vunpack.c.l.b16 %v3507
        %v4200 = vunpack.c.h.b16 %v3507
        %v4201 = vunpack.c.l.b16 %v3508
        %v4202 = vunpack.c.h.b16 %v3508
        %v4203 = vunpack.c.l.b16 %v3509
        %v4204 = vunpack.c.l.b16 %v3510
        %v4205 = vunpack.c.h.b16 %v3510
        %v4206 = vunpack.c.l.b16 %v3511
        %v4207 = vunpack.c.h.b16 %v3511
        %v4208 = vunpack.c.l.b16 %v3512
        %v4209 = vunpack.c.h.b16 %v3512
        %v4210 = vunpack.c.l.b16 %v3513
        %v4211 = vunpack.c.h.b16 %v3513
        %v4212 = vunpack.c.l.b16 %v3514
        %v4213 = vunpack.c.l.b16 %v3515
        %v4214 = vunpack.c.h.b16 %v3515
        %v4215 = vunpack.c.l.b16 %v3516
        %v4216 = vunpack.c.h.b16 %v3516
        %v4217 = vunpack.c.l.b16 %v3517
        %v4218 = vunpack.c.h.b16 %v3517
        %v4219 = vunpack.c.l.b16 %v3518
        %v4220 = vunpack.c.h.b16 %v3518
        %v4221 = vunpack.c.l.b16 %v3519
        %v4222 = vunpack.c.l.b16 %v3520
        %v4223 = vunpack.c.h.b16 %v3520
        %v4224 = vunpack.c.l.b16 %v3521
        %v4225 = vunpack.c.h.b16 %v3521
        %v4226 = vunpack.c.l.b16 %v3522
        %v4227 = vunpack.c.h.b16 %v3522
        %v4228 = vunpack.c.l.b16 %v3523
        %v4229 = vunpack.c.h.b16 %v3523
        %v4230 = vunpack.c.l.b16 %v3524
        %v4231 = vunpack.c.l.b16 %v3525
        %v4232 = vunpack.c.h.b16 %v3525
        %v4233 = vunpack.c.l.b16 %v3526
        %v4234 = vunpack.c.h.b16 %v3526
        %v4235 = vunpack.c.l.b16 %v3527
        %v4236 = vunpack.c.h.b16 %v3527
        %v4237 = vunpack.c.l.b16 %v3528
        %v4238 = vunpack.c.h.b16 %v3528
        %v4239 = vunpack.c.l.b16 %v3529
        %v4240 = vunpack.c.l.b16 %v3530
        %v4241 = vunpack.c.h.b16 %v3530
        %v4242 = vunpack.c.l.b16 %v3531
        %v4243 = vunpack.c.h.b16 %v3531
        %v4244 = vunpack.c.l.b16 %v3532
        %v4245 = vunpack.c.h.b16 %v3532
        %v4246 = vunpack.c.l.b16 %v3533
        %v4247 = vunpack.c.h.b16 %v3533
        %v4248 = vunpack.c.l.b16 %v3534
        %v4249 = vunpack.c.l.b16 %v3535
        %v4250 = vunpack.c.h.b16 %v3535
        %v4251 = vunpack.c.l.b16 %v3536
        %v4252 = vunpack.c.h.b16 %v3536
        %v4253 = vunpack.c.l.b16 %v3537
        %v4254 = vunpack.c.h.b16 %v3537
        %v4255 = vunpack.c.l.b16 %v3538
        %v4256 = vunpack.c.h.b16 %v3538
        %v4257 = vunpack.c.l.b16 %v3539
        %v4258 = vunpack.c.l.b16 %v3540
        %v4259 = vunpack.c.h.b16 %v3540
        %v4260 = vunpack.c.l.b16 %v3541
        %v4261 = vunpack.c.h.b16 %v3541
        %v4262 = vunpack.c.l.b16 %v3542
        %v4263 = vunpack.c.h.b16 %v3542
        %v4264 = vunpack.c.l.b16 %v3543
        %v4265 = vunpack.c.h.b16 %v3543
        %v4266 = vunpack.c.l.b16 %v3544
        %v4267 = vunpack.c.l.b16 %v3545
        %v4268 = vunpack.c.h.b16 %v3545
        %v4269 = vunpack.c.l.b16 %v3546
        %v4270 = vunpack.c.h.b16 %v3546
        %v4271 = vunpack.c.l.b16 %v3547
        %v4272 = vunpack.c.h.b16 %v3547
        %v4273 = vunpack.c.l.b16 %v3548
        %v4274 = vunpack.c.h.b16 %v3548
        %v4275 = vunpack.c.l.b16 %v3549
        %v4276 = vunpack.c.l.b16 %v3550
        %v4277 = vunpack.c.h.b16 %v3550
        %v4278 = vunpack.c.l.b16 %v3551
        %v4279 = vunpack.c.h.b16 %v3551
        %v4280 = vunpack.c.l.b16 %v3552
        %v4281 = vunpack.c.h.b16 %v3552
        %v4282 = vunpack.c.l.b16 %v3553
        %v4283 = vunpack.c.h.b16 %v3553
        %v4284 = vunpack.c.l.b16 %v3554
        %v4285 = vunpack.c.l.b16 %v3555
        %v4286 = vunpack.c.h.b16 %v3555
        %v4287 = vunpack.c.l.b16 %v3556
        %v4288 = vunpack.c.h.b16 %v3556
        %v4289 = vunpack.c.l.b16 %v3557
        %v4290 = vunpack.c.h.b16 %v3557
        %v4291 = vunpack.c.l.b16 %v3558
        %v4292 = vunpack.c.h.b16 %v3558
        %v4293 = vunpack.c.l.b16 %v3559
        %v4294 = vunpack.c.l.b16 %v3560
        %v4295 = vunpack.c.h.b16 %v3560
        %v4296 = vunpack.c.l.b16 %v3561
        %v4297 = vunpack.c.h.b16 %v3561
        %v4298 = vunpack.c.l.b16 %v3562
        %v4299 = vunpack.c.h.b16 %v3562
        %v4300 = vunpack.c.l.b16 %v3563
        %v4301 = vunpack.c.h.b16 %v3563
        %v4302 = vunpack.c.l.b16 %v3564
        %v4303 = vunpack.c.l.b16 %v3565
        %v4304 = vunpack.c.h.b16 %v3565
        %v4305 = vunpack.c.l.b16 %v3566
        %v4306 = vunpack.c.h.b16 %v3566
        %v4307 = vunpack.c.l.b16 %v3567
        %v4308 = vunpack.c.h.b16 %v3567
        %v4309 = vunpack.c.l.b16 %v3568
        %v4310 = vunpack.c.h.b16 %v3568
        %v4311 = vunpack.c.l.b16 %v3569
        %v4312 = vunpack.c.l.b16 %v3570
        %v4313 = vunpack.c.h.b16 %v3570
        %v4314 = vunpack.c.l.b16 %v3571
        %v4315 = vunpack.c.h.b16 %v3571
        %v4316 = vunpack.c.l.b16 %v3572
        %v4317 = vunpack.c.h.b16 %v3572
        %v4318 = vunpack.c.l.b16 %v3573
        %v4319 = vunpack.c.h.b16 %v3573
        %v4320 = vunpack.c.l.b16 %v3574
        %v4321 = vunpack.c.l.b16 %v3575
        %v4322 = vunpack.c.h.b16 %v3575
        %v4323 = vunpack.c.l.b16 %v3576
        %v4324 = vunpack.c.h.b16 %v3576
        %v4325 = vunpack.c.l.b16 %v3577
        %v4326 = vunpack.c.h.b16 %v3577
        %v4327 = vunpack.c.l.b16 %v3578
        %v4328 = vunpack.c.h.b16 %v3578
        %v4329 = vunpack.c.l.b16 %v3579
        %v4330 = vunpack.c.l.b16 %v3580
        %v4331 = vunpack.c.h.b16 %v3580
        %v4332 = vunpack.c.l.b16 %v3581
        %v4333 = vunpack.c.h.b16 %v3581
        %v4334 = vunpack.c.l.b16 %v3582
        %v4335 = vunpack.c.h.b16 %v3582
        %v4336 = vunpack.c.l.b16 %v3583
        %v4337 = vunpack.c.h.b16 %v3583
        %v4338 = vunpack.c.l.b16 %v3584
        %v4339 = vunpack.c.l.b16 %v3585
        %v4340 = vunpack.c.h.b16 %v3585
        %v4341 = vunpack.c.l.b16 %v3586
        %v4342 = vunpack.c.h.b16 %v3586
        %v4343 = vunpack.c.l.b16 %v3587
        %v4344 = vunpack.c.h.b16 %v3587
        %v4345 = vunpack.c.l.b16 %v3588
        %v4346 = vunpack.c.h.b16 %v3588
        %v4347 = vunpack.c.l.b16 %v3589
        %v4348 = vunpack.c.l.b16 %v3590
        %v4349 = vunpack.c.h.b16 %v3590
        %v4350 = vunpack.c.l.b16 %v3591
        %v4351 = vunpack.c.h.b16 %v3591
        %v4352 = vunpack.c.l.b16 %v3592
        %v4353 = vunpack.c.h.b16 %v3592
        %v4354 = vunpack.c.l.b16 %v3593
        %v4355 = vunpack.c.h.b16 %v3593
        %v4356 = vunpack.c.l.b16 %v3594
        %v4357 = vunpack.c.l.b16 %v3595
        %v4358 = vunpack.c.h.b16 %v3595
        %v4359 = vunpack.c.l.b16 %v3596
        %v4360 = vunpack.c.h.b16 %v3596
        %v4361 = vunpack.c.l.b16 %v3597
        %v4362 = vunpack.c.h.b16 %v3597
        %v4363 = vunpack.c.l.b16 %v3598
        %v4364 = vunpack.c.h.b16 %v3598
        %v4365 = vunpack.c.l.b16 %v3599
        %v4366 = vunpack.c.l.b16 %v3600
        %v4367 = vunpack.c.h.b16 %v3600
        %v4368 = vunpack.c.l.b16 %v3601
        %v4369 = vunpack.c.h.b16 %v3601
        %v4370 = vunpack.c.l.b16 %v3602
        %v4371 = vunpack.c.h.b16 %v3602
        %v4372 = vunpack.c.l.b16 %v3603
        %v4373 = vunpack.c.h.b16 %v3603
        %v4374 = vunpack.c.l.b16 %v3604
        %v4375 = vunpack.c.l.b16 %v3605
        %v4376 = vunpack.c.h.b16 %v3605
        %v4377 = vunpack.c.l.b16 %v3606
        %v4378 = vunpack.c.h.b16 %v3606
        %v4379 = vunpack.c.l.b16 %v3607
        %v4380 = vunpack.c.h.b16 %v3607
        %v4381 = vunpack.c.l.b16 %v3608
        %v4382 = vunpack.c.h.b16 %v3608
        %v4383 = vunpack.c.l.b16 %v3609
        %v4384 = vunpack.c.l.b16 %v3610
        %v4385 = vunpack.c.h.b16 %v3610
        %v4386 = vunpack.c.l.b16 %v3611
        %v4387 = vunpack.c.h.b16 %v3611
        %v4388 = vunpack.c.l.b16 %v3612
        %v4389 = vunpack.c.h.b16 %v3612
        %v4390 = vunpack.c.l.b16 %v3613
        %v4391 = vunpack.c.h.b16 %v3613
        %v4392 = vunpack.c.l.b16 %v3614
        %v4393 = vunpack.c.l.b16 %v3615
        %v4394 = vunpack.c.h.b16 %v3615
        %v4395 = vunpack.c.l.b16 %v3616
        %v4396 = vunpack.c.h.b16 %v3616
        %v4397 = vunpack.c.l.b16 %v3617
        %v4398 = vunpack.c.h.b16 %v3617
        %v4399 = vunpack.c.l.b16 %v3618
        %v4400 = vunpack.c.h.b16 %v3618
        %v4401 = vunpack.c.l.b16 %v3619
        %v4402 = vunpack.c.l.b16 %v3620
        %v4403 = vunpack.c.h.b16 %v3620
        %v4404 = vunpack.c.l.b16 %v3621
        %v4405 = vunpack.c.h.b16 %v3621
        %v4406 = vunpack.c.l.b16 %v3622
        %v4407 = vunpack.c.h.b16 %v3622
        %v4408 = vunpack.c.l.b16 %v3623
        %v4409 = vunpack.c.h.b16 %v3623
        %v4410 = vunpack.c.l.b16 %v3624
        %v4411 = vunpack.c.l.b16 %v3625
        %v4412 = vunpack.c.h.b16 %v3625
        %v4413 = vunpack.c.l.b16 %v3626
        %v4414 = vunpack.c.h.b16 %v3626
        %v4415 = vunpack.c.l.b16 %v3627
        %v4416 = vunpack.c.h.b16 %v3627
        %v4417 = vunpack.c.l.b16 %v3628
        %v4418 = vunpack.c.h.b16 %v3628
        %v4419 = vunpack.c.l.b16 %v3629
        %v4420 = vunpack.c.l.b16 %v3630
        %v4421 = vunpack.c.h.b16 %v3630
        %v4422 = vunpack.c.l.b16 %v3631
        %v4423 = vunpack.c.h.b16 %v3631
        %v4424 = vunpack.c.l.b16 %v3632
        %v4425 = vunpack.c.h.b16 %v3632
        %v4426 = vunpack.c.l.b16 %v3633
        %v4427 = vunpack.c.h.b16 %v3633
        %v4428 = vunpack.c.l.b16 %v3634
        %v4429 = vunpack.c.l.b16 %v3635
        %v4430 = vunpack.c.h.b16 %v3635
        %v4431 = vunpack.c.l.b16 %v3636
        %v4432 = vunpack.c.h.b16 %v3636
        %v4433 = vunpack.c.l.b16 %v3637
        %v4434 = vunpack.c.h.b16 %v3637
        %v4435 = vunpack.c.l.b16 %v3638
        %v4436 = vunpack.c.h.b16 %v3638
        %v4437 = vunpack.c.l.b16 %v3639
        %v4438 = vunpack.c.l.b16 %v3640
        %v4439 = vunpack.c.h.b16 %v3640
        %v4440 = vunpack.c.l.b16 %v3641
        %v4441 = vunpack.c.h.b16 %v3641
        %v4442 = vunpack.c.l.b16 %v3642
        %v4443 = vunpack.c.h.b16 %v3642
        %v4444 = vunpack.c.l.b16 %v3643
        %v4445 = vunpack.c.h.b16 %v3643
        %v4446 = vunpack.c.l.b16 %v3644
        %v4447 = vunpack.c.l.b16 %v3645
        %v4448 = vunpack.c.h.b16 %v3645
        %v4449 = vunpack.c.l.b16 %v3646
        %v4450 = vunpack.c.h.b16 %v3646
        %v4451 = vunpack.c.l.b16 %v3647
        %v4452 = vunpack.c.h.b16 %v3647
        %v4453 = vunpack.c.l.b16 %v3648
        %v4454 = vunpack.c.h.b16 %v3648
        %v4455 = vunpack.c.l.b16 %v3649
        %v4456 = vunpack.c.l.b16 %v3650
        %v4457 = vunpack.c.h.b16 %v3650
        %v4458 = vunpack.c.l.b16 %v3651
        %v4459 = vunpack.c.h.b16 %v3651
        %v4460 = vunpack.c.l.b16 %v3652
        %v4461 = vunpack.c.h.b16 %v3652
        %v4462 = vunpack.c.l.b16 %v3653
        %v4463 = vunpack.c.h.b16 %v3653
        %v4464 = vunpack.c.l.b16 %v3654
        %v4465 = vunpack.c.l.b16 %v3655
        %v4466 = vunpack.c.h.b16 %v3655
        %v4467 = vunpack.c.l.b16 %v3656
        %v4468 = vunpack.c.h.b16 %v3656
        %v4469 = vunpack.c.l.b16 %v3657
        %v4470 = vunpack.c.h.b16 %v3657
        %v4471 = vunpack.c.l.b16 %v3658
        %v4472 = vunpack.c.h.b16 %v3658
        %v4473 = vunpack.c.l.b16 %v3659
        %v4474 = vunpack.c.l.b16 %v3660
        %v4475 = vunpack.c.h.b16 %v3660
        %v4476 = vunpack.c.l.b16 %v3661
        %v4477 = vunpack.c.h.b16 %v3661
        %v4478 = vunpack.c.l.b16 %v3662
        %v4479 = vunpack.c.h.b16 %v3662
        %v4480 = vunpack.c.l.b16 %v3663
        %v4481 = vunpack.c.h.b16 %v3663
        %v4482 = vunpack.c.l.b16 %v3664
        %v4483 = vunpack.c.l.b16 %v3665
        %v4484 = vunpack.c.h.b16 %v3665
        %v4485 = vunpack.c.l.b16 %v3666
        %v4486 = vunpack.c.h.b16 %v3666
        %v4487 = vunpack.c.l.b16 %v3667
        %v4488 = vunpack.c.h.b16 %v3667
        %v4489 = vunpack.c.l.b16 %v3668
        %v4490 = vunpack.c.h.b16 %v3668
        %v4491 = vunpack.c.l.b16 %v3669
        %v4492 = vunpack.c.l.b16 %v3670
        %v4493 = vunpack.c.h.b16 %v3670
        %v4494 = vunpack.c.l.b16 %v3671
        %v4495 = vunpack.c.h.b16 %v3671
        %v4496 = vunpack.c.l.b16 %v3672
        %v4497 = vunpack.c.h.b16 %v3672
        %v4498 = vunpack.c.l.b16 %v3673
        %v4499 = vunpack.c.h.b16 %v3673
        %v4500 = vunpack.c.l.b16 %v3674
        %v4501 = vunpack.c.l.b16 %v3675
        %v4502 = vunpack.c.h.b16 %v3675
        %v4503 = vunpack.c.l.b16 %v3676
        %v4504 = vunpack.c.h.b16 %v3676
        %v4505 = vunpack.c.l.b16 %v3677
        %v4506 = vunpack.c.h.b16 %v3677
        %v4507 = vunpack.c.l.b16 %v3678
        %v4508 = vunpack.c.h.b16 %v3678
        %v4509 = vunpack.c.l.b16 %v3679
        %v4510 = vunpack.c.l.b16 %v3680
        %v4511 = vunpack.c.h.b16 %v3680
        %v4512 = vunpack.c.l.b16 %v3681
        %v4513 = vunpack.c.h.b16 %v3681
        %v4514 = vunpack.c.l.b16 %v3682
        %v4515 = vunpack.c.h.b16 %v3682
        %v4516 = vunpack.c.l.b16 %v3683
        %v4517 = vunpack.c.h.b16 %v3683
        %v4518 = vunpack.c.l.b16 %v3684
        %v4519 = vunpack.c.l.b16 %v3685
        %v4520 = vunpack.c.h.b16 %v3685
        %v4521 = vunpack.c.l.b16 %v3686
        %v4522 = vunpack.c.h.b16 %v3686
        %v4523 = vunpack.c.l.b16 %v3687
        %v4524 = vunpack.c.h.b16 %v3687
        %v4525 = vunpack.c.l.b16 %v3688
        %v4526 = vunpack.c.h.b16 %v3688
        %v4527 = vunpack.c.l.b16 %v3689
        %v4528 = vunpack.c.l.b16 %v3690
        %v4529 = vunpack.c.h.b16 %v3690
        %v4530 = vunpack.c.l.b16 %v3691
        %v4531 = vunpack.c.h.b16 %v3691
        %v4532 = vunpack.c.l.b16 %v3692
        %v4533 = vunpack.c.h.b16 %v3692
        %v4534 = vunpack.c.l.b16 %v3693
        %v4535 = vunpack.c.h.b16 %v3693
        %v4536 = vunpack.c.l.b16 %v3694
        %v4537 = vunpack.c.l.b16 %v3695
        %v4538 = vunpack.c.h.b16 %v3695
        %v4539 = vunpack.c.l.b16 %v3696
        %v4540 = vunpack.c.h.b16 %v3696
        %v4541 = vunpack.c.l.b16 %v3697
        %v4542 = vunpack.c.h.b16 %v3697
        %v4543 = vunpack.c.l.b16 %v3698
        %v4544 = vunpack.c.h.b16 %v3698
        %v4545 = vunpack.c.l.b16 %v3699
        %v4546 = vunpack.c.l.b16 %v3700
        %v4547 = vunpack.c.h.b16 %v3700
        %v4548 = vunpack.c.l.b16 %v3701
        %v4549 = vunpack.c.h.b16 %v3701
        %v4550 = vunpack.c.l.b16 %v3702
        %v4551 = vunpack.c.h.b16 %v3702
        %v4552 = vunpack.c.l.b16 %v3703
        %v4553 = vunpack.c.h.b16 %v3703
        %v4554 = vunpack.c.l.b16 %v3704
        %v4555 = vunpack.c.l.b16 %v3705
        %v4556 = vunpack.c.h.b16 %v3705
        %v4557 = vunpack.c.l.b16 %v3706
        %v4558 = vunpack.c.h.b16 %v3706
        %v4559 = vunpack.c.l.b16 %v3707
        %v4560 = vunpack.c.h.b16 %v3707
        %v4561 = vunpack.c.l.b16 %v3708
        %v4562 = vunpack.c.h.b16 %v3708
        %v4563 = vunpack.c.l.b16 %v3709
        %v4564 = vunpack.c.l.b16 %v3710
        %v4565 = vunpack.c.h.b16 %v3710
        %v4566 = vunpack.c.l.b16 %v3711
        %v4567 = vunpack.c.h.b16 %v3711
        %v4568 = vunpack.c.l.b16 %v3712
        %v4569 = vunpack.c.h.b16 %v3712
        %v4570 = vunpack.c.l.b16 %v3713
        %v4571 = vunpack.c.h.b16 %v3713
        %v4572 = vunpack.c.l.b16 %v3714
        %v4573 = vunpack.c.l.b16 %v3715
        %v4574 = vunpack.c.h.b16 %v3715
        %v4575 = vunpack.c.l.b16 %v3716
        %v4576 = vunpack.c.h.b16 %v3716
        %v4577 = vunpack.c.l.b16 %v3717
        %v4578 = vunpack.c.h.b16 %v3717
        %v4579 = vunpack.c.l.b16 %v3718
        %v4580 = vunpack.c.h.b16 %v3718
        %v4581 = vunpack.c.l.b16 %v3719
        %v4582 = vunpack.c.l.b16 %v3720
        %v4583 = vunpack.c.h.b16 %v3720
        %v4584 = vunpack.c.l.b16 %v3721
        %v4585 = vunpack.c.h.b16 %v3721
        %v4586 = vunpack.c.l.b16 %v3722
        %v4587 = vunpack.c.h.b16 %v3722
        %v4588 = vunpack.c.l.b16 %v3723
        %v4589 = vunpack.c.h.b16 %v3723
        %v4590 = vunpack.c.l.b16 %v3724
        %v4591 = vunpack.c.l.b16 %v3725
        %v4592 = vunpack.c.h.b16 %v3725
        %v4593 = vunpack.c.l.b16 %v3726
        %v4594 = vunpack.c.h.b16 %v3726
        %v4595 = vunpack.c.l.b16 %v3727
        %v4596 = vunpack.c.h.b16 %v3727
        %v4597 = vunpack.c.l.b16 %v3728
        %v4598 = vunpack.c.h.b16 %v3728
        %v4599 = vunpack.c.l.b16 %v3729
        %v4600 = vunpack.c.l.b16 %v3730
        %v4601 = vunpack.c.h.b16 %v3730
        %v4602 = vunpack.c.l.b16 %v3731
        %v4603 = vunpack.c.h.b16 %v3731
        %v4604 = vunpack.c.l.b16 %v3732
        %v4605 = vunpack.c.h.b16 %v3732
        %v4606 = vunpack.c.l.b16 %v3733
        %v4607 = vunpack.c.h.b16 %v3733
        %v4608 = vunpack.c.l.b16 %v3734
        %v4609 = vunpack.c.l.b16 %v3735
        %v4610 = vunpack.c.h.b16 %v3735
        %v4611 = vunpack.c.l.b16 %v3736
        %v4612 = vunpack.c.h.b16 %v3736
        %v4613 = vunpack.c.l.b16 %v3737
        %v4614 = vunpack.c.h.b16 %v3737
        %v4615 = vunpack.c.l.b16 %v3738
        %v4616 = vunpack.c.h.b16 %v3738
        %v4617 = vunpack.c.l.b16 %v3739
        %v4618 = vunpack.c.l.b16 %v3740
        %v4619 = vunpack.c.h.b16 %v3740
        %v4620 = vunpack.c.l.b16 %v3741
        %v4621 = vunpack.c.h.b16 %v3741
        %v4622 = vunpack.c.l.b16 %v3742
        %v4623 = vunpack.c.h.b16 %v3742
        %v4624 = vunpack.c.l.b16 %v3743
        %v4625 = vunpack.c.h.b16 %v3743
        %v4626 = vunpack.c.l.b16 %v3744
        %v4627 = vunpack.c.l.b16 %v3745
        %v4628 = vunpack.c.h.b16 %v3745
        %v4629 = vunpack.c.l.b16 %v3746
        %v4630 = vunpack.c.h.b16 %v3746
        %v4631 = vunpack.c.l.b16 %v3747
        %v4632 = vunpack.c.h.b16 %v3747
        %v4633 = vunpack.c.l.b16 %v3748
        %v4634 = vunpack.c.h.b16 %v3748
        %v4635 = vunpack.c.l.b16 %v3749
        %v4636 = vunpack.c.l.b16 %v3750
        %v4637 = vunpack.c.h.b16 %v3750
        %v4638 = vunpack.c.l.b16 %v3751
        %v4639 = vunpack.c.h.b16 %v3751
        %v4640 = vunpack.c.l.b16 %v3752
        %v4641 = vunpack.c.h.b16 %v3752
        %v4642 = vunpack.c.l.b16 %v3753
        %v4643 = vunpack.c.h.b16 %v3753
        %v4644 = vunpack.c.l.b16 %v3754
        %v4645 = vunpack.c.l.b16 %v3755
        %v4646 = vunpack.c.h.b16 %v3755
        %v4647 = vunpack.c.l.b16 %v3756
        %v4648 = vunpack.c.h.b16 %v3756
        %v4649 = vunpack.c.l.b16 %v3757
        %v4650 = vunpack.c.h.b16 %v3757
        %v4651 = vunpack.c.l.b16 %v3758
        %v4652 = vunpack.c.h.b16 %v3758
        %v4653 = vunpack.c.l.b16 %v3759
        %v4654 = vunpack.c.l.b16 %v3760
        %v4655 = vunpack.c.h.b16 %v3760
        %v4656 = vunpack.c.l.b16 %v3761
        %v4657 = vunpack.c.h.b16 %v3761
        %v4658 = vunpack.c.l.b16 %v3762
        %v4659 = vunpack.c.h.b16 %v3762
        %v4660 = vunpack.c.l.b16 %v3763
        %v4661 = vunpack.c.h.b16 %v3763
        %v4662 = vunpack.c.l.b16 %v3764
        %v4663 = vunpack.c.l.b16 %v3765
        %v4664 = vunpack.c.h.b16 %v3765
        %v4665 = vunpack.c.l.b16 %v3766
        %v4666 = vunpack.c.h.b16 %v3766
        %v4667 = vunpack.c.l.b16 %v3767
        %v4668 = vunpack.c.h.b16 %v3767
        %v4669 = vunpack.c.l.b16 %v3768
        %v4670 = vunpack.c.h.b16 %v3768
        %v4671 = vunpack.c.l.b16 %v3769
        %v4672 = vunpack.c.l.b16 %v3770
        %v4673 = vunpack.c.h.b16 %v3770
        %v4674 = vunpack.c.l.b16 %v3771
        %v4675 = vunpack.c.h.b16 %v3771
        %v4676 = vunpack.c.l.b16 %v3772
        %v4677 = vunpack.c.h.b16 %v3772
        %v4678 = vunpack.c.l.b16 %v3773
        %v4679 = vunpack.c.h.b16 %v3773
        %v4680 = vunpack.c.l.b16 %v3774
        %v4681 = vunpack.c.l.b16 %v3775
        %v4682 = vunpack.c.h.b16 %v3775
        %v4683 = vunpack.c.l.b16 %v3776
        %v4684 = vunpack.c.h.b16 %v3776
        %v4685 = vunpack.c.l.b16 %v3777
        %v4686 = vunpack.c.h.b16 %v3777
        %v4687 = vunpack.c.l.b16 %v3778
        %v4688 = vunpack.c.h.b16 %v3778
        %v4689 = vunpack.c.l.b16 %v3779
        %v4690 = vunpack.c.l.b16 %v3780
        %v4691 = vunpack.c.h.b16 %v3780
        %v4692 = vunpack.c.l.b16 %v3781
        %v4693 = vunpack.c.h.b16 %v3781
        %v4694 = vunpack.c.l.b16 %v3782
        %v4695 = vunpack.c.h.b16 %v3782
        %v4696 = vunpack.c.l.b16 %v3783
        %v4697 = vunpack.c.h.b16 %v3783
        %v4698 = vunpack.c.l.b16 %v3784
        %v4699 = vunpack.c.l.b16 %v3785
        %v4700 = vunpack.c.h.b16 %v3785
        %v4701 = vunpack.c.l.b16 %v3786
        %v4702 = vunpack.c.h.b16 %v3786
        %v4703 = vunpack.c.l.b16 %v3787
        %v4704 = vunpack.c.h.b16 %v3787
        %v4705 = vunpack.c.l.b16 %v3788
        %v4706 = vunpack.c.h.b16 %v3788
        %v4707 = vunpack.c.l.b16 %v3789
        %v4708 = vpack.c.b16 %v4141, %v4132
        %v4709 = vpack.c.b16 %v4142, %v4133
        %v4710 = vpack.c.b16 %v4143, %v4134
        %v4711 = vpack.c.b16 %v4144, %v4135
        %v4712 = vpack.c.b16 %v4145, %v4136
        %v4713 = vpack.c.b16 %v4146, %v4137
        %v4714 = vpack.c.b16 %v4147, %v4138
        %v4715 = vpack.c.b16 %v4148, %v4139
        %v4716 = vpack.c.b16 %v4149, %v4140
        %v4717 = vpack.c.b16 %v4159, %v4150
        %v4718 = vpack.c.b16 %v4160, %v4151
        %v4719 = vpack.c.b16 %v4161, %v4152
        %v4720 = vpack.c.b16 %v4162, %v4153
        %v4721 = vpack.c.b16 %v4163, %v4154
        %v4722 = vpack.c.b16 %v4164, %v4155
        %v4723 = vpack.c.b16 %v4165, %v4156
        %v4724 = vpack.c.b16 %v4166, %v4157
        %v4725 = vpack.c.b16 %v4167, %v4158
        %v4726 = vpack.c.b16 %v4177, %v4168
        %v4727 = vpack.c.b16 %v4178, %v4169
        %v4728 = vpack.c.b16 %v4179, %v4170
        %v4729 = vpack.c.b16 %v4180, %v4171
        %v4730 = vpack.c.b16 %v4181, %v4172
        %v4731 = vpack.c.b16 %v4182, %v4173
        %v4732 = vpack.c.b16 %v4183, %v4174
        %v4733 = vpack.c.b16 %v4184, %v4175
        %v4734 = vpack.c.b16 %v4185, %v4176
        %v4735 = vpack.c.b16 %v4195, %v4186
        %v4736 = vpack.c.b16 %v4196, %v4187
        %v4737 = vpack.c.b16 %v4197, %v4188
        %v4738 = vpack.c.b16 %v4198, %v4189
        %v4739 = vpack.c.b16 %v4199, %v4190
        %v4740 = vpack.c.b16 %v4200, %v4191
        %v4741 = vpack.c.b16 %v4201, %v4192
        %v4742 = vpack.c.b16 %v4202, %v4193
        %v4743 = vpack.c.b16 %v4203, %v4194
        %v4744 = vpack.c.b16 %v4213, %v4204
        %v4745 = vpack.c.b16 %v4214, %v4205
        %v4746 = vpack.c.b16 %v4215, %v4206
        %v4747 = vpack.c.b16 %v4216, %v4207
        %v4748 = vpack.c.b16 %v4217, %v4208
        %v4749 = vpack.c.b16 %v4218, %v4209
        %v4750 = vpack.c.b16 %v4219, %v4210
        %v4751 = vpack.c.b16 %v4220, %v4211
        %v4752 = vpack.c.b16 %v4221, %v4212
        %v4753 = vpack.c.b16 %v4231, %v4222
        %v4754 = vpack.c.b16 %v4232, %v4223
        %v4755 = vpack.c.b16 %v4233, %v4224
        %v4756 = vpack.c.b16 %v4234, %v4225
        %v4757 = vpack.c.b16 %v4235, %v4226
        %v4758 = vpack.c.b16 %v4236, %v4227
        %v4759 = vpack.c.b16 %v4237, %v4228
        %v4760 = vpack.c.b16 %v4238, %v4229
        %v4761 = vpack.c.b16 %v4239, %v4230
        %v4762 = vpack.c.b16 %v4249, %v4240
        %v4763 = vpack.c.b16 %v4250, %v4241
        %v4764 = vpack.c.b16 %v4251, %v4242
        %v4765 = vpack.c.b16 %v4252, %v4243
        %v4766 = vpack.c.b16 %v4253, %v4244
        %v4767 = vpack.c.b16 %v4254, %v4245
        %v4768 = vpack.c.b16 %v4255, %v4246
        %v4769 = vpack.c.b16 %v4256, %v4247
        %v4770 = vpack.c.b16 %v4257, %v4248
        %v4771 = vpack.c.b16 %v4267, %v4258
        %v4772 = vpack.c.b16 %v4268, %v4259
        %v4773 = vpack.c.b16 %v4269, %v4260
        %v4774 = vpack.c.b16 %v4270, %v4261
        %v4775 = vpack.c.b16 %v4271, %v4262
        %v4776 = vpack.c.b16 %v4272, %v4263
        %v4777 = vpack.c.b16 %v4273, %v4264
        %v4778 = vpack.c.b16 %v4274, %v4265
        %v4779 = vpack.c.b16 %v4275, %v4266
        %v4780 = vpack.c.b16 %v4285, %v4276
        %v4781 = vpack.c.b16 %v4286, %v4277
        %v4782 = vpack.c.b16 %v4287, %v4278
        %v4783 = vpack.c.b16 %v4288, %v4279
        %v4784 = vpack.c.b16 %v4289, %v4280
        %v4785 = vpack.c.b16 %v4290, %v4281
        %v4786 = vpack.c.b16 %v4291, %v4282
        %v4787 = vpack.c.b16 %v4292, %v4283
        %v4788 = vpack.c.b16 %v4293, %v4284
        %v4789 = vpack.c.b16 %v4303, %v4294
        %v4790 = vpack.c.b16 %v4304, %v4295
        %v4791 = vpack.c.b16 %v4305, %v4296
        %v4792 = vpack.c.b16 %v4306, %v4297
        %v4793 = vpack.c.b16 %v4307, %v4298
        %v4794 = vpack.c.b16 %v4308, %v4299
        %v4795 = vpack.c.b16 %v4309, %v4300
        %v4796 = vpack.c.b16 %v4310, %v4301
        %v4797 = vpack.c.b16 %v4311, %v4302
        %v4798 = vpack.c.b16 %v4321, %v4312
        %v4799 = vpack.c.b16 %v4322, %v4313
        %v4800 = vpack.c.b16 %v4323, %v4314
        %v4801 = vpack.c.b16 %v4324, %v4315
        %v4802 = vpack.c.b16 %v4325, %v4316
        %v4803 = vpack.c.b16 %v4326, %v4317
        %v4804 = vpack.c.b16 %v4327, %v4318
        %v4805 = vpack.c.b16 %v4328, %v4319
        %v4806 = vpack.c.b16 %v4329, %v4320
        %v4807 = vpack.c.b16 %v4339, %v4330
        %v4808 = vpack.c.b16 %v4340, %v4331
        %v4809 = vpack.c.b16 %v4341, %v4332
        %v4810 = vpack.c.b16 %v4342, %v4333
        %v4811 = vpack.c.b16 %v4343, %v4334
        %v4812 = vpack.c.b16 %v4344, %v4335
        %v4813 = vpack.c.b16 %v4345, %v4336
        %v4814 = vpack.c.b16 %v4346, %v4337
        %v4815 = vpack.c.b16 %v4347, %v4338
        %v4816 = vpack.c.b16 %v4357, %v4348
        %v4817 = vpack.c.b16 %v4358, %v4349
        %v4818 = vpack.c.b16 %v4359, %v4350
        %v4819 = vpack.c.b16 %v4360, %v4351
        %v4820 = vpack.c.b16 %v4361, %v4352
        %v4821 = vpack.c.b16 %v4362, %v4353
        %v4822 = vpack.c.b16 %v4363, %v4354
        %v4823 = vpack.c.b16 %v4364, %v4355
        %v4824 = vpack.c.b16 %v4365, %v4356
        %v4825 = vpack.c.b16 %v4375, %v4366
        %v4826 = vpack.c.b16 %v4376, %v4367
        %v4827 = vpack.c.b16 %v4377, %v4368
        %v4828 = vpack.c.b16 %v4378, %v4369
        %v4829 = vpack.c.b16 %v4379, %v4370
        %v4830 = vpack.c.b16 %v4380, %v4371
        %v4831 = vpack.c.b16 %v4381, %v4372
        %v4832 = vpack.c.b16 %v4382, %v4373
        %v4833 = vpack.c.b16 %v4383, %v4374
        %v4834 = vpack.c.b16 %v4393, %v4384
        %v4835 = vpack.c.b16 %v4394, %v4385
        %v4836 = vpack.c.b16 %v4395, %v4386
        %v4837 = vpack.c.b16 %v4396, %v4387
        %v4838 = vpack.c.b16 %v4397, %v4388
        %v4839 = vpack.c.b16 %v4398, %v4389
        %v4840 = vpack.c.b16 %v4399, %v4390
        %v4841 = vpack.c.b16 %v4400, %v4391
        %v4842 = vpack.c.b16 %v4401, %v4392
        %v4843 = vpack.c.b16 %v4411, %v4402
        %v4844 = vpack.c.b16 %v4412, %v4403
        %v4845 = vpack.c.b16 %v4413, %v4404
        %v4846 = vpack.c.b16 %v4414, %v4405
        %v4847 = vpack.c.b16 %v4415, %v4406
        %v4848 = vpack.c.b16 %v4416, %v4407
        %v4849 = vpack.c.b16 %v4417, %v4408
        %v4850 = vpack.c.b16 %v4418, %v4409
        %v4851 = vpack.c.b16 %v4419, %v4410
        %v4852 = vpack.c.b16 %v4429, %v4420
        %v4853 = vpack.c.b16 %v4430, %v4421
        %v4854 = vpack.c.b16 %v4431, %v4422
        %v4855 = vpack.c.b16 %v4432, %v4423
        %v4856 = vpack.c.b16 %v4433, %v4424
        %v4857 = vpack.c.b16 %v4434, %v4425
        %v4858 = vpack.c.b16 %v4435, %v4426
        %v4859 = vpack.c.b16 %v4436, %v4427
        %v4860 = vpack.c.b16 %v4437, %v4428
        %v4861 = vpack.c.b16 %v4447, %v4438
        %v4862 = vpack.c.b16 %v4448, %v4439
        %v4863 = vpack.c.b16 %v4449, %v4440
        %v4864 = vpack.c.b16 %v4450, %v4441
        %v4865 = vpack.c.b16 %v4451, %v4442
        %v4866 = vpack.c.b16 %v4452, %v4443
        %v4867 = vpack.c.b16 %v4453, %v4444
        %v4868 = vpack.c.b16 %v4454, %v4445
        %v4869 = vpack.c.b16 %v4455, %v4446
        %v4870 = vpack.c.b16 %v4465, %v4456
        %v4871 = vpack.c.b16 %v4466, %v4457
        %v4872 = vpack.c.b16 %v4467, %v4458
        %v4873 = vpack.c.b16 %v4468, %v4459
        %v4874 = vpack.c.b16 %v4469, %v4460
        %v4875 = vpack.c.b16 %v4470, %v4461
        %v4876 = vpack.c.b16 %v4471, %v4462
        %v4877 = vpack.c.b16 %v4472, %v4463
        %v4878 = vpack.c.b16 %v4473, %v4464
        %v4879 = vpack.c.b16 %v4483, %v4474
        %v4880 = vpack.c.b16 %v4484, %v4475
        %v4881 = vpack.c.b16 %v4485, %v4476
        %v4882 = vpack.c.b16 %v4486, %v4477
        %v4883 = vpack.c.b16 %v4487, %v4478
        %v4884 = vpack.c.b16 %v4488, %v4479
        %v4885 = vpack.c.b16 %v4489, %v4480
        %v4886 = vpack.c.b16 %v4490, %v4481
        %v4887 = vpack.c.b16 %v4491, %v4482
        %v4888 = vpack.c.b16 %v4501, %v4492
        %v4889 = vpack.c.b16 %v4502, %v4493
        %v4890 = vpack.c.b16 %v4503, %v4494
        %v4891 = vpack.c.b16 %v4504, %v4495
        %v4892 = vpack.c.b16 %v4505, %v4496
        %v4893 = vpack.c.b16 %v4506, %v4497
        %v4894 = vpack.c.b16 %v4507, %v4498
        %v4895 = vpack.c.b16 %v4508, %v4499
        %v4896 = vpack.c.b16 %v4509, %v4500
        %v4897 = vpack.c.b16 %v4519, %v4510
        %v4898 = vpack.c.b16 %v4520, %v4511
        %v4899 = vpack.c.b16 %v4521, %v4512
        %v4900 = vpack.c.b16 %v4522, %v4513
        %v4901 = vpack.c.b16 %v4523, %v4514
        %v4902 = vpack.c.b16 %v4524, %v4515
        %v4903 = vpack.c.b16 %v4525, %v4516
        %v4904 = vpack.c.b16 %v4526, %v4517
        %v4905 = vpack.c.b16 %v4527, %v4518
        %v4906 = vpack.c.b16 %v4537, %v4528
        %v4907 = vpack.c.b16 %v4538, %v4529
        %v4908 = vpack.c.b16 %v4539, %v4530
        %v4909 = vpack.c.b16 %v4540, %v4531
        %v4910 = vpack.c.b16 %v4541, %v4532
        %v4911 = vpack.c.b16 %v4542, %v4533
        %v4912 = vpack.c.b16 %v4543, %v4534
        %v4913 = vpack.c.b16 %v4544, %v4535
        %v4914 = vpack.c.b16 %v4545, %v4536
        %v4915 = vpack.c.b16 %v4555, %v4546
        %v4916 = vpack.c.b16 %v4556, %v4547
        %v4917 = vpack.c.b16 %v4557, %v4548
        %v4918 = vpack.c.b16 %v4558, %v4549
        %v4919 = vpack.c.b16 %v4559, %v4550
        %v4920 = vpack.c.b16 %v4560, %v4551
        %v4921 = vpack.c.b16 %v4561, %v4552
        %v4922 = vpack.c.b16 %v4562, %v4553
        %v4923 = vpack.c.b16 %v4563, %v4554
        %v4924 = vpack.c.b16 %v4573, %v4564
        %v4925 = vpack.c.b16 %v4574, %v4565
        %v4926 = vpack.c.b16 %v4575, %v4566
        %v4927 = vpack.c.b16 %v4576, %v4567
        %v4928 = vpack.c.b16 %v4577, %v4568
        %v4929 = vpack.c.b16 %v4578, %v4569
        %v4930 = vpack.c.b16 %v4579, %v4570
        %v4931 = vpack.c.b16 %v4580, %v4571
        %v4932 = vpack.c.b16 %v4581, %v4572
        %v4933 = vpack.c.b16 %v4591, %v4582
        %v4934 = vpack.c.b16 %v4592, %v4583
        %v4935 = vpack.c.b16 %v4593, %v4584
        %v4936 = vpack.c.b16 %v4594, %v4585
        %v4937 = vpack.c.b16 %v4595, %v4586
        %v4938 = vpack.c.b16 %v4596, %v4587
        %v4939 = vpack.c.b16 %v4597, %v4588
        %v4940 = vpack.c.b16 %v4598, %v4589
        %v4941 = vpack.c.b16 %v4599, %v4590
        %v4942 = vpack.c.b16 %v4609, %v4600
        %v4943 = vpack.c.b16 %v4610, %v4601
        %v4944 = vpack.c.b16 %v4611, %v4602
        %v4945 = vpack.c.b16 %v4612, %v4603
        %v4946 = vpack.c.b16 %v4613, %v4604
        %v4947 = vpack.c.b16 %v4614, %v4605
        %v4948 = vpack.c.b16 %v4615, %v4606
        %v4949 = vpack.c.b16 %v4616, %v4607
        %v4950 = vpack.c.b16 %v4617, %v4608
        %v4951 = vpack.c.b16 %v4627, %v4618
        %v4952 = vpack.c.b16 %v4628, %v4619
        %v4953 = vpack.c.b16 %v4629, %v4620
        %v4954 = vpack.c.b16 %v4630, %v4621
        %v4955 = vpack.c.b16 %v4631, %v4622
        %v4956 = vpack.c.b16 %v4632, %v4623
        %v4957 = vpack.c.b16 %v4633, %v4624
        %v4958 = vpack.c.b16 %v4634, %v4625
        %v4959 = vpack.c.b16 %v4635, %v4626
        %v4960 = vpack.c.b16 %v4645, %v4636
        %v4961 = vpack.c.b16 %v4646, %v4637
        %v4962 = vpack.c.b16 %v4647, %v4638
        %v4963 = vpack.c.b16 %v4648, %v4639
        %v4964 = vpack.c.b16 %v4649, %v4640
        %v4965 = vpack.c.b16 %v4650, %v4641
        %v4966 = vpack.c.b16 %v4651, %v4642
        %v4967 = vpack.c.b16 %v4652, %v4643
        %v4968 = vpack.c.b16 %v4653, %v4644
        %v4969 = vpack.c.b16 %v4663, %v4654
        %v4970 = vpack.c.b16 %v4664, %v4655
        %v4971 = vpack.c.b16 %v4665, %v4656
        %v4972 = vpack.c.b16 %v4666, %v4657
        %v4973 = vpack.c.b16 %v4667, %v4658
        %v4974 = vpack.c.b16 %v4668, %v4659
        %v4975 = vpack.c.b16 %v4669, %v4660
        %v4976 = vpack.c.b16 %v4670, %v4661
        %v4977 = vpack.c.b16 %v4671, %v4662
        %v4978 = vpack.c.b16 %v4681, %v4672
        %v4979 = vpack.c.b16 %v4682, %v4673
        %v4980 = vpack.c.b16 %v4683, %v4674
        %v4981 = vpack.c.b16 %v4684, %v4675
        %v4982 = vpack.c.b16 %v4685, %v4676
        %v4983 = vpack.c.b16 %v4686, %v4677
        %v4984 = vpack.c.b16 %v4687, %v4678
        %v4985 = vpack.c.b16 %v4688, %v4679
        %v4986 = vpack.c.b16 %v4689, %v4680
        %v4987 = vpack.c.b16 %v4699, %v4690
        %v4988 = vpack.c.b16 %v4700, %v4691
        %v4989 = vpack.c.b16 %v4701, %v4692
        %v4990 = vpack.c.b16 %v4702, %v4693
        %v4991 = vpack.c.b16 %v4703, %v4694
        %v4992 = vpack.c.b16 %v4704, %v4695
        %v4993 = vpack.c.b16 %v4705, %v4696
        %v4994 = vpack.c.b16 %v4706, %v4697
        %v4995 = vpack.c.b16 %v4707, %v4698
        %5284 = vmatpush.bf16.msra.mxu0 %v4771
        %5285 = vmatpush.bf16.msra.mxu0 %v4762
        %5286 = vmatpush.bf16.msra.mxu0 %v4753
        %5287 = vmatpush.bf16.msra.mxu0 %v4744
        %5288 = vmatpush.bf16.msra.mxu0 %v4735
        %5289 = vmatpush.bf16.msra.mxu0 %v4726
        %5290 = vmatpush.bf16.msra.mxu0 %v4717
        %5291 = vmatpush.bf16.msra.mxu0 %v4708
        %5292 = vmatmul.bf16.gmra.mxu0 %v3466
        %v5293 = vpop.f32.mrf.mxu0
        %v5294 = vadd.f32 %v3794, %v5293
        %v5295 = vpop.f32.mrf.mxu0
        %v5296 = vadd.f32 %v3794, %v5295
        %5297 = vdwg.mxu0
        %5298 = vmatpush.bf16.msra.mxu0 %v4843
        %5299 = vmatpush.bf16.msra.mxu0 %v4834
        %5300 = vmatpush.bf16.msra.mxu0 %v4825
        %5301 = vmatpush.bf16.msra.mxu0 %v4816
        %5302 = vmatpush.bf16.msra.mxu0 %v4807
        %5303 = vmatpush.bf16.msra.mxu0 %v4798
        %5304 = vmatpush.bf16.msra.mxu0 %v4789
        %5305 = vmatpush.bf16.msra.mxu0 %v4780
        %5306 = vmatmul.bf16.gmra.mxu0 %v3467
        %v5307 = vpop.f32.mrf.mxu0
        %v5308 = vadd.f32 %v5294, %v5307
        %v5309 = vpop.f32.mrf.mxu0
        %v5310 = vadd.f32 %v5296, %v5309
        %5311 = vdwg.mxu0
        %5312 = vmatpush.bf16.msra.mxu0 %v4915
        %5313 = vmatpush.bf16.msra.mxu0 %v4906
        %5314 = vmatpush.bf16.msra.mxu0 %v4897
        %5315 = vmatpush.bf16.msra.mxu0 %v4888
        %5316 = vmatpush.bf16.msra.mxu0 %v4879
        %5317 = vmatpush.bf16.msra.mxu0 %v4870
        %5318 = vmatpush.bf16.msra.mxu0 %v4861
        %5319 = vmatpush.bf16.msra.mxu0 %v4852
        %5320 = vmatmul.bf16.gmra.mxu0 %v3468
        %v5321 = vpop.f32.mrf.mxu0
        %v5322 = vadd.f32 %v5308, %v5321
        %v5323 = vpop.f32.mrf.mxu0
        %v5324 = vadd.f32 %v5310, %v5323
        %5325 = vdwg.mxu0
        %5326 = vmatpush.bf16.msra.mxu0 %v4987
        %5327 = vmatpush.bf16.msra.mxu0 %v4978
        %5328 = vmatpush.bf16.msra.mxu0 %v4969
        %5329 = vmatpush.bf16.msra.mxu0 %v4960
        %5330 = vmatpush.bf16.msra.mxu0 %v4951
        %5331 = vmatpush.bf16.msra.mxu0 %v4942
        %5332 = vmatpush.bf16.msra.mxu0 %v4933
        %5333 = vmatpush.bf16.msra.mxu0 %v4924
        %5334 = vmatmul.bf16.gmra.mxu0 %v3469
        %v5335 = vpop.f32.mrf.mxu0
        %v5336 = vadd.f32 %v5322, %v5335
        %v5337 = vpop.f32.mrf.mxu0
        %v5338 = vadd.f32 %v5324, %v5337
        %5339 = vdwg.mxu0
        %5340 = vmatpush.bf16.msra.mxu0 %v4772
        %5341 = vmatpush.bf16.msra.mxu0 %v4763
        %5342 = vmatpush.bf16.msra.mxu0 %v4754
        %5343 = vmatpush.bf16.msra.mxu0 %v4745
        %5344 = vmatpush.bf16.msra.mxu0 %v4736
        %5345 = vmatpush.bf16.msra.mxu0 %v4727
        %5346 = vmatpush.bf16.msra.mxu0 %v4718
        %5347 = vmatpush.bf16.msra.mxu0 %v4709
        %5348 = vmatmul.bf16.gmra.mxu0 %v3466
        %v5349 = vpop.f32.mrf.mxu0
        %v5350 = vadd.f32 %v3795, %v5349
        %v5351 = vpop.f32.mrf.mxu0
        %v5352 = vadd.f32 %v3795, %v5351
        %5353 = vdwg.mxu0
        %5354 = vmatpush.bf16.msra.mxu0 %v4844
        %5355 = vmatpush.bf16.msra.mxu0 %v4835
        %5356 = vmatpush.bf16.msra.mxu0 %v4826
        %5357 = vmatpush.bf16.msra.mxu0 %v4817
        %5358 = vmatpush.bf16.msra.mxu0 %v4808
        %5359 = vmatpush.bf16.msra.mxu0 %v4799
        %5360 = vmatpush.bf16.msra.mxu0 %v4790
        %5361 = vmatpush.bf16.msra.mxu0 %v4781
        %5362 = vmatmul.bf16.gmra.mxu0 %v3467
        %v5363 = vpop.f32.mrf.mxu0
        %v5364 = vadd.f32 %v5350, %v5363
        %v5365 = vpop.f32.mrf.mxu0
        %v5366 = vadd.f32 %v5352, %v5365
        %5367 = vdwg.mxu0
        %5368 = vmatpush.bf16.msra.mxu0 %v4916
        %5369 = vmatpush.bf16.msra.mxu0 %v4907
        %5370 = vmatpush.bf16.msra.mxu0 %v4898
        %5371 = vmatpush.bf16.msra.mxu0 %v4889
        %5372 = vmatpush.bf16.msra.mxu0 %v4880
        %5373 = vmatpush.bf16.msra.mxu0 %v4871
        %5374 = vmatpush.bf16.msra.mxu0 %v4862
        %5375 = vmatpush.bf16.msra.mxu0 %v4853
        %5376 = vmatmul.bf16.gmra.mxu0 %v3468
        %v5377 = vpop.f32.mrf.mxu0
        %v5378 = vadd.f32 %v5364, %v5377
        %v5379 = vpop.f32.mrf.mxu0
        %v5380 = vadd.f32 %v5366, %v5379
        %5381 = vdwg.mxu0
        %5382 = vmatpush.bf16.msra.mxu0 %v4988
        %5383 = vmatpush.bf16.msra.mxu0 %v4979
        %5384 = vmatpush.bf16.msra.mxu0 %v4970
        %5385 = vmatpush.bf16.msra.mxu0 %v4961
        %5386 = vmatpush.bf16.msra.mxu0 %v4952
        %5387 = vmatpush.bf16.msra.mxu0 %v4943
        %5388 = vmatpush.bf16.msra.mxu0 %v4934
        %5389 = vmatpush.bf16.msra.mxu0 %v4925
        %5390 = vmatmul.bf16.gmra.mxu0 %v3469
        %v5391 = vpop.f32.mrf.mxu0
        %v5392 = vadd.f32 %v5378, %v5391
        %v5393 = vpop.f32.mrf.mxu0
        %v5394 = vadd.f32 %v5380, %v5393
        %5395 = vdwg.mxu0
        %5396 = vmatpush.bf16.msra.mxu0 %v4773
        %5397 = vmatpush.bf16.msra.mxu0 %v4764
        %5398 = vmatpush.bf16.msra.mxu0 %v4755
        %5399 = vmatpush.bf16.msra.mxu0 %v4746
        %5400 = vmatpush.bf16.msra.mxu0 %v4737
        %5401 = vmatpush.bf16.msra.mxu0 %v4728
        %5402 = vmatpush.bf16.msra.mxu0 %v4719
        %5403 = vmatpush.bf16.msra.mxu0 %v4710
        %5404 = vmatmul.bf16.gmra.mxu0 %v3466
        %v5405 = vpop.f32.mrf.mxu0
        %v5406 = vadd.f32 %v3796, %v5405
        %v5407 = vpop.f32.mrf.mxu0
        %v5408 = vadd.f32 %v3796, %v5407
        %5409 = vdwg.mxu0
        %5410 = vmatpush.bf16.msra.mxu0 %v4845
        %5411 = vmatpush.bf16.msra.mxu0 %v4836
        %5412 = vmatpush.bf16.msra.mxu0 %v4827
        %5413 = vmatpush.bf16.msra.mxu0 %v4818
        %5414 = vmatpush.bf16.msra.mxu0 %v4809
        %5415 = vmatpush.bf16.msra.mxu0 %v4800
        %5416 = vmatpush.bf16.msra.mxu0 %v4791
        %5417 = vmatpush.bf16.msra.mxu0 %v4782
        %5418 = vmatmul.bf16.gmra.mxu0 %v3467
        %v5419 = vpop.f32.mrf.mxu0
        %v5420 = vadd.f32 %v5406, %v5419
        %v5421 = vpop.f32.mrf.mxu0
        %v5422 = vadd.f32 %v5408, %v5421
        %5423 = vdwg.mxu0
        %5424 = vmatpush.bf16.msra.mxu0 %v4917
        %5425 = vmatpush.bf16.msra.mxu0 %v4908
        %5426 = vmatpush.bf16.msra.mxu0 %v4899
        %5427 = vmatpush.bf16.msra.mxu0 %v4890
        %5428 = vmatpush.bf16.msra.mxu0 %v4881
        %5429 = vmatpush.bf16.msra.mxu0 %v4872
        %5430 = vmatpush.bf16.msra.mxu0 %v4863
        %5431 = vmatpush.bf16.msra.mxu0 %v4854
        %5432 = vmatmul.bf16.gmra.mxu0 %v3468
        %v5433 = vpop.f32.mrf.mxu0
        %v5434 = vadd.f32 %v5420, %v5433
        %v5435 = vpop.f32.mrf.mxu0
        %v5436 = vadd.f32 %v5422, %v5435
        %5437 = vdwg.mxu0
        %5438 = vmatpush.bf16.msra.mxu0 %v4989
        %5439 = vmatpush.bf16.msra.mxu0 %v4980
        %5440 = vmatpush.bf16.msra.mxu0 %v4971
        %5441 = vmatpush.bf16.msra.mxu0 %v4962
        %5442 = vmatpush.bf16.msra.mxu0 %v4953
        %5443 = vmatpush.bf16.msra.mxu0 %v4944
        %5444 = vmatpush.bf16.msra.mxu0 %v4935
        %5445 = vmatpush.bf16.msra.mxu0 %v4926
        %5446 = vmatmul.bf16.gmra.mxu0 %v3469
        %v5447 = vpop.f32.mrf.mxu0
        %v5448 = vadd.f32 %v5434, %v5447
        %v5449 = vpop.f32.mrf.mxu0
        %v5450 = vadd.f32 %v5436, %v5449
        %5451 = vdwg.mxu0
        %5452 = vmatpush.bf16.msra.mxu0 %v4774
        %5453 = vmatpush.bf16.msra.mxu0 %v4765
        %5454 = vmatpush.bf16.msra.mxu0 %v4756
        %5455 = vmatpush.bf16.msra.mxu0 %v4747
        %5456 = vmatpush.bf16.msra.mxu0 %v4738
        %5457 = vmatpush.bf16.msra.mxu0 %v4729
        %5458 = vmatpush.bf16.msra.mxu0 %v4720
        %5459 = vmatpush.bf16.msra.mxu0 %v4711
        %5460 = vmatmul.bf16.gmra.mxu0 %v3466
        %v5461 = vpop.f32.mrf.mxu0
        %v5462 = vadd.f32 %v3797, %v5461
        %v5463 = vpop.f32.mrf.mxu0
        %v5464 = vadd.f32 %v3797, %v5463
        %5465 = vdwg.mxu0
        %5466 = vmatpush.bf16.msra.mxu0 %v4846
        %5467 = vmatpush.bf16.msra.mxu0 %v4837
        %5468 = vmatpush.bf16.msra.mxu0 %v4828
        %5469 = vmatpush.bf16.msra.mxu0 %v4819
        %5470 = vmatpush.bf16.msra.mxu0 %v4810
        %5471 = vmatpush.bf16.msra.mxu0 %v4801
        %5472 = vmatpush.bf16.msra.mxu0 %v4792
        %5473 = vmatpush.bf16.msra.mxu0 %v4783
        %5474 = vmatmul.bf16.gmra.mxu0 %v3467
        %v5475 = vpop.f32.mrf.mxu0
        %v5476 = vadd.f32 %v5462, %v5475
        %v5477 = vpop.f32.mrf.mxu0
        %v5478 = vadd.f32 %v5464, %v5477
        %5479 = vdwg.mxu0
        %5480 = vmatpush.bf16.msra.mxu0 %v4918
        %5481 = vmatpush.bf16.msra.mxu0 %v4909
        %5482 = vmatpush.bf16.msra.mxu0 %v4900
        %5483 = vmatpush.bf16.msra.mxu0 %v4891
        %5484 = vmatpush.bf16.msra.mxu0 %v4882
        %5485 = vmatpush.bf16.msra.mxu0 %v4873
        %5486 = vmatpush.bf16.msra.mxu0 %v4864
        %5487 = vmatpush.bf16.msra.mxu0 %v4855
        %5488 = vmatmul.bf16.gmra.mxu0 %v3468
        %v5489 = vpop.f32.mrf.mxu0
        %v5490 = vadd.f32 %v5476, %v5489
        %v5491 = vpop.f32.mrf.mxu0
        %v5492 = vadd.f32 %v5478, %v5491
        %5493 = vdwg.mxu0
        %5494 = vmatpush.bf16.msra.mxu0 %v4990
        %5495 = vmatpush.bf16.msra.mxu0 %v4981
        %5496 = vmatpush.bf16.msra.mxu0 %v4972
        %5497 = vmatpush.bf16.msra.mxu0 %v4963
        %5498 = vmatpush.bf16.msra.mxu0 %v4954
        %5499 = vmatpush.bf16.msra.mxu0 %v4945
        %5500 = vmatpush.bf16.msra.mxu0 %v4936
        %5501 = vmatpush.bf16.msra.mxu0 %v4927
        %5502 = vmatmul.bf16.gmra.mxu0 %v3469
        %v5503 = vpop.f32.mrf.mxu0
        %v5504 = vadd.f32 %v5490, %v5503
        %v5505 = vpop.f32.mrf.mxu0
        %v5506 = vadd.f32 %v5492, %v5505
        %5507 = vdwg.mxu0
        %5508 = vmatpush.bf16.msra.mxu0 %v4775
        %5509 = vmatpush.bf16.msra.mxu0 %v4766
        %5510 = vmatpush.bf16.msra.mxu0 %v4757
        %5511 = vmatpush.bf16.msra.mxu0 %v4748
        %5512 = vmatpush.bf16.msra.mxu0 %v4739
        %5513 = vmatpush.bf16.msra.mxu0 %v4730
        %5514 = vmatpush.bf16.msra.mxu0 %v4721
        %5515 = vmatpush.bf16.msra.mxu0 %v4712
        %5516 = vmatmul.bf16.gmra.mxu0 %v3466
        %v5517 = vpop.f32.mrf.mxu0
        %v5518 = vadd.f32 %v3798, %v5517
        %v5519 = vpop.f32.mrf.mxu0
        %v5520 = vadd.f32 %v3798, %v5519
        %5521 = vdwg.mxu0
        %5522 = vmatpush.bf16.msra.mxu0 %v4847
        %5523 = vmatpush.bf16.msra.mxu0 %v4838
        %5524 = vmatpush.bf16.msra.mxu0 %v4829
        %5525 = vmatpush.bf16.msra.mxu0 %v4820
        %5526 = vmatpush.bf16.msra.mxu0 %v4811
        %5527 = vmatpush.bf16.msra.mxu0 %v4802
        %5528 = vmatpush.bf16.msra.mxu0 %v4793
        %5529 = vmatpush.bf16.msra.mxu0 %v4784
        %5530 = vmatmul.bf16.gmra.mxu0 %v3467
        %v5531 = vpop.f32.mrf.mxu0
        %v5532 = vadd.f32 %v5518, %v5531
        %v5533 = vpop.f32.mrf.mxu0
        %v5534 = vadd.f32 %v5520, %v5533
        %5535 = vdwg.mxu0
        %5536 = vmatpush.bf16.msra.mxu0 %v4919
        %5537 = vmatpush.bf16.msra.mxu0 %v4910
        %5538 = vmatpush.bf16.msra.mxu0 %v4901
        %5539 = vmatpush.bf16.msra.mxu0 %v4892
        %5540 = vmatpush.bf16.msra.mxu0 %v4883
        %5541 = vmatpush.bf16.msra.mxu0 %v4874
        %5542 = vmatpush.bf16.msra.mxu0 %v4865
        %5543 = vmatpush.bf16.msra.mxu0 %v4856
        %5544 = vmatmul.bf16.gmra.mxu0 %v3468
        %v5545 = vpop.f32.mrf.mxu0
        %v5546 = vadd.f32 %v5532, %v5545
        %v5547 = vpop.f32.mrf.mxu0
        %v5548 = vadd.f32 %v5534, %v5547
        %5549 = vdwg.mxu0
        %5550 = vmatpush.bf16.msra.mxu0 %v4991
        %5551 = vmatpush.bf16.msra.mxu0 %v4982
        %5552 = vmatpush.bf16.msra.mxu0 %v4973
        %5553 = vmatpush.bf16.msra.mxu0 %v4964
        %5554 = vmatpush.bf16.msra.mxu0 %v4955
        %5555 = vmatpush.bf16.msra.mxu0 %v4946
        %5556 = vmatpush.bf16.msra.mxu0 %v4937
        %5557 = vmatpush.bf16.msra.mxu0 %v4928
        %5558 = vmatmul.bf16.gmra.mxu0 %v3469
        %v5559 = vpop.f32.mrf.mxu0
        %v5560 = vadd.f32 %v5546, %v5559
        %v5561 = vpop.f32.mrf.mxu0
        %v5562 = vadd.f32 %v5548, %v5561
        %5563 = vdwg.mxu0
        %5564 = vmatpush.bf16.msra.mxu0 %v4776
        %5565 = vmatpush.bf16.msra.mxu0 %v4767
        %5566 = vmatpush.bf16.msra.mxu0 %v4758
        %5567 = vmatpush.bf16.msra.mxu0 %v4749
        %5568 = vmatpush.bf16.msra.mxu0 %v4740
        %5569 = vmatpush.bf16.msra.mxu0 %v4731
        %5570 = vmatpush.bf16.msra.mxu0 %v4722
        %5571 = vmatpush.bf16.msra.mxu0 %v4713
        %5572 = vmatmul.bf16.gmra.mxu0 %v3466
        %v5573 = vpop.f32.mrf.mxu0
        %v5574 = vadd.f32 %v3799, %v5573
        %v5575 = vpop.f32.mrf.mxu0
        %v5576 = vadd.f32 %v3799, %v5575
        %5577 = vdwg.mxu0
        %5578 = vmatpush.bf16.msra.mxu0 %v4848
        %5579 = vmatpush.bf16.msra.mxu0 %v4839
        %5580 = vmatpush.bf16.msra.mxu0 %v4830
        %5581 = vmatpush.bf16.msra.mxu0 %v4821
        %5582 = vmatpush.bf16.msra.mxu0 %v4812
        %5583 = vmatpush.bf16.msra.mxu0 %v4803
        %5584 = vmatpush.bf16.msra.mxu0 %v4794
        %5585 = vmatpush.bf16.msra.mxu0 %v4785
        %5586 = vmatmul.bf16.gmra.mxu0 %v3467
        %v5587 = vpop.f32.mrf.mxu0
        %v5588 = vadd.f32 %v5574, %v5587
        %v5589 = vpop.f32.mrf.mxu0
        %v5590 = vadd.f32 %v5576, %v5589
        %5591 = vdwg.mxu0
        %5592 = vmatpush.bf16.msra.mxu0 %v4920
        %5593 = vmatpush.bf16.msra.mxu0 %v4911
        %5594 = vmatpush.bf16.msra.mxu0 %v4902
        %5595 = vmatpush.bf16.msra.mxu0 %v4893
        %5596 = vmatpush.bf16.msra.mxu0 %v4884
        %5597 = vmatpush.bf16.msra.mxu0 %v4875
        %5598 = vmatpush.bf16.msra.mxu0 %v4866
        %5599 = vmatpush.bf16.msra.mxu0 %v4857
        %5600 = vmatmul.bf16.gmra.mxu0 %v3468
        %v5601 = vpop.f32.mrf.mxu0
        %v5602 = vadd.f32 %v5588, %v5601
        %v5603 = vpop.f32.mrf.mxu0
        %v5604 = vadd.f32 %v5590, %v5603
        %5605 = vdwg.mxu0
        %5606 = vmatpush.bf16.msra.mxu0 %v4992
        %5607 = vmatpush.bf16.msra.mxu0 %v4983
        %5608 = vmatpush.bf16.msra.mxu0 %v4974
        %5609 = vmatpush.bf16.msra.mxu0 %v4965
        %5610 = vmatpush.bf16.msra.mxu0 %v4956
        %5611 = vmatpush.bf16.msra.mxu0 %v4947
        %5612 = vmatpush.bf16.msra.mxu0 %v4938
        %5613 = vmatpush.bf16.msra.mxu0 %v4929
        %5614 = vmatmul.bf16.gmra.mxu0 %v3469
        %v5615 = vpop.f32.mrf.mxu0
        %v5616 = vadd.f32 %v5602, %v5615
        %v5617 = vpop.f32.mrf.mxu0
        %v5618 = vadd.f32 %v5604, %v5617
        %5619 = vdwg.mxu0
        %5620 = vmatpush.bf16.msra.mxu0 %v4777
        %5621 = vmatpush.bf16.msra.mxu0 %v4768
        %5622 = vmatpush.bf16.msra.mxu0 %v4759
        %5623 = vmatpush.bf16.msra.mxu0 %v4750
        %5624 = vmatpush.bf16.msra.mxu0 %v4741
        %5625 = vmatpush.bf16.msra.mxu0 %v4732
        %5626 = vmatpush.bf16.msra.mxu0 %v4723
        %5627 = vmatpush.bf16.msra.mxu0 %v4714
        %5628 = vmatmul.bf16.gmra.mxu0 %v3466
        %v5629 = vpop.f32.mrf.mxu0
        %v5630 = vadd.f32 %v3800, %v5629
        %v5631 = vpop.f32.mrf.mxu0
        %v5632 = vadd.f32 %v3800, %v5631
        %5633 = vdwg.mxu0
        %5634 = vmatpush.bf16.msra.mxu0 %v4849
        %5635 = vmatpush.bf16.msra.mxu0 %v4840
        %5636 = vmatpush.bf16.msra.mxu0 %v4831
        %5637 = vmatpush.bf16.msra.mxu0 %v4822
        %5638 = vmatpush.bf16.msra.mxu0 %v4813
        %5639 = vmatpush.bf16.msra.mxu0 %v4804
        %5640 = vmatpush.bf16.msra.mxu0 %v4795
        %5641 = vmatpush.bf16.msra.mxu0 %v4786
        %5642 = vmatmul.bf16.gmra.mxu0 %v3467
        %v5643 = vpop.f32.mrf.mxu0
        %v5644 = vadd.f32 %v5630, %v5643
        %v5645 = vpop.f32.mrf.mxu0
        %v5646 = vadd.f32 %v5632, %v5645
        %5647 = vdwg.mxu0
        %5648 = vmatpush.bf16.msra.mxu0 %v4921
        %5649 = vmatpush.bf16.msra.mxu0 %v4912
        %5650 = vmatpush.bf16.msra.mxu0 %v4903
        %5651 = vmatpush.bf16.msra.mxu0 %v4894
        %5652 = vmatpush.bf16.msra.mxu0 %v4885
        %5653 = vmatpush.bf16.msra.mxu0 %v4876
        %5654 = vmatpush.bf16.msra.mxu0 %v4867
        %5655 = vmatpush.bf16.msra.mxu0 %v4858
        %5656 = vmatmul.bf16.gmra.mxu0 %v3468
        %v5657 = vpop.f32.mrf.mxu0
        %v5658 = vadd.f32 %v5644, %v5657
        %v5659 = vpop.f32.mrf.mxu0
        %v5660 = vadd.f32 %v5646, %v5659
        %5661 = vdwg.mxu0
        %5662 = vmatpush.bf16.msra.mxu0 %v4993
        %5663 = vmatpush.bf16.msra.mxu0 %v4984
        %5664 = vmatpush.bf16.msra.mxu0 %v4975
        %5665 = vmatpush.bf16.msra.mxu0 %v4966
        %5666 = vmatpush.bf16.msra.mxu0 %v4957
        %5667 = vmatpush.bf16.msra.mxu0 %v4948
        %5668 = vmatpush.bf16.msra.mxu0 %v4939
        %5669 = vmatpush.bf16.msra.mxu0 %v4930
        %5670 = vmatmul.bf16.gmra.mxu0 %v3469
        %v5671 = vpop.f32.mrf.mxu0
        %v5672 = vadd.f32 %v5658, %v5671
        %v5673 = vpop.f32.mrf.mxu0
        %v5674 = vadd.f32 %v5660, %v5673
        %5675 = vdwg.mxu0
        %5676 = vmatpush.bf16.msra.mxu0 %v4778
        %5677 = vmatpush.bf16.msra.mxu0 %v4769
        %5678 = vmatpush.bf16.msra.mxu0 %v4760
        %5679 = vmatpush.bf16.msra.mxu0 %v4751
        %5680 = vmatpush.bf16.msra.mxu0 %v4742
        %5681 = vmatpush.bf16.msra.mxu0 %v4733
        %5682 = vmatpush.bf16.msra.mxu0 %v4724
        %5683 = vmatpush.bf16.msra.mxu0 %v4715
        %5684 = vmatmul.bf16.gmra.mxu0 %v3466
        %v5685 = vpop.f32.mrf.mxu0
        %v5686 = vadd.f32 %v3801, %v5685
        %v5687 = vpop.f32.mrf.mxu0
        %v5688 = vadd.f32 %v3801, %v5687
        %5689 = vdwg.mxu0
        %5690 = vmatpush.bf16.msra.mxu0 %v4850
        %5691 = vmatpush.bf16.msra.mxu0 %v4841
        %5692 = vmatpush.bf16.msra.mxu0 %v4832
        %5693 = vmatpush.bf16.msra.mxu0 %v4823
        %5694 = vmatpush.bf16.msra.mxu0 %v4814
        %5695 = vmatpush.bf16.msra.mxu0 %v4805
        %5696 = vmatpush.bf16.msra.mxu0 %v4796
        %5697 = vmatpush.bf16.msra.mxu0 %v4787
        %5698 = vmatmul.bf16.gmra.mxu0 %v3467
        %v5699 = vpop.f32.mrf.mxu0
        %v5700 = vadd.f32 %v5686, %v5699
        %v5701 = vpop.f32.mrf.mxu0
        %v5702 = vadd.f32 %v5688, %v5701
        %5703 = vdwg.mxu0
        %5704 = vmatpush.bf16.msra.mxu0 %v4922
        %5705 = vmatpush.bf16.msra.mxu0 %v4913
        %5706 = vmatpush.bf16.msra.mxu0 %v4904
        %5707 = vmatpush.bf16.msra.mxu0 %v4895
        %5708 = vmatpush.bf16.msra.mxu0 %v4886
        %5709 = vmatpush.bf16.msra.mxu0 %v4877
        %5710 = vmatpush.bf16.msra.mxu0 %v4868
        %5711 = vmatpush.bf16.msra.mxu0 %v4859
        %5712 = vmatmul.bf16.gmra.mxu0 %v3468
        %v5713 = vpop.f32.mrf.mxu0
        %v5714 = vadd.f32 %v5700, %v5713
        %v5715 = vpop.f32.mrf.mxu0
        %v5716 = vadd.f32 %v5702, %v5715
        %5717 = vdwg.mxu0
        %5718 = vmatpush.bf16.msra.mxu0 %v4994
        %5719 = vmatpush.bf16.msra.mxu0 %v4985
        %5720 = vmatpush.bf16.msra.mxu0 %v4976
        %5721 = vmatpush.bf16.msra.mxu0 %v4967
        %5722 = vmatpush.bf16.msra.mxu0 %v4958
        %5723 = vmatpush.bf16.msra.mxu0 %v4949
        %5724 = vmatpush.bf16.msra.mxu0 %v4940
        %5725 = vmatpush.bf16.msra.mxu0 %v4931
        %5726 = vmatmul.bf16.gmra.mxu0 %v3469
        %v5727 = vpop.f32.mrf.mxu0
        %v5728 = vadd.f32 %v5714, %v5727
        %v5729 = vpop.f32.mrf.mxu0
        %v5730 = vadd.f32 %v5716, %v5729
        %5731 = vdwg.mxu0
        %5732 = vmatpush.bf16.msra.mxu0 %v4779
        %5733 = vmatpush.bf16.msra.mxu0 %v4770
        %5734 = vmatpush.bf16.msra.mxu0 %v4761
        %5735 = vmatpush.bf16.msra.mxu0 %v4752
        %5736 = vmatpush.bf16.msra.mxu0 %v4743
        %5737 = vmatpush.bf16.msra.mxu0 %v4734
        %5738 = vmatpush.bf16.msra.mxu0 %v4725
        %5739 = vmatpush.bf16.msra.mxu0 %v4716
        %5740 = vmatmul.bf16.gmra.mxu0 %v3466
        %v5741 = vpop.f32.mrf.mxu0
        %v5742 = vadd.f32 %v3802, %v5741
        %v5743 = vpop.f32.mrf.mxu0
        %v5744 = vadd.f32 %v3802, %v5743
        %5745 = vdwg.mxu0
        %5746 = vmatpush.bf16.msra.mxu0 %v4851
        %5747 = vmatpush.bf16.msra.mxu0 %v4842
        %5748 = vmatpush.bf16.msra.mxu0 %v4833
        %5749 = vmatpush.bf16.msra.mxu0 %v4824
        %5750 = vmatpush.bf16.msra.mxu0 %v4815
        %5751 = vmatpush.bf16.msra.mxu0 %v4806
        %5752 = vmatpush.bf16.msra.mxu0 %v4797
        %5753 = vmatpush.bf16.msra.mxu0 %v4788
        %5754 = vmatmul.bf16.gmra.mxu0 %v3467
        %v5755 = vpop.f32.mrf.mxu0
        %v5756 = vadd.f32 %v5742, %v5755
        %v5757 = vpop.f32.mrf.mxu0
        %v5758 = vadd.f32 %v5744, %v5757
        %5759 = vdwg.mxu0
        %5760 = vmatpush.bf16.msra.mxu0 %v4923
        %5761 = vmatpush.bf16.msra.mxu0 %v4914
        %5762 = vmatpush.bf16.msra.mxu0 %v4905
        %5763 = vmatpush.bf16.msra.mxu0 %v4896
        %5764 = vmatpush.bf16.msra.mxu0 %v4887
        %5765 = vmatpush.bf16.msra.mxu0 %v4878
        %5766 = vmatpush.bf16.msra.mxu0 %v4869
        %5767 = vmatpush.bf16.msra.mxu0 %v4860
        %5768 = vmatmul.bf16.gmra.mxu0 %v3468
        %v5769 = vpop.f32.mrf.mxu0
        %v5770 = vadd.f32 %v5756, %v5769
        %v5771 = vpop.f32.mrf.mxu0
        %v5772 = vadd.f32 %v5758, %v5771
        %5773 = vdwg.mxu0
        %5774 = vmatpush.bf16.msra.mxu0 %v4995
        %5775 = vmatpush.bf16.msra.mxu0 %v4986
        %5776 = vmatpush.bf16.msra.mxu0 %v4977
        %5777 = vmatpush.bf16.msra.mxu0 %v4968
        %5778 = vmatpush.bf16.msra.mxu0 %v4959
        %5779 = vmatpush.bf16.msra.mxu0 %v4950
        %5780 = vmatpush.bf16.msra.mxu0 %v4941
        %5781 = vmatpush.bf16.msra.mxu0 %v4932
        %5782 = vmatmul.bf16.gmra.mxu0 %v3469
        %v5783 = vpop.f32.mrf.mxu0
        %v5784 = vadd.f32 %v5770, %v5783
        %v5785 = vpop.f32.mrf.mxu0
        %v5786 = vadd.f32 %v5772, %v5785
        %5787 = vdwg.mxu0
        %v5788 = vsub.f32 0.0, %v5336
        %v5789 = vsub.f32 0.0, %v5392
        %v5790 = vsub.f32 0.0, %v5448
        %v5791 = vsub.f32 0.0, %v5504
        %v5792 = vsub.f32 0.0, %v5560
        %v5793 = vsub.f32 0.0, %v5616
        %v5794 = vsub.f32 0.0, %v5672
        %v5795 = vsub.f32 0.0, %v5728
        %v5796 = vsub.f32 0.0, %v5784
        %v5797 = vsub.f32 0.0, %v5338
        %v5798 = vsub.f32 0.0, %v5394
        %v5799 = vsub.f32 0.0, %v5450
        %v5800 = vsub.f32 0.0, %v5506
        %v5801 = vsub.f32 0.0, %v5562
        %v5802 = vsub.f32 0.0, %v5618
        %v5803 = vsub.f32 0.0, %v5674
        %v5804 = vsub.f32 0.0, %v5730
        %v5805 = vsub.f32 0.0, %v5786
        %v5806 = vmul.f32 %v5788, 1.442695
        %v5807 = vpow.pop %v5806
        %v5808 = vmul.f32 %v5789, 1.442695
        %v5809 = vpow.pop %v5808
        %v5810 = vmul.f32 %v5790, 1.442695
        %v5811 = vpow.pop %v5810
        %v5812 = vmul.f32 %v5791, 1.442695
        %v5813 = vpow.pop %v5812
        %v5814 = vmul.f32 %v5792, 1.442695
        %v5815 = vpow.pop %v5814
        %v5816 = vmul.f32 %v5793, 1.442695
        %v5817 = vpow.pop %v5816
        %v5818 = vmul.f32 %v5794, 1.442695
        %v5819 = vpow.pop %v5818
        %v5820 = vmul.f32 %v5795, 1.442695
        %v5821 = vpow.pop %v5820
        %v5822 = vmul.f32 %v5796, 1.442695
        %v5823 = vpow.pop %v5822
        %v5824 = vmul.f32 %v5797, 1.442695
        %v5825 = vpow.pop %v5824
        %v5826 = vmul.f32 %v5798, 1.442695
        %v5827 = vpow.pop %v5826
        %v5828 = vmul.f32 %v5799, 1.442695
        %v5829 = vpow.pop %v5828
        %v5830 = vmul.f32 %v5800, 1.442695
        %v5831 = vpow.pop %v5830
        %v5832 = vmul.f32 %v5801, 1.442695
        %v5833 = vpow.pop %v5832
        %v5834 = vmul.f32 %v5802, 1.442695
        %v5835 = vpow.pop %v5834
        %v5836 = vmul.f32 %v5803, 1.442695
        %v5837 = vpow.pop %v5836
        %v5838 = vmul.f32 %v5804, 1.442695
        %v5839 = vpow.pop %v5838
        %v5840 = vmul.f32 %v5805, 1.442695
        %v5841 = vpow.pop %v5840
        %v5842 = vadd.f32 %v5807, 1.0
        %v5843 = vadd.f32 %v5809, 1.0
        %v5844 = vadd.f32 %v5811, 1.0
        %v5845 = vadd.f32 %v5813, 1.0
        %v5846 = vadd.f32 %v5815, 1.0
        %v5847 = vadd.f32 %v5817, 1.0
        %v5848 = vadd.f32 %v5819, 1.0
        %v5849 = vadd.f32 %v5821, 1.0
        %v5850 = vadd.f32 %v5823, 1.0
        %v5851 = vadd.f32 %v5825, 1.0
        %v5852 = vadd.f32 %v5827, 1.0
        %v5853 = vadd.f32 %v5829, 1.0
        %v5854 = vadd.f32 %v5831, 1.0
        %v5855 = vadd.f32 %v5833, 1.0
        %v5856 = vadd.f32 %v5835, 1.0
        %v5857 = vadd.f32 %v5837, 1.0
        %v5858 = vadd.f32 %v5839, 1.0
        %v5859 = vadd.f32 %v5841, 1.0
        %v5860 = vrcp.pop %v5842
        %v5861 = vrcp.pop %v5843
        %v5862 = vrcp.pop %v5844
        %v5863 = vrcp.pop %v5845
        %v5864 = vrcp.pop %v5846
        %v5865 = vrcp.pop %v5847
        %v5866 = vrcp.pop %v5848
        %v5867 = vrcp.pop %v5849
        %v5868 = vrcp.pop %v5850
        %v5869 = vrcp.pop %v5851
        %v5870 = vrcp.pop %v5852
        %v5871 = vrcp.pop %v5853
        %v5872 = vrcp.pop %v5854
        %v5873 = vrcp.pop %v5855
        %v5874 = vrcp.pop %v5856
        %v5875 = vrcp.pop %v5857
        %v5876 = vrcp.pop %v5858
        %v5877 = vrcp.pop %v5859
        %v5878 = vmin.f32 %v5860, 1.0
        %v5879 = vmin.f32 %v5861, 1.0
        %v5880 = vmin.f32 %v5862, 1.0
        %v5881 = vmin.f32 %v5863, 1.0
        %v5882 = vmin.f32 %v5864, 1.0
        %v5883 = vmin.f32 %v5865, 1.0
        %v5884 = vmin.f32 %v5866, 1.0
        %v5885 = vmin.f32 %v5867, 1.0
        %v5886 = vmin.f32 %v5868, 1.0
        %v5887 = vmin.f32 %v5869, 1.0
        %v5888 = vmin.f32 %v5870, 1.0
        %v5889 = vmin.f32 %v5871, 1.0
        %v5890 = vmin.f32 %v5872, 1.0
        %v5891 = vmin.f32 %v5873, 1.0
        %v5892 = vmin.f32 %v5874, 1.0
        %v5893 = vmin.f32 %v5875, 1.0
        %v5894 = vmin.f32 %v5876, 1.0
        %v5895 = vmin.f32 %v5877, 1.0
        %v5896 = vpack.c.bf16 %v5879, %v5878
        %v5897 = vpack.c.bf16 %v5881, %v5880
        %v5898 = vpack.c.bf16 %v5883, %v5882
        %v5899 = vpack.c.bf16 %v5885, %v5884
        %v5900 = vpack.c.bf16 %v5886, %v5886
        %v5901 = vpack.c.bf16 %v5888, %v5887
        %v5902 = vpack.c.bf16 %v5890, %v5889
        %v5903 = vpack.c.bf16 %v5892, %v5891
        %v5904 = vpack.c.bf16 %v5894, %v5893
        %v5905 = vpack.c.bf16 %v5895, %v5895
        %5906 = vst [vmem:[%s524] sm:$0xff] %v5896
        %5907 = vst [vmem:[%s524 + $0x8] sm:$0xff] %v5897
        %5908 = vst [vmem:[%s524 + $0x10] sm:$0xff] %v5898
        %5909 = vst [vmem:[%s524 + $0x18] sm:$0xff] %v5899
        %5910 = vst [vmem:[%s524 + $0x20] sm:$0xf] %v5900
        %5911 = vst [vmem:[%s524 + $0x24] sm:$0xff] %v5901
        %5912 = vst [vmem:[%s524 + $0x2c] sm:$0xff] %v5902
        %5913 = vst [vmem:[%s524 + $0x34] sm:$0xff] %v5903
        %5914 = vst [vmem:[%s524 + $0x3c] sm:$0xff] %v5904
        %5915 = vst [vmem:[%s524 + $0x44] sm:$0xf] %v5905
        %s5916 = sand.u32 %s259, 1
        %s5917 = scalar_lea.sflag [#allocation4], %s5916
        %s5918 = sand.u32 %s259, 1
        %s5919 = smul.addr %s5918, 72
        %s5920 = scalar_lea.vmem [#allocation16], %s5919
        %s5921 = smul.u32 2, %s31
        %p5922 = scmp.lt.s32.totalorder %s5921, 3
        %s5923 = scalar_select %p5922, %s5921, 3
        %s5924 = smul.addr %s5923, 8
        %s5925 = scalar_lea.vmem %s11, %s5924
        // Predicated region
        $region93: #{linear_vae_forward.1} parent=59 // pred_check
          %p5926 = pneg %p269
        $region94: #{linear_vae_forward.1} parent=59 // pred_check_branch
          %5928 = sbr.rel (%p5926) target = $region96
        $region95: #{linear_vae_forward.1} parent=59 // pred_region
          %s5929 = smul.u32 2, %s31
          %5931 = vsyncadd %s5917, 0
          %s5932 = smul.addr %s5929, 9
          %s5933 = smul.addr %s5932, 4
          %s5934 = scalar_lea.hbm %s10, %s5933
          %s5935 = sshll.u32 %s5920, 4
          %s5936 = int_to_ptr.vmem [resolvable:$true] %s5935
          %s5937 = sshll.u32 %s5934, 4
          %s5938 = int_to_ptr.hbm [resolvable:$true] %s5937
          %5943 = dma.vmem_to_hbm [thread:$0]  %s5936, 1152, %s5938, %s5917, 576, 576, 36
        $region96: #{linear_vae_forward.1} parent=59 // pred_fallthru
          _
        // Predicated region
        $region97: #{linear_vae_forward.1} parent=59 // pred_check
          %p5944 = pneg %p295
        $region98: #{linear_vae_forward.1} parent=59 // pred_check_branch
          %5946 = sbr.rel (%p5944) target = $region100
        $region99: #{linear_vae_forward.1} parent=59 // pred_region
          %s5947 = smul.u32 2, %s31
        $region100: #{linear_vae_forward.1} parent=59 // pred_fallthru
          _
      $region60: #{linear_vae_forward.1} parent=5 // pred_fallthru
        _
      %p5948 = scmp.le.s32.totalorder 2, %s26
      // Predicated region
      $region101: #{linear_vae_forward.1} parent=5 // pred_check
        %p5949 = pneg %p5948
      $region102: #{linear_vae_forward.1} parent=5 // pred_check_branch
        %5951 = sbr.rel (%p5949) target = $region104
      $region103: #{linear_vae_forward.1} parent=5 // pred_region
        %s5952 = ssub.s32 %s26, 2
        // Predicated region
        $region105: #{linear_vae_forward.1} parent=103 // pred_check
          %p5953 = pneg %p275
        $region106: #{linear_vae_forward.1} parent=103 // pred_check_branch
          %5955 = sbr.rel (%p5953) target = $region108
        $region107: #{linear_vae_forward.1} parent=103 // pred_region
          %s5956 = sand.u32 %s260, 1
          %s5957 = scalar_lea.sflag [#allocation4], %s5956
          %s5958 = sand.u32 %s260, 1
          %s5959 = smul.addr %s5958, 72
          %s5960 = scalar_lea.vmem [#allocation16], %s5959
          %5962 = dma.done %s5957, 1152
        $region108: #{linear_vae_forward.1} parent=103 // pred_fallthru
          _
        // Predicated region
        $region109: #{linear_vae_forward.1} parent=103 // pred_check
          %p5963 = pneg %p301
        $region110: #{linear_vae_forward.1} parent=103 // pred_check_branch
          %5965 = sbr.rel (%p5963) target = $region112
        $region111: #{linear_vae_forward.1} parent=103 // pred_region
          %s5966 = smul.u32 2, %s32
          %p5967 = scmp.lt.s32.totalorder %s5966, 3
          %s5968 = scalar_select %p5967, %s5966, 3
          %s5969 = smul.addr %s5968, 8
          %s5970 = scalar_lea.vmem %s11, %s5969
        $region112: #{linear_vae_forward.1} parent=103 // pred_fallthru
          _
      $region104: #{linear_vae_forward.1} parent=5 // pred_fallthru
        _
    $region6: #{linear_vae_forward.1} parent=1 // loop_footer
      %s30 = sadd.s32 1, %s26
    $region7: #{linear_vae_forward.1} parent=1 // loop_footer_branch
      %25 = sbr.rel target = $region3
    $region8: #{linear_vae_forward.1} parent=1 // loop_exit
      _
    %5971 = vsyncpa [#allocation3], 1
    %s5972 = scalar_lea.sflag [#allocation3], 1
    %5973 = vsyncpa %s5972, 1
    %5974 = vsyncpa [#allocation6], 1
    %5975 = vsyncpa [#allocation9], 1
    %5976 = vsyncpa [#allocation12], 1
    %5977 = vsyncpa [#allocation15], 1
    %5978 = vsyncpa [#allocation4], 1
    %s5979 = scalar_lea.sflag [#allocation4], 1
    %5980 = vsyncpa %s5979, 1

</llo_original>
